<compile_context>
chip_gen: v6e
topology: v6e:2x2x1
jax: 0.10.0
libtpu: 0.0.40
codegen_flags: <defaults>
</compile_context>

<pallas_src>
import jax
import jax.numpy as jnp
from jax import lax
from jax.experimental import pallas as pl
from jax.experimental.pallas import tpu as pltpu

HIDDEN = 12          # hidden_gru
INPUT_FEAT = 256     # GRU input size (fixed by the module)
NUM_CLASSES = 9
BN_EPS = 1e-5
LANE = 128           # fused gate-projection weights padded to a full lane width
D2 = 2 * HIDDEN      # combined fwd+bwd hidden width (24)
G6 = 6 * HIDDEN      # 3 gates x 2 directions = 72 packed gate columns


# ----------------------------------------------------------------------------
# One fused kernel: GRU layer 1 (fwd+bwd in one loop) -> GRU layer 2 (fwd+bwd
# in one loop, BN/ReLU/mean epilogue folded in) -> Linear head.
# ----------------------------------------------------------------------------
def fused_forward_kernel(x_ref,                        # (T, B, 256)
                         w1_ref, b1_ref,               # (256, 128), (1, 128)
                         w2_ref, b2_ref,               # (24, 128),  (1, 128)
                         whh1_ref, bhh1_ref,           # (24, 128),  (1, 128)
                         whh2_ref, bhh2_ref,           # (24, 128),  (1, 128)
                         bn_scale_ref, bn_shift_ref,   # (1, 24) each
                         wlin_ref, blin_ref,           # (24, 9), (1, 9)
                         out_ref,                      # (B, 9)
                         xproj_ref,                    # (T, B, 128) scratch
                         h1f_ref, h1b_ref):            # (T, B, 12) scratch each
    T, B, F = x_ref.shape
    H = HIDDEN
    D = D2
    unroll = True if T <= 32 else 2   # static Python decision (T is static)

    # Lane mask: within every 2H-wide gate block, the first H lanes are the
    # forward direction, the next H lanes the backward direction.
    lane = lax.broadcasted_iota(jnp.int32, (1, LANE), 1)
    fwd_mask = (lane % D) < H

    # -------- layer-1 input projection: one lane-dense MXU matmul -----------
    proj1 = jnp.dot(x_ref[...].reshape(T * B, F), w1_ref[...],
                    preferred_element_type=jnp.float32)
    xproj_ref[...] = (proj1 + b1_ref[...]).reshape(T, B, LANE)

    def birnn_scan(whh, bhh, *, layer1, bn_scale=None, bn_shift=None):
        """Fwd+Bwd GRU directions of one layer in a SINGLE serial loop over T.

        Hidden layout is (B, 2H)=[h_fwd|h_bwd]; weights/gates are packed so each
        gate occupies a contiguous 2H lane block [fwd|bwd]; one hidden matmul +
        one set of gate ops per step covers both directions.
        Layer 1 stores the per-time hidden states for the layer-2 projection.
        Layer 2 accumulates sum_t ReLU(BN(h_t)) so the (T, B, 2H) output never
        materializes (BN/ReLU/mean fused into the recurrence).
        """
        bhh_b = jnp.broadcast_to(bhh, (B, LANE))
        if not layer1:
            bn_scale = jnp.broadcast_to(bn_scale, (B, D))
            bn_shift = jnp.broadcast_to(bn_shift, (B, D))

        def body(i, carry):
            t = i
            t_rev = T - 1 - i
            h, acc = carry
            # fwd lanes come from time t, bwd lanes from time T-1-i
            gx = jnp.where(fwd_mask, xproj_ref[t], xproj_ref[t_rev])   # (B, 128)
            gh = jnp.dot(h, whh, preferred_element_type=jnp.float32) + bhh_b
            rz = jax.nn.sigmoid(gx[:, :2 * D] + gh[:, :2 * D])
            r = rz[:, :D]
            z = rz[:, D:]
            n = jnp.tanh(gx[:, 2 * D:3 * D] + r * gh[:, 2 * D:3 * D])
            h_new = (1.0 - z) * n + z * h
            if layer1:
                h1f_ref[t] = h_new[:, :H]
                h1b_ref[t_rev] = h_new[:, H:]
            else:
                acc = acc + jnp.maximum(h_new * bn_scale + bn_shift, 0.0)
            return h_new, acc

        init = (jnp.zeros((B, D), jnp.float32), jnp.zeros((B, D), jnp.float32))
        return lax.fori_loop(0, T, body, init, unroll=unroll)

    # -------- layer-1 recurrence (both directions fused in one loop) --------
    birnn_scan(whh1_ref[...], bhh1_ref[...], layer1=True)

    # -------- layer-2 input projection (reuses the projection scratch) ------
    w2 = w2_ref[...]
    proj2 = (jnp.dot(h1f_ref[...].reshape(T * B, H), w2[:H, :],
                     preferred_element_type=jnp.float32)
             + jnp.dot(h1b_ref[...].reshape(T * B, H), w2[H:, :],
                       preferred_element_type=jnp.float32))
    xproj_ref[...] = (proj2 + b2_ref[...]).reshape(T, B, LANE)

    # -------- layer-2 recurrence with fused BN(eval) + ReLU + mean ----------
    _, acc = birnn_scan(whh2_ref[...], bhh2_ref[...], layer1=False,
                        bn_scale=bn_scale_ref[...], bn_shift=bn_shift_ref[...])

    avg = acc * (1.0 / T)                                           # (B, 2H)
    out_ref[...] = (jnp.dot(avg, wlin_ref[...],
                            preferred_element_type=jnp.float32) + blin_ref[...])


# ----------------------------------------------------------------------------
# Wrapper: pack/fuse parameters once, launch a single pallas_call.
# ----------------------------------------------------------------------------
def _interleave(f, b):
    """[r_f|z_f|n_f], [r_b|z_b|n_b]  ->  [r_f|r_b|z_f|z_b|n_f|n_b] (last axis)."""
    H = HIDDEN
    parts = []
    for g in range(3):
        parts.append(f[..., g * H:(g + 1) * H])
        parts.append(b[..., g * H:(g + 1) * H])
    return jnp.concatenate(parts, axis=-1)


def _pack_params(params):
    H = HIDDEN

    def fused_input(layer):
        # Fuse both directions' 3 input gates into one (in, 6H) matrix with the
        # interleaved-by-gate layout, fold in the input bias, pad lanes to 128.
        wf = params[f"w_ih_l{layer}"].T.astype(jnp.float32)          # (in, 3H)
        wb = params[f"w_ih_l{layer}_rev"].T.astype(jnp.float32)
        bf = params[f"b_ih_l{layer}"].astype(jnp.float32).reshape(1, 3 * H)
        bb = params[f"b_ih_l{layer}_rev"].astype(jnp.float32).reshape(1, 3 * H)
        w = jnp.pad(_interleave(wf, wb), ((0, 0), (0, LANE - G6)))
        b = jnp.pad(_interleave(bf, bb), ((0, 0), (0, LANE - G6)))
        return w, b

    def fused_hidden(layer):
        # Block-diagonal hidden weights: rows 0:H act on h_fwd, rows H:2H on
        # h_bwd; columns follow the same interleaved gate layout as the input.
        wf = params[f"w_hh_l{layer}"].T.astype(jnp.float32)          # (H, 3H)
        wb = params[f"w_hh_l{layer}_rev"].T.astype(jnp.float32)
        bf = params[f"b_hh_l{layer}"].astype(jnp.float32).reshape(1, 3 * H)
        bb = params[f"b_hh_l{layer}_rev"].astype(jnp.float32).reshape(1, 3 * H)
        zero = jnp.zeros((H, H), jnp.float32)
        top = jnp.concatenate([wf[:, :H], zero, wf[:, H:2 * H], zero,
                               wf[:, 2 * H:], zero], axis=1)         # h_fwd rows
        bot = jnp.concatenate([zero, wb[:, :H], zero, wb[:, H:2 * H],
                               zero, wb[:, 2 * H:]], axis=1)         # h_bwd rows
        w = jnp.pad(jnp.concatenate([top, bot], axis=0),
                    ((0, 0), (0, LANE - G6)))
        b = jnp.pad(_interleave(bf, bb), ((0, 0), (0, LANE - G6)))
        return w, b

    w1, b1 = fused_input(0)
    w2, b2 = fused_input(1)
    whh1, bhh1 = fused_hidden(0)
    whh2, bhh2 = fused_hidden(1)

    inv_std = lax.rsqrt(params["bn_var"].astype(jnp.float32) + BN_EPS)
    scale = (params["bn_gamma"] * inv_std).astype(jnp.float32).reshape(1, D2)
    shift = (params["bn_beta"]
             - params["bn_mean"] * params["bn_gamma"] * inv_std)
    shift = shift.astype(jnp.float32).reshape(1, D2)

    wlin = params["lin_w"].T.astype(jnp.float32)                     # (2H, 9)
    blin = params["lin_b"].reshape(1, NUM_CLASSES).astype(jnp.float32)

    return (w1, b1, w2, b2, whh1, bhh1, whh2, bhh2, scale, shift, wlin, blin)


def _fused_forward(x_tbf, packed):
    T, B, _ = x_tbf.shape
    vmem = pl.BlockSpec(memory_space=pltpu.MemorySpace.VMEM)
    return pl.pallas_call(
        fused_forward_kernel,
        out_shape=jax.ShapeDtypeStruct((B, NUM_CLASSES), jnp.float32),
        in_specs=[vmem] * (1 + len(packed)),
        out_specs=vmem,
        scratch_shapes=[
            pltpu.VMEM((T, B, LANE), jnp.float32),    # fused gate projections
            pltpu.VMEM((T, B, HIDDEN), jnp.float32),  # layer-1 fwd hiddens
            pltpu.VMEM((T, B, HIDDEN), jnp.float32),  # layer-1 bwd hiddens
        ],
    )(x_tbf, *packed)


@jax.jit
def avg_classifier_forward(x_bft, params):
    # x_bft: (B, F, T)  ->  time-major (T, B, F) for the recurrence.
    x_tbf = jnp.transpose(x_bft, (2, 0, 1)).astype(jnp.float32)
    packed = _pack_params(params)
    # TODO(synk): nn.GRU inter-layer dropout(0.2) and BN batch statistics are
    # training-only; eval/inference semantics are implemented here.
    return _fused_forward(x_tbf, packed)


# ----------------------------------------------------------------------------
# Pure-JAX reference (same math) for a correctness check.
# ----------------------------------------------------------------------------
def gru_layer_ref(x_tbf, w_ih, w_hh, b_ih, b_hh):
    H = w_hh.shape[1]
    B = x_tbf.shape[1]

    def cell(h, xt):
        gx = xt @ w_ih.T + b_ih
        gh = h @ w_hh.T + b_hh
        r = jax.nn.sigmoid(gx[:, :H] + gh[:, :H])
        z = jax.nn.sigmoid(gx[:, H:2 * H] + gh[:, H:2 * H])
        n = jnp.tanh(gx[:, 2 * H:] + r * gh[:, 2 * H:])
        h = (1.0 - z) * n + z * h
        return h, h

    _, ys = jax.lax.scan(cell, jnp.zeros((B, H), jnp.float32), x_tbf)
    return ys


def forward_ref(x_bft, params):
    x_tbf = jnp.transpose(x_bft, (2, 0, 1)).astype(jnp.float32)
    h = x_tbf
    for layer in range(2):
        fwd = gru_layer_ref(h, params[f"w_ih_l{layer}"], params[f"w_hh_l{layer}"],
                            params[f"b_ih_l{layer}"], params[f"b_hh_l{layer}"])
        bwd = gru_layer_ref(h[::-1], params[f"w_ih_l{layer}_rev"],
                            params[f"w_hh_l{layer}_rev"],
                            params[f"b_ih_l{layer}_rev"],
                            params[f"b_hh_l{layer}_rev"])[::-1]
        h = jnp.concatenate([fwd, bwd], axis=-1)
    inv_std = lax.rsqrt(params["bn_var"] + BN_EPS)
    hn = (h - params["bn_mean"]) * inv_std * params["bn_gamma"] + params["bn_beta"]
    hr = jnp.maximum(hn, 0.0)
    avg = jnp.mean(hr, axis=0)                      # (B, 2H)
    return avg @ params["lin_w"].T + params["lin_b"]


# ----------------------------------------------------------------------------
# Deterministic parameter construction (shapes dictated by the module __init__)
# ----------------------------------------------------------------------------
def make_params(key):
    H, C = HIDDEN, 2 * HIDDEN
    params = {}
    ks = iter(jax.random.split(key, 64))

    def u(k, shape, scale):
        return jax.random.uniform(k, shape, jnp.float32, -scale, scale)

    for layer in range(2):
        in_size = INPUT_FEAT if layer == 0 else 2 * H
        scale = 1.0 / jnp.sqrt(H)
        for suffix in ("", "_rev"):
            params[f"w_ih_l{layer}{suffix}"] = u(next(ks), (3 * H, in_size), scale)
            params[f"w_hh_l{layer}{suffix}"] = u(next(ks), (3 * H, H), scale)
            params[f"b_ih_l{layer}{suffix}"] = u(next(ks), (3 * H,), scale)
            params[f"b_hh_l{layer}{suffix}"] = u(next(ks), (3 * H,), scale)

    params["bn_gamma"] = 1.0 + 0.1 * jax.random.normal(next(ks), (C,), jnp.float32)
    params["bn_beta"] = 0.1 * jax.random.normal(next(ks), (C,), jnp.float32)
    params["bn_mean"] = 0.05 * jax.random.normal(next(ks), (C,), jnp.float32)
    params["bn_var"] = 0.5 + jnp.abs(jax.random.normal(next(ks), (C,), jnp.float32))
    lin_scale = 1.0 / jnp.sqrt(C)
    params["lin_w"] = u(next(ks), (NUM_CLASSES, C), lin_scale)
    params["lin_b"] = u(next(ks), (NUM_CLASSES,), lin_scale)
    return params


if __name__ == "__main__":
    key = jax.random.PRNGKey(0)
    k_x, k_p = jax.random.split(key)

    B, F, T = 2, INPUT_FEAT, 8
    x = jax.random.normal(k_x, (B, F, T), jnp.float32)
    params = make_params(k_p)

    out = avg_classifier_forward(x, params)
    out = jax.block_until_ready(out)
    assert out.shape == (B, NUM_CLASSES), out.shape

    ref = forward_ref(x, params)
    assert jnp.allclose(out, ref, atol=2e-3, rtol=2e-3), (out, ref)

    print("KERNEL_OK")
</pallas_src>

<mosaic_0001>
module attributes {stable_mosaic.version = 11 : i64} {
  func.func @fused_forward_kernel(%arg0: memref<8x2x256xf32, #tpu.memory_space<vmem>>, %arg1: memref<256x128xf32, #tpu.memory_space<vmem>>, %arg2: memref<1x128xf32, #tpu.memory_space<vmem>>, %arg3: memref<24x128xf32, #tpu.memory_space<vmem>>, %arg4: memref<1x128xf32, #tpu.memory_space<vmem>>, %arg5: memref<24x128xf32, #tpu.memory_space<vmem>>, %arg6: memref<1x128xf32, #tpu.memory_space<vmem>>, %arg7: memref<24x128xf32, #tpu.memory_space<vmem>>, %arg8: memref<1x128xf32, #tpu.memory_space<vmem>>, %arg9: memref<1x24xf32, #tpu.memory_space<vmem>>, %arg10: memref<1x24xf32, #tpu.memory_space<vmem>>, %arg11: memref<24x9xf32, #tpu.memory_space<vmem>>, %arg12: memref<1x9xf32, #tpu.memory_space<vmem>>, %arg13: memref<2x9xf32, #tpu.memory_space<vmem>>, %arg14: memref<8x2x128xf32, #tpu.memory_space<vmem>>, %arg15: memref<8x2x12xf32, #tpu.memory_space<vmem>>, %arg16: memref<8x2x12xf32, #tpu.memory_space<vmem>>) attributes {dimension_semantics = [], scalar_prefetch = 0 : i64, scratch_operands = 3 : i64, tpu.core_type = #tpu.core_type<tc>} {
    %0 = tpu.iota {dimensions = array<i32: 1>} : vector<1x128xi32>
    %c24_i32 = arith.constant 24 : i32
    %c0_i32 = arith.constant 0 : i32
    %1 = arith.cmpi eq, %c24_i32, %c0_i32 : i32
    %c1_i32 = arith.constant 1 : i32
    %2 = arith.select %1, %c1_i32, %c24_i32 : i32
    %3 = vector.broadcast %2 : i32 to vector<1x128xi32>
    %4 = arith.remsi %0, %3 : vector<1x128xi32>
    %c0_i32_0 = arith.constant 0 : i32
    %5 = vector.broadcast %c0_i32_0 : i32 to vector<1x128xi32>
    %6 = arith.cmpi ne, %4, %5 : vector<1x128xi32>
    %c0_i32_1 = arith.constant 0 : i32
    %7 = vector.broadcast %c0_i32_1 : i32 to vector<1x128xi32>
    %8 = arith.cmpi slt, %4, %7 : vector<1x128xi32>
    %c0_i32_2 = arith.constant 0 : i32
    %9 = arith.cmpi slt, %2, %c0_i32_2 : i32
    %10 = vector.broadcast %9 : i1 to vector<1x128xi1>
    %11 = vector.broadcast %10 : vector<1x128xi1> to vector<1x128xi1>
    %12 = arith.xori %8, %11 : vector<1x128xi1>
    %13 = arith.andi %12, %6 : vector<1x128xi1>
    %14 = vector.broadcast %2 : i32 to vector<1x128xi32>
    %15 = arith.addi %4, %14 : vector<1x128xi32>
    %16 = arith.select %13, %15, %4 : vector<1x128xi1>, vector<1x128xi32>
    %c12_i32 = arith.constant 12 : i32
    %17 = vector.broadcast %c12_i32 : i32 to vector<1x128xi32>
    %18 = arith.cmpi slt, %16, %17 : vector<1x128xi32>
    %c0 = arith.constant 0 : index
    %c0_3 = arith.constant 0 : index
    %c0_4 = arith.constant 0 : index
    %19 = vector.load %arg0[%c0, %c0_3, %c0_4] : memref<8x2x256xf32, #tpu.memory_space<vmem>>, vector<8x2x256xf32>
    %20 = vector.shape_cast %19 : vector<8x2x256xf32> to vector<16x256xf32>
    %c0_5 = arith.constant 0 : index
    %c0_6 = arith.constant 0 : index
    %21 = vector.load %arg1[%c0_5, %c0_6] : memref<256x128xf32, #tpu.memory_space<vmem>>, vector<256x128xf32>
    %cst = arith.constant dense<0.000000e+00> : vector<16x128xf32>
    %22 = tpu.matmul %20, %21, %cst {dimension_numbers = #tpu.dot_dimension_numbers<[1], [0], [0], [1], [0, 0, 1, 1], [], []>} : vector<16x256xf32>, vector<256x128xf32>, vector<16x128xf32> -> vector<16x128xf32>
    %c0_7 = arith.constant 0 : index
    %c0_8 = arith.constant 0 : index
    %23 = vector.load %arg2[%c0_7, %c0_8] : memref<1x128xf32, #tpu.memory_space<vmem>>, vector<1x128xf32>
    %24 = vector.broadcast %23 : vector<1x128xf32> to vector<16x128xf32>
    %25 = arith.addf %22, %24 : vector<16x128xf32>
    %26 = vector.shape_cast %25 : vector<16x128xf32> to vector<8x2x128xf32>
    %c0_9 = arith.constant 0 : index
    %c0_10 = arith.constant 0 : index
    %c0_11 = arith.constant 0 : index
    %27 = vector.load %arg14[%c0_9, %c0_10, %c0_11] : memref<8x2x128xf32, #tpu.memory_space<vmem>>, vector<8x2x128xf32>
    tpu.vector_store %arg14[%c0_9, %c0_10, %c0_11], %26 {strides = array<i32>} : memref<8x2x128xf32, #tpu.memory_space<vmem>>, vector<8x2x128xf32>,
    %c0_12 = arith.constant 0 : index
    %c0_13 = arith.constant 0 : index
    %28 = vector.load %arg5[%c0_12, %c0_13] : memref<24x128xf32, #tpu.memory_space<vmem>>, vector<24x128xf32>
    %c0_14 = arith.constant 0 : index
    %c0_15 = arith.constant 0 : index
    %29 = vector.load %arg6[%c0_14, %c0_15] : memref<1x128xf32, #tpu.memory_space<vmem>>, vector<1x128xf32>
    %30 = vector.shape_cast %29 : vector<1x128xf32> to vector<1x128xf32>
    %31 = vector.broadcast %30 : vector<1x128xf32> to vector<2x128xf32>
    %cst_16 = arith.constant 0.000000e+00 : f32
    %32 = vector.broadcast %cst_16 : f32 to vector<2x24xf32>
    %c0_i32_17 = arith.constant 0 : i32
    %c7_i32 = arith.constant 7 : i32
    %33 = arith.subi %c7_i32, %c0_i32_17 : i32
    %34 = arith.index_cast %c0_i32_17 : i32 to index
    %c0_18 = arith.constant 0 : index
    %c0_19 = arith.constant 0 : index
    %35 = vector.load %arg14[%34, %c0_18, %c0_19] : memref<8x2x128xf32, #tpu.memory_space<vmem>>, vector<1x2x128xf32>
    %36 = vector.shape_cast %35 : vector<1x2x128xf32> to vector<2x128xf32>
    %37 = arith.index_cast %33 : i32 to index
    %c0_20 = arith.constant 0 : index
    %c0_21 = arith.constant 0 : index
    %38 = vector.load %arg14[%37, %c0_20, %c0_21] : memref<8x2x128xf32, #tpu.memory_space<vmem>>, vector<1x2x128xf32>
    %39 = vector.shape_cast %38 : vector<1x2x128xf32> to vector<2x128xf32>
    %40 = vector.shape_cast %18 : vector<1x128xi1> to vector<1x128xi1>
    %41 = vector.broadcast %40 : vector<1x128xi1> to vector<2x128xi1>
    %42 = arith.select %41, %36, %39 : vector<2x128xi1>, vector<2x128xf32>
    %cst_22 = arith.constant dense<0.000000e+00> : vector<2x128xf32>
    %43 = tpu.matmul %32, %28, %cst_22 {dimension_numbers = #tpu.dot_dimension_numbers<[1], [0], [0], [1], [0, 0, 1, 1], [], []>} : vector<2x24xf32>, vector<24x128xf32>, vector<2x128xf32> -> vector<2x128xf32>
    %44 = arith.addf %43, %31 : vector<2x128xf32>
    %45 = vector.extract_strided_slice %42 {offsets = [0, 0], sizes = [2, 48], strides = [1, 1]} : vector<2x128xf32> to vector<2x48xf32>
    %46 = vector.extract_strided_slice %44 {offsets = [0, 0], sizes = [2, 48], strides = [1, 1]} : vector<2x128xf32> to vector<2x48xf32>
    %47 = arith.addf %45, %46 : vector<2x48xf32>
    %48 = arith.negf %47 : vector<2x48xf32>
    %49 = math.exp %48 : vector<2x48xf32>
    %cst_23 = arith.constant 1.000000e+00 : f32
    %50 = vector.broadcast %cst_23 : f32 to vector<2x48xf32>
    %51 = arith.addf %50, %49 : vector<2x48xf32>
    %52 = arith.divf %50, %51 : vector<2x48xf32>
    %53 = vector.extract_strided_slice %52 {offsets = [0, 0], sizes = [2, 24], strides = [1, 1]} : vector<2x48xf32> to vector<2x24xf32>
    %54 = vector.extract_strided_slice %52 {offsets = [0, 24], sizes = [2, 24], strides = [1, 1]} : vector<2x48xf32> to vector<2x24xf32>
    %55 = vector.extract_strided_slice %42 {offsets = [0, 48], sizes = [2, 24], strides = [1, 1]} : vector<2x128xf32> to vector<2x24xf32>
    %56 = vector.extract_strided_slice %44 {offsets = [0, 48], sizes = [2, 24], strides = [1, 1]} : vector<2x128xf32> to vector<2x24xf32>
    %57 = arith.mulf %53, %56 : vector<2x24xf32>
    %58 = arith.addf %55, %57 : vector<2x24xf32>
    %59 = math.tanh %58 : vector<2x24xf32>
    %cst_24 = arith.constant 1.000000e+00 : f32
    %60 = vector.broadcast %cst_24 : f32 to vector<2x24xf32>
    %61 = arith.subf %60, %54 : vector<2x24xf32>
    %62 = arith.mulf %61, %59 : vector<2x24xf32>
    %63 = arith.mulf %54, %32 : vector<2x24xf32>
    %64 = arith.addf %62, %63 : vector<2x24xf32>
    %65 = vector.extract_strided_slice %64 {offsets = [0, 0], sizes = [2, 12], strides = [1, 1]} : vector<2x24xf32> to vector<2x12xf32>
    %66 = arith.index_cast %c0_i32_17 : i32 to index
    %c0_25 = arith.constant 0 : index
    %c0_26 = arith.constant 0 : index
    %67 = vector.load %arg15[%66, %c0_25, %c0_26] : memref<8x2x12xf32, #tpu.memory_space<vmem>>, vector<1x2x12xf32>
    %68 = vector.shape_cast %67 : vector<1x2x12xf32> to vector<2x12xf32>
    %69 = vector.shape_cast %65 : vector<2x12xf32> to vector<1x2x12xf32>
    tpu.vector_store %arg15[%66, %c0_25, %c0_26], %69 {strides = array<i32>} : memref<8x2x12xf32, #tpu.memory_space<vmem>>, vector<1x2x12xf32>,
    %70 = vector.extract_strided_slice %64 {offsets = [0, 12], sizes = [2, 12], strides = [1, 1]} : vector<2x24xf32> to vector<2x12xf32>
    %71 = arith.index_cast %33 : i32 to index
    %c0_27 = arith.constant 0 : index
    %c0_28 = arith.constant 0 : index
    %72 = vector.load %arg16[%71, %c0_27, %c0_28] : memref<8x2x12xf32, #tpu.memory_space<vmem>>, vector<1x2x12xf32>
    %73 = vector.shape_cast %72 : vector<1x2x12xf32> to vector<2x12xf32>
    %74 = vector.shape_cast %70 : vector<2x12xf32> to vector<1x2x12xf32>
    tpu.vector_store %arg16[%71, %c0_27, %c0_28], %74 {strides = array<i32>} : memref<8x2x12xf32, #tpu.memory_space<vmem>>, vector<1x2x12xf32>,
    %c1_i32_29 = arith.constant 1 : i32
    %c7_i32_30 = arith.constant 7 : i32
    %75 = arith.subi %c7_i32_30, %c1_i32_29 : i32
    %76 = arith.index_cast %c1_i32_29 : i32 to index
    %c0_31 = arith.constant 0 : index
    %c0_32 = arith.constant 0 : index
    %77 = vector.load %arg14[%76, %c0_31, %c0_32] : memref<8x2x128xf32, #tpu.memory_space<vmem>>, vector<1x2x128xf32>
    %78 = vector.shape_cast %77 : vector<1x2x128xf32> to vector<2x128xf32>
    %79 = arith.index_cast %75 : i32 to index
    %c0_33 = arith.constant 0 : index
    %c0_34 = arith.constant 0 : index
    %80 = vector.load %arg14[%79, %c0_33, %c0_34] : memref<8x2x128xf32, #tpu.memory_space<vmem>>, vector<1x2x128xf32>
    %81 = vector.shape_cast %80 : vector<1x2x128xf32> to vector<2x128xf32>
    %82 = vector.shape_cast %18 : vector<1x128xi1> to vector<1x128xi1>
    %83 = vector.broadcast %82 : vector<1x128xi1> to vector<2x128xi1>
    %84 = arith.select %83, %78, %81 : vector<2x128xi1>, vector<2x128xf32>
    %cst_35 = arith.constant dense<0.000000e+00> : vector<2x128xf32>
    %85 = tpu.matmul %64, %28, %cst_35 {dimension_numbers = #tpu.dot_dimension_numbers<[1], [0], [0], [1], [0, 0, 1, 1], [], []>} : vector<2x24xf32>, vector<24x128xf32>, vector<2x128xf32> -> vector<2x128xf32>
    %86 = arith.addf %85, %31 : vector<2x128xf32>
    %87 = vector.extract_strided_slice %84 {offsets = [0, 0], sizes = [2, 48], strides = [1, 1]} : vector<2x128xf32> to vector<2x48xf32>
    %88 = vector.extract_strided_slice %86 {offsets = [0, 0], sizes = [2, 48], strides = [1, 1]} : vector<2x128xf32> to vector<2x48xf32>
    %89 = arith.addf %87, %88 : vector<2x48xf32>
    %90 = arith.negf %89 : vector<2x48xf32>
    %91 = math.exp %90 : vector<2x48xf32>
    %cst_36 = arith.constant 1.000000e+00 : f32
    %92 = vector.broadcast %cst_36 : f32 to vector<2x48xf32>
    %93 = arith.addf %92, %91 : vector<2x48xf32>
    %94 = arith.divf %92, %93 : vector<2x48xf32>
    %95 = vector.extract_strided_slice %94 {offsets = [0, 0], sizes = [2, 24], strides = [1, 1]} : vector<2x48xf32> to vector<2x24xf32>
    %96 = vector.extract_strided_slice %94 {offsets = [0, 24], sizes = [2, 24], strides = [1, 1]} : vector<2x48xf32> to vector<2x24xf32>
    %97 = vector.extract_strided_slice %84 {offsets = [0, 48], sizes = [2, 24], strides = [1, 1]} : vector<2x128xf32> to vector<2x24xf32>
    %98 = vector.extract_strided_slice %86 {offsets = [0, 48], sizes = [2, 24], strides = [1, 1]} : vector<2x128xf32> to vector<2x24xf32>
    %99 = arith.mulf %95, %98 : vector<2x24xf32>
    %100 = arith.addf %97, %99 : vector<2x24xf32>
    %101 = math.tanh %100 : vector<2x24xf32>
    %cst_37 = arith.constant 1.000000e+00 : f32
    %102 = vector.broadcast %cst_37 : f32 to vector<2x24xf32>
    %103 = arith.subf %102, %96 : vector<2x24xf32>
    %104 = arith.mulf %103, %101 : vector<2x24xf32>
    %105 = arith.mulf %96, %64 : vector<2x24xf32>
    %106 = arith.addf %104, %105 : vector<2x24xf32>
    %107 = vector.extract_strided_slice %106 {offsets = [0, 0], sizes = [2, 12], strides = [1, 1]} : vector<2x24xf32> to vector<2x12xf32>
    %108 = arith.index_cast %c1_i32_29 : i32 to index
    %c0_38 = arith.constant 0 : index
    %c0_39 = arith.constant 0 : index
    %109 = vector.load %arg15[%108, %c0_38, %c0_39] : memref<8x2x12xf32, #tpu.memory_space<vmem>>, vector<1x2x12xf32>
    %110 = vector.shape_cast %109 : vector<1x2x12xf32> to vector<2x12xf32>
    %111 = vector.shape_cast %107 : vector<2x12xf32> to vector<1x2x12xf32>
    tpu.vector_store %arg15[%108, %c0_38, %c0_39], %111 {strides = array<i32>} : memref<8x2x12xf32, #tpu.memory_space<vmem>>, vector<1x2x12xf32>,
    %112 = vector.extract_strided_slice %106 {offsets = [0, 12], sizes = [2, 12], strides = [1, 1]} : vector<2x24xf32> to vector<2x12xf32>
    %113 = arith.index_cast %75 : i32 to index
    %c0_40 = arith.constant 0 : index
    %c0_41 = arith.constant 0 : index
    %114 = vector.load %arg16[%113, %c0_40, %c0_41] : memref<8x2x12xf32, #tpu.memory_space<vmem>>, vector<1x2x12xf32>
    %115 = vector.shape_cast %114 : vector<1x2x12xf32> to vector<2x12xf32>
    %116 = vector.shape_cast %112 : vector<2x12xf32> to vector<1x2x12xf32>
    tpu.vector_store %arg16[%113, %c0_40, %c0_41], %116 {strides = array<i32>} : memref<8x2x12xf32, #tpu.memory_space<vmem>>, vector<1x2x12xf32>,
    %c2_i32 = arith.constant 2 : i32
    %c7_i32_42 = arith.constant 7 : i32
    %117 = arith.subi %c7_i32_42, %c2_i32 : i32
    %118 = arith.index_cast %c2_i32 : i32 to index
    %c0_43 = arith.constant 0 : index
    %c0_44 = arith.constant 0 : index
    %119 = vector.load %arg14[%118, %c0_43, %c0_44] : memref<8x2x128xf32, #tpu.memory_space<vmem>>, vector<1x2x128xf32>
    %120 = vector.shape_cast %119 : vector<1x2x128xf32> to vector<2x128xf32>
    %121 = arith.index_cast %117 : i32 to index
    %c0_45 = arith.constant 0 : index
    %c0_46 = arith.constant 0 : index
    %122 = vector.load %arg14[%121, %c0_45, %c0_46] : memref<8x2x128xf32, #tpu.memory_space<vmem>>, vector<1x2x128xf32>
    %123 = vector.shape_cast %122 : vector<1x2x128xf32> to vector<2x128xf32>
    %124 = vector.shape_cast %18 : vector<1x128xi1> to vector<1x128xi1>
    %125 = vector.broadcast %124 : vector<1x128xi1> to vector<2x128xi1>
    %126 = arith.select %125, %120, %123 : vector<2x128xi1>, vector<2x128xf32>
    %cst_47 = arith.constant dense<0.000000e+00> : vector<2x128xf32>
    %127 = tpu.matmul %106, %28, %cst_47 {dimension_numbers = #tpu.dot_dimension_numbers<[1], [0], [0], [1], [0, 0, 1, 1], [], []>} : vector<2x24xf32>, vector<24x128xf32>, vector<2x128xf32> -> vector<2x128xf32>
    %128 = arith.addf %127, %31 : vector<2x128xf32>
    %129 = vector.extract_strided_slice %126 {offsets = [0, 0], sizes = [2, 48], strides = [1, 1]} : vector<2x128xf32> to vector<2x48xf32>
    %130 = vector.extract_strided_slice %128 {offsets = [0, 0], sizes = [2, 48], strides = [1, 1]} : vector<2x128xf32> to vector<2x48xf32>
    %131 = arith.addf %129, %130 : vector<2x48xf32>
    %132 = arith.negf %131 : vector<2x48xf32>
    %133 = math.exp %132 : vector<2x48xf32>
    %cst_48 = arith.constant 1.000000e+00 : f32
    %134 = vector.broadcast %cst_48 : f32 to vector<2x48xf32>
    %135 = arith.addf %134, %133 : vector<2x48xf32>
    %136 = arith.divf %134, %135 : vector<2x48xf32>
    %137 = vector.extract_strided_slice %136 {offsets = [0, 0], sizes = [2, 24], strides = [1, 1]} : vector<2x48xf32> to vector<2x24xf32>
    %138 = vector.extract_strided_slice %136 {offsets = [0, 24], sizes = [2, 24], strides = [1, 1]} : vector<2x48xf32> to vector<2x24xf32>
    %139 = vector.extract_strided_slice %126 {offsets = [0, 48], sizes = [2, 24], strides = [1, 1]} : vector<2x128xf32> to vector<2x24xf32>
    %140 = vector.extract_strided_slice %128 {offsets = [0, 48], sizes = [2, 24], strides = [1, 1]} : vector<2x128xf32> to vector<2x24xf32>
    %141 = arith.mulf %137, %140 : vector<2x24xf32>
    %142 = arith.addf %139, %141 : vector<2x24xf32>
    %143 = math.tanh %142 : vector<2x24xf32>
    %cst_49 = arith.constant 1.000000e+00 : f32
    %144 = vector.broadcast %cst_49 : f32 to vector<2x24xf32>
    %145 = arith.subf %144, %138 : vector<2x24xf32>
    %146 = arith.mulf %145, %143 : vector<2x24xf32>
    %147 = arith.mulf %138, %106 : vector<2x24xf32>
    %148 = arith.addf %146, %147 : vector<2x24xf32>
    %149 = vector.extract_strided_slice %148 {offsets = [0, 0], sizes = [2, 12], strides = [1, 1]} : vector<2x24xf32> to vector<2x12xf32>
    %150 = arith.index_cast %c2_i32 : i32 to index
    %c0_50 = arith.constant 0 : index
    %c0_51 = arith.constant 0 : index
    %151 = vector.load %arg15[%150, %c0_50, %c0_51] : memref<8x2x12xf32, #tpu.memory_space<vmem>>, vector<1x2x12xf32>
    %152 = vector.shape_cast %151 : vector<1x2x12xf32> to vector<2x12xf32>
    %153 = vector.shape_cast %149 : vector<2x12xf32> to vector<1x2x12xf32>
    tpu.vector_store %arg15[%150, %c0_50, %c0_51], %153 {strides = array<i32>} : memref<8x2x12xf32, #tpu.memory_space<vmem>>, vector<1x2x12xf32>,
    %154 = vector.extract_strided_slice %148 {offsets = [0, 12], sizes = [2, 12], strides = [1, 1]} : vector<2x24xf32> to vector<2x12xf32>
    %155 = arith.index_cast %117 : i32 to index
    %c0_52 = arith.constant 0 : index
    %c0_53 = arith.constant 0 : index
    %156 = vector.load %arg16[%155, %c0_52, %c0_53] : memref<8x2x12xf32, #tpu.memory_space<vmem>>, vector<1x2x12xf32>
    %157 = vector.shape_cast %156 : vector<1x2x12xf32> to vector<2x12xf32>
    %158 = vector.shape_cast %154 : vector<2x12xf32> to vector<1x2x12xf32>
    tpu.vector_store %arg16[%155, %c0_52, %c0_53], %158 {strides = array<i32>} : memref<8x2x12xf32, #tpu.memory_space<vmem>>, vector<1x2x12xf32>,
    %c3_i32 = arith.constant 3 : i32
    %c7_i32_54 = arith.constant 7 : i32
    %159 = arith.subi %c7_i32_54, %c3_i32 : i32
    %160 = arith.index_cast %c3_i32 : i32 to index
    %c0_55 = arith.constant 0 : index
    %c0_56 = arith.constant 0 : index
    %161 = vector.load %arg14[%160, %c0_55, %c0_56] : memref<8x2x128xf32, #tpu.memory_space<vmem>>, vector<1x2x128xf32>
    %162 = vector.shape_cast %161 : vector<1x2x128xf32> to vector<2x128xf32>
    %163 = arith.index_cast %159 : i32 to index
    %c0_57 = arith.constant 0 : index
    %c0_58 = arith.constant 0 : index
    %164 = vector.load %arg14[%163, %c0_57, %c0_58] : memref<8x2x128xf32, #tpu.memory_space<vmem>>, vector<1x2x128xf32>
    %165 = vector.shape_cast %164 : vector<1x2x128xf32> to vector<2x128xf32>
    %166 = vector.shape_cast %18 : vector<1x128xi1> to vector<1x128xi1>
    %167 = vector.broadcast %166 : vector<1x128xi1> to vector<2x128xi1>
    %168 = arith.select %167, %162, %165 : vector<2x128xi1>, vector<2x128xf32>
    %cst_59 = arith.constant dense<0.000000e+00> : vector<2x128xf32>
    %169 = tpu.matmul %148, %28, %cst_59 {dimension_numbers = #tpu.dot_dimension_numbers<[1], [0], [0], [1], [0, 0, 1, 1], [], []>} : vector<2x24xf32>, vector<24x128xf32>, vector<2x128xf32> -> vector<2x128xf32>
    %170 = arith.addf %169, %31 : vector<2x128xf32>
    %171 = vector.extract_strided_slice %168 {offsets = [0, 0], sizes = [2, 48], strides = [1, 1]} : vector<2x128xf32> to vector<2x48xf32>
    %172 = vector.extract_strided_slice %170 {offsets = [0, 0], sizes = [2, 48], strides = [1, 1]} : vector<2x128xf32> to vector<2x48xf32>
    %173 = arith.addf %171, %172 : vector<2x48xf32>
    %174 = arith.negf %173 : vector<2x48xf32>
    %175 = math.exp %174 : vector<2x48xf32>
    %cst_60 = arith.constant 1.000000e+00 : f32
    %176 = vector.broadcast %cst_60 : f32 to vector<2x48xf32>
    %177 = arith.addf %176, %175 : vector<2x48xf32>
    %178 = arith.divf %176, %177 : vector<2x48xf32>
    %179 = vector.extract_strided_slice %178 {offsets = [0, 0], sizes = [2, 24], strides = [1, 1]} : vector<2x48xf32> to vector<2x24xf32>
    %180 = vector.extract_strided_slice %178 {offsets = [0, 24], sizes = [2, 24], strides = [1, 1]} : vector<2x48xf32> to vector<2x24xf32>
    %181 = vector.extract_strided_slice %168 {offsets = [0, 48], sizes = [2, 24], strides = [1, 1]} : vector<2x128xf32> to vector<2x24xf32>
    %182 = vector.extract_strided_slice %170 {offsets = [0, 48], sizes = [2, 24], strides = [1, 1]} : vector<2x128xf32> to vector<2x24xf32>
    %183 = arith.mulf %179, %182 : vector<2x24xf32>
    %184 = arith.addf %181, %183 : vector<2x24xf32>
    %185 = math.tanh %184 : vector<2x24xf32>
    %cst_61 = arith.constant 1.000000e+00 : f32
    %186 = vector.broadcast %cst_61 : f32 to vector<2x24xf32>
    %187 = arith.subf %186, %180 : vector<2x24xf32>
    %188 = arith.mulf %187, %185 : vector<2x24xf32>
    %189 = arith.mulf %180, %148 : vector<2x24xf32>
    %190 = arith.addf %188, %189 : vector<2x24xf32>
    %191 = vector.extract_strided_slice %190 {offsets = [0, 0], sizes = [2, 12], strides = [1, 1]} : vector<2x24xf32> to vector<2x12xf32>
    %192 = arith.index_cast %c3_i32 : i32 to index
    %c0_62 = arith.constant 0 : index
    %c0_63 = arith.constant 0 : index
    %193 = vector.load %arg15[%192, %c0_62, %c0_63] : memref<8x2x12xf32, #tpu.memory_space<vmem>>, vector<1x2x12xf32>
    %194 = vector.shape_cast %193 : vector<1x2x12xf32> to vector<2x12xf32>
    %195 = vector.shape_cast %191 : vector<2x12xf32> to vector<1x2x12xf32>
    tpu.vector_store %arg15[%192, %c0_62, %c0_63], %195 {strides = array<i32>} : memref<8x2x12xf32, #tpu.memory_space<vmem>>, vector<1x2x12xf32>,
    %196 = vector.extract_strided_slice %190 {offsets = [0, 12], sizes = [2, 12], strides = [1, 1]} : vector<2x24xf32> to vector<2x12xf32>
    %197 = arith.index_cast %159 : i32 to index
    %c0_64 = arith.constant 0 : index
    %c0_65 = arith.constant 0 : index
    %198 = vector.load %arg16[%197, %c0_64, %c0_65] : memref<8x2x12xf32, #tpu.memory_space<vmem>>, vector<1x2x12xf32>
    %199 = vector.shape_cast %198 : vector<1x2x12xf32> to vector<2x12xf32>
    %200 = vector.shape_cast %196 : vector<2x12xf32> to vector<1x2x12xf32>
    tpu.vector_store %arg16[%197, %c0_64, %c0_65], %200 {strides = array<i32>} : memref<8x2x12xf32, #tpu.memory_space<vmem>>, vector<1x2x12xf32>,
    %c4_i32 = arith.constant 4 : i32
    %c7_i32_66 = arith.constant 7 : i32
    %201 = arith.subi %c7_i32_66, %c4_i32 : i32
    %202 = arith.index_cast %c4_i32 : i32 to index
    %c0_67 = arith.constant 0 : index
    %c0_68 = arith.constant 0 : index
    %203 = vector.load %arg14[%202, %c0_67, %c0_68] : memref<8x2x128xf32, #tpu.memory_space<vmem>>, vector<1x2x128xf32>
    %204 = vector.shape_cast %203 : vector<1x2x128xf32> to vector<2x128xf32>
    %205 = arith.index_cast %201 : i32 to index
    %c0_69 = arith.constant 0 : index
    %c0_70 = arith.constant 0 : index
    %206 = vector.load %arg14[%205, %c0_69, %c0_70] : memref<8x2x128xf32, #tpu.memory_space<vmem>>, vector<1x2x128xf32>
    %207 = vector.shape_cast %206 : vector<1x2x128xf32> to vector<2x128xf32>
    %208 = vector.shape_cast %18 : vector<1x128xi1> to vector<1x128xi1>
    %209 = vector.broadcast %208 : vector<1x128xi1> to vector<2x128xi1>
    %210 = arith.select %209, %204, %207 : vector<2x128xi1>, vector<2x128xf32>
    %cst_71 = arith.constant dense<0.000000e+00> : vector<2x128xf32>
    %211 = tpu.matmul %190, %28, %cst_71 {dimension_numbers = #tpu.dot_dimension_numbers<[1], [0], [0], [1], [0, 0, 1, 1], [], []>} : vector<2x24xf32>, vector<24x128xf32>, vector<2x128xf32> -> vector<2x128xf32>
    %212 = arith.addf %211, %31 : vector<2x128xf32>
    %213 = vector.extract_strided_slice %210 {offsets = [0, 0], sizes = [2, 48], strides = [1, 1]} : vector<2x128xf32> to vector<2x48xf32>
    %214 = vector.extract_strided_slice %212 {offsets = [0, 0], sizes = [2, 48], strides = [1, 1]} : vector<2x128xf32> to vector<2x48xf32>
    %215 = arith.addf %213, %214 : vector<2x48xf32>
    %216 = arith.negf %215 : vector<2x48xf32>
    %217 = math.exp %216 : vector<2x48xf32>
    %cst_72 = arith.constant 1.000000e+00 : f32
    %218 = vector.broadcast %cst_72 : f32 to vector<2x48xf32>
    %219 = arith.addf %218, %217 : vector<2x48xf32>
    %220 = arith.divf %218, %219 : vector<2x48xf32>
    %221 = vector.extract_strided_slice %220 {offsets = [0, 0], sizes = [2, 24], strides = [1, 1]} : vector<2x48xf32> to vector<2x24xf32>
    %222 = vector.extract_strided_slice %220 {offsets = [0, 24], sizes = [2, 24], strides = [1, 1]} : vector<2x48xf32> to vector<2x24xf32>
    %223 = vector.extract_strided_slice %210 {offsets = [0, 48], sizes = [2, 24], strides = [1, 1]} : vector<2x128xf32> to vector<2x24xf32>
    %224 = vector.extract_strided_slice %212 {offsets = [0, 48], sizes = [2, 24], strides = [1, 1]} : vector<2x128xf32> to vector<2x24xf32>
    %225 = arith.mulf %221, %224 : vector<2x24xf32>
    %226 = arith.addf %223, %225 : vector<2x24xf32>
    %227 = math.tanh %226 : vector<2x24xf32>
    %cst_73 = arith.constant 1.000000e+00 : f32
    %228 = vector.broadcast %cst_73 : f32 to vector<2x24xf32>
    %229 = arith.subf %228, %222 : vector<2x24xf32>
    %230 = arith.mulf %229, %227 : vector<2x24xf32>
    %231 = arith.mulf %222, %190 : vector<2x24xf32>
    %232 = arith.addf %230, %231 : vector<2x24xf32>
    %233 = vector.extract_strided_slice %232 {offsets = [0, 0], sizes = [2, 12], strides = [1, 1]} : vector<2x24xf32> to vector<2x12xf32>
    %234 = arith.index_cast %c4_i32 : i32 to index
    %c0_74 = arith.constant 0 : index
    %c0_75 = arith.constant 0 : index
    %235 = vector.load %arg15[%234, %c0_74, %c0_75] : memref<8x2x12xf32, #tpu.memory_space<vmem>>, vector<1x2x12xf32>
    %236 = vector.shape_cast %235 : vector<1x2x12xf32> to vector<2x12xf32>
    %237 = vector.shape_cast %233 : vector<2x12xf32> to vector<1x2x12xf32>
    tpu.vector_store %arg15[%234, %c0_74, %c0_75], %237 {strides = array<i32>} : memref<8x2x12xf32, #tpu.memory_space<vmem>>, vector<1x2x12xf32>,
    %238 = vector.extract_strided_slice %232 {offsets = [0, 12], sizes = [2, 12], strides = [1, 1]} : vector<2x24xf32> to vector<2x12xf32>
    %239 = arith.index_cast %201 : i32 to index
    %c0_76 = arith.constant 0 : index
    %c0_77 = arith.constant 0 : index
    %240 = vector.load %arg16[%239, %c0_76, %c0_77] : memref<8x2x12xf32, #tpu.memory_space<vmem>>, vector<1x2x12xf32>
    %241 = vector.shape_cast %240 : vector<1x2x12xf32> to vector<2x12xf32>
    %242 = vector.shape_cast %238 : vector<2x12xf32> to vector<1x2x12xf32>
    tpu.vector_store %arg16[%239, %c0_76, %c0_77], %242 {strides = array<i32>} : memref<8x2x12xf32, #tpu.memory_space<vmem>>, vector<1x2x12xf32>,
    %c5_i32 = arith.constant 5 : i32
    %c7_i32_78 = arith.constant 7 : i32
    %243 = arith.subi %c7_i32_78, %c5_i32 : i32
    %244 = arith.index_cast %c5_i32 : i32 to index
    %c0_79 = arith.constant 0 : index
    %c0_80 = arith.constant 0 : index
    %245 = vector.load %arg14[%244, %c0_79, %c0_80] : memref<8x2x128xf32, #tpu.memory_space<vmem>>, vector<1x2x128xf32>
    %246 = vector.shape_cast %245 : vector<1x2x128xf32> to vector<2x128xf32>
    %247 = arith.index_cast %243 : i32 to index
    %c0_81 = arith.constant 0 : index
    %c0_82 = arith.constant 0 : index
    %248 = vector.load %arg14[%247, %c0_81, %c0_82] : memref<8x2x128xf32, #tpu.memory_space<vmem>>, vector<1x2x128xf32>
    %249 = vector.shape_cast %248 : vector<1x2x128xf32> to vector<2x128xf32>
    %250 = vector.shape_cast %18 : vector<1x128xi1> to vector<1x128xi1>
    %251 = vector.broadcast %250 : vector<1x128xi1> to vector<2x128xi1>
    %252 = arith.select %251, %246, %249 : vector<2x128xi1>, vector<2x128xf32>
    %cst_83 = arith.constant dense<0.000000e+00> : vector<2x128xf32>
    %253 = tpu.matmul %232, %28, %cst_83 {dimension_numbers = #tpu.dot_dimension_numbers<[1], [0], [0], [1], [0, 0, 1, 1], [], []>} : vector<2x24xf32>, vector<24x128xf32>, vector<2x128xf32> -> vector<2x128xf32>
    %254 = arith.addf %253, %31 : vector<2x128xf32>
    %255 = vector.extract_strided_slice %252 {offsets = [0, 0], sizes = [2, 48], strides = [1, 1]} : vector<2x128xf32> to vector<2x48xf32>
    %256 = vector.extract_strided_slice %254 {offsets = [0, 0], sizes = [2, 48], strides = [1, 1]} : vector<2x128xf32> to vector<2x48xf32>
    %257 = arith.addf %255, %256 : vector<2x48xf32>
    %258 = arith.negf %257 : vector<2x48xf32>
    %259 = math.exp %258 : vector<2x48xf32>
    %cst_84 = arith.constant 1.000000e+00 : f32
    %260 = vector.broadcast %cst_84 : f32 to vector<2x48xf32>
    %261 = arith.addf %260, %259 : vector<2x48xf32>
    %262 = arith.divf %260, %261 : vector<2x48xf32>
    %263 = vector.extract_strided_slice %262 {offsets = [0, 0], sizes = [2, 24], strides = [1, 1]} : vector<2x48xf32> to vector<2x24xf32>
    %264 = vector.extract_strided_slice %262 {offsets = [0, 24], sizes = [2, 24], strides = [1, 1]} : vector<2x48xf32> to vector<2x24xf32>
    %265 = vector.extract_strided_slice %252 {offsets = [0, 48], sizes = [2, 24], strides = [1, 1]} : vector<2x128xf32> to vector<2x24xf32>
    %266 = vector.extract_strided_slice %254 {offsets = [0, 48], sizes = [2, 24], strides = [1, 1]} : vector<2x128xf32> to vector<2x24xf32>
    %267 = arith.mulf %263, %266 : vector<2x24xf32>
    %268 = arith.addf %265, %267 : vector<2x24xf32>
    %269 = math.tanh %268 : vector<2x24xf32>
    %cst_85 = arith.constant 1.000000e+00 : f32
    %270 = vector.broadcast %cst_85 : f32 to vector<2x24xf32>
    %271 = arith.subf %270, %264 : vector<2x24xf32>
    %272 = arith.mulf %271, %269 : vector<2x24xf32>
    %273 = arith.mulf %264, %232 : vector<2x24xf32>
    %274 = arith.addf %272, %273 : vector<2x24xf32>
    %275 = vector.extract_strided_slice %274 {offsets = [0, 0], sizes = [2, 12], strides = [1, 1]} : vector<2x24xf32> to vector<2x12xf32>
    %276 = arith.index_cast %c5_i32 : i32 to index
    %c0_86 = arith.constant 0 : index
    %c0_87 = arith.constant 0 : index
    %277 = vector.load %arg15[%276, %c0_86, %c0_87] : memref<8x2x12xf32, #tpu.memory_space<vmem>>, vector<1x2x12xf32>
    %278 = vector.shape_cast %277 : vector<1x2x12xf32> to vector<2x12xf32>
    %279 = vector.shape_cast %275 : vector<2x12xf32> to vector<1x2x12xf32>
    tpu.vector_store %arg15[%276, %c0_86, %c0_87], %279 {strides = array<i32>} : memref<8x2x12xf32, #tpu.memory_space<vmem>>, vector<1x2x12xf32>,
    %280 = vector.extract_strided_slice %274 {offsets = [0, 12], sizes = [2, 12], strides = [1, 1]} : vector<2x24xf32> to vector<2x12xf32>
    %281 = arith.index_cast %243 : i32 to index
    %c0_88 = arith.constant 0 : index
    %c0_89 = arith.constant 0 : index
    %282 = vector.load %arg16[%281, %c0_88, %c0_89] : memref<8x2x12xf32, #tpu.memory_space<vmem>>, vector<1x2x12xf32>
    %283 = vector.shape_cast %282 : vector<1x2x12xf32> to vector<2x12xf32>
    %284 = vector.shape_cast %280 : vector<2x12xf32> to vector<1x2x12xf32>
    tpu.vector_store %arg16[%281, %c0_88, %c0_89], %284 {strides = array<i32>} : memref<8x2x12xf32, #tpu.memory_space<vmem>>, vector<1x2x12xf32>,
    %c6_i32 = arith.constant 6 : i32
    %c7_i32_90 = arith.constant 7 : i32
    %285 = arith.subi %c7_i32_90, %c6_i32 : i32
    %286 = arith.index_cast %c6_i32 : i32 to index
    %c0_91 = arith.constant 0 : index
    %c0_92 = arith.constant 0 : index
    %287 = vector.load %arg14[%286, %c0_91, %c0_92] : memref<8x2x128xf32, #tpu.memory_space<vmem>>, vector<1x2x128xf32>
    %288 = vector.shape_cast %287 : vector<1x2x128xf32> to vector<2x128xf32>
    %289 = arith.index_cast %285 : i32 to index
    %c0_93 = arith.constant 0 : index
    %c0_94 = arith.constant 0 : index
    %290 = vector.load %arg14[%289, %c0_93, %c0_94] : memref<8x2x128xf32, #tpu.memory_space<vmem>>, vector<1x2x128xf32>
    %291 = vector.shape_cast %290 : vector<1x2x128xf32> to vector<2x128xf32>
    %292 = vector.shape_cast %18 : vector<1x128xi1> to vector<1x128xi1>
    %293 = vector.broadcast %292 : vector<1x128xi1> to vector<2x128xi1>
    %294 = arith.select %293, %288, %291 : vector<2x128xi1>, vector<2x128xf32>
    %cst_95 = arith.constant dense<0.000000e+00> : vector<2x128xf32>
    %295 = tpu.matmul %274, %28, %cst_95 {dimension_numbers = #tpu.dot_dimension_numbers<[1], [0], [0], [1], [0, 0, 1, 1], [], []>} : vector<2x24xf32>, vector<24x128xf32>, vector<2x128xf32> -> vector<2x128xf32>
    %296 = arith.addf %295, %31 : vector<2x128xf32>
    %297 = vector.extract_strided_slice %294 {offsets = [0, 0], sizes = [2, 48], strides = [1, 1]} : vector<2x128xf32> to vector<2x48xf32>
    %298 = vector.extract_strided_slice %296 {offsets = [0, 0], sizes = [2, 48], strides = [1, 1]} : vector<2x128xf32> to vector<2x48xf32>
    %299 = arith.addf %297, %298 : vector<2x48xf32>
    %300 = arith.negf %299 : vector<2x48xf32>
    %301 = math.exp %300 : vector<2x48xf32>
    %cst_96 = arith.constant 1.000000e+00 : f32
    %302 = vector.broadcast %cst_96 : f32 to vector<2x48xf32>
    %303 = arith.addf %302, %301 : vector<2x48xf32>
    %304 = arith.divf %302, %303 : vector<2x48xf32>
    %305 = vector.extract_strided_slice %304 {offsets = [0, 0], sizes = [2, 24], strides = [1, 1]} : vector<2x48xf32> to vector<2x24xf32>
    %306 = vector.extract_strided_slice %304 {offsets = [0, 24], sizes = [2, 24], strides = [1, 1]} : vector<2x48xf32> to vector<2x24xf32>
    %307 = vector.extract_strided_slice %294 {offsets = [0, 48], sizes = [2, 24], strides = [1, 1]} : vector<2x128xf32> to vector<2x24xf32>
    %308 = vector.extract_strided_slice %296 {offsets = [0, 48], sizes = [2, 24], strides = [1, 1]} : vector<2x128xf32> to vector<2x24xf32>
    %309 = arith.mulf %305, %308 : vector<2x24xf32>
    %310 = arith.addf %307, %309 : vector<2x24xf32>
    %311 = math.tanh %310 : vector<2x24xf32>
    %cst_97 = arith.constant 1.000000e+00 : f32
    %312 = vector.broadcast %cst_97 : f32 to vector<2x24xf32>
    %313 = arith.subf %312, %306 : vector<2x24xf32>
    %314 = arith.mulf %313, %311 : vector<2x24xf32>
    %315 = arith.mulf %306, %274 : vector<2x24xf32>
    %316 = arith.addf %314, %315 : vector<2x24xf32>
    %317 = vector.extract_strided_slice %316 {offsets = [0, 0], sizes = [2, 12], strides = [1, 1]} : vector<2x24xf32> to vector<2x12xf32>
    %318 = arith.index_cast %c6_i32 : i32 to index
    %c0_98 = arith.constant 0 : index
    %c0_99 = arith.constant 0 : index
    %319 = vector.load %arg15[%318, %c0_98, %c0_99] : memref<8x2x12xf32, #tpu.memory_space<vmem>>, vector<1x2x12xf32>
    %320 = vector.shape_cast %319 : vector<1x2x12xf32> to vector<2x12xf32>
    %321 = vector.shape_cast %317 : vector<2x12xf32> to vector<1x2x12xf32>
    tpu.vector_store %arg15[%318, %c0_98, %c0_99], %321 {strides = array<i32>} : memref<8x2x12xf32, #tpu.memory_space<vmem>>, vector<1x2x12xf32>,
    %322 = vector.extract_strided_slice %316 {offsets = [0, 12], sizes = [2, 12], strides = [1, 1]} : vector<2x24xf32> to vector<2x12xf32>
    %323 = arith.index_cast %285 : i32 to index
    %c0_100 = arith.constant 0 : index
    %c0_101 = arith.constant 0 : index
    %324 = vector.load %arg16[%323, %c0_100, %c0_101] : memref<8x2x12xf32, #tpu.memory_space<vmem>>, vector<1x2x12xf32>
    %325 = vector.shape_cast %324 : vector<1x2x12xf32> to vector<2x12xf32>
    %326 = vector.shape_cast %322 : vector<2x12xf32> to vector<1x2x12xf32>
    tpu.vector_store %arg16[%323, %c0_100, %c0_101], %326 {strides = array<i32>} : memref<8x2x12xf32, #tpu.memory_space<vmem>>, vector<1x2x12xf32>,
    %c7_i32_102 = arith.constant 7 : i32
    %c7_i32_103 = arith.constant 7 : i32
    %327 = arith.subi %c7_i32_103, %c7_i32_102 : i32
    %328 = arith.index_cast %c7_i32_102 : i32 to index
    %c0_104 = arith.constant 0 : index
    %c0_105 = arith.constant 0 : index
    %329 = vector.load %arg14[%328, %c0_104, %c0_105] : memref<8x2x128xf32, #tpu.memory_space<vmem>>, vector<1x2x128xf32>
    %330 = vector.shape_cast %329 : vector<1x2x128xf32> to vector<2x128xf32>
    %331 = arith.index_cast %327 : i32 to index
    %c0_106 = arith.constant 0 : index
    %c0_107 = arith.constant 0 : index
    %332 = vector.load %arg14[%331, %c0_106, %c0_107] : memref<8x2x128xf32, #tpu.memory_space<vmem>>, vector<1x2x128xf32>
    %333 = vector.shape_cast %332 : vector<1x2x128xf32> to vector<2x128xf32>
    %334 = vector.shape_cast %18 : vector<1x128xi1> to vector<1x128xi1>
    %335 = vector.broadcast %334 : vector<1x128xi1> to vector<2x128xi1>
    %336 = arith.select %335, %330, %333 : vector<2x128xi1>, vector<2x128xf32>
    %cst_108 = arith.constant dense<0.000000e+00> : vector<2x128xf32>
    %337 = tpu.matmul %316, %28, %cst_108 {dimension_numbers = #tpu.dot_dimension_numbers<[1], [0], [0], [1], [0, 0, 1, 1], [], []>} : vector<2x24xf32>, vector<24x128xf32>, vector<2x128xf32> -> vector<2x128xf32>
    %338 = arith.addf %337, %31 : vector<2x128xf32>
    %339 = vector.extract_strided_slice %336 {offsets = [0, 0], sizes = [2, 48], strides = [1, 1]} : vector<2x128xf32> to vector<2x48xf32>
    %340 = vector.extract_strided_slice %338 {offsets = [0, 0], sizes = [2, 48], strides = [1, 1]} : vector<2x128xf32> to vector<2x48xf32>
    %341 = arith.addf %339, %340 : vector<2x48xf32>
    %342 = arith.negf %341 : vector<2x48xf32>
    %343 = math.exp %342 : vector<2x48xf32>
    %cst_109 = arith.constant 1.000000e+00 : f32
    %344 = vector.broadcast %cst_109 : f32 to vector<2x48xf32>
    %345 = arith.addf %344, %343 : vector<2x48xf32>
    %346 = arith.divf %344, %345 : vector<2x48xf32>
    %347 = vector.extract_strided_slice %346 {offsets = [0, 0], sizes = [2, 24], strides = [1, 1]} : vector<2x48xf32> to vector<2x24xf32>
    %348 = vector.extract_strided_slice %346 {offsets = [0, 24], sizes = [2, 24], strides = [1, 1]} : vector<2x48xf32> to vector<2x24xf32>
    %349 = vector.extract_strided_slice %336 {offsets = [0, 48], sizes = [2, 24], strides = [1, 1]} : vector<2x128xf32> to vector<2x24xf32>
    %350 = vector.extract_strided_slice %338 {offsets = [0, 48], sizes = [2, 24], strides = [1, 1]} : vector<2x128xf32> to vector<2x24xf32>
    %351 = arith.mulf %347, %350 : vector<2x24xf32>
    %352 = arith.addf %349, %351 : vector<2x24xf32>
    %353 = math.tanh %352 : vector<2x24xf32>
    %cst_110 = arith.constant 1.000000e+00 : f32
    %354 = vector.broadcast %cst_110 : f32 to vector<2x24xf32>
    %355 = arith.subf %354, %348 : vector<2x24xf32>
    %356 = arith.mulf %355, %353 : vector<2x24xf32>
    %357 = arith.mulf %348, %316 : vector<2x24xf32>
    %358 = arith.addf %356, %357 : vector<2x24xf32>
    %359 = vector.extract_strided_slice %358 {offsets = [0, 0], sizes = [2, 12], strides = [1, 1]} : vector<2x24xf32> to vector<2x12xf32>
    %360 = arith.index_cast %c7_i32_102 : i32 to index
    %c0_111 = arith.constant 0 : index
    %c0_112 = arith.constant 0 : index
    %361 = vector.load %arg15[%360, %c0_111, %c0_112] : memref<8x2x12xf32, #tpu.memory_space<vmem>>, vector<1x2x12xf32>
    %362 = vector.shape_cast %361 : vector<1x2x12xf32> to vector<2x12xf32>
    %363 = vector.shape_cast %359 : vector<2x12xf32> to vector<1x2x12xf32>
    tpu.vector_store %arg15[%360, %c0_111, %c0_112], %363 {strides = array<i32>} : memref<8x2x12xf32, #tpu.memory_space<vmem>>, vector<1x2x12xf32>,
    %364 = vector.extract_strided_slice %358 {offsets = [0, 12], sizes = [2, 12], strides = [1, 1]} : vector<2x24xf32> to vector<2x12xf32>
    %365 = arith.index_cast %327 : i32 to index
    %c0_113 = arith.constant 0 : index
    %c0_114 = arith.constant 0 : index
    %366 = vector.load %arg16[%365, %c0_113, %c0_114] : memref<8x2x12xf32, #tpu.memory_space<vmem>>, vector<1x2x12xf32>
    %367 = vector.shape_cast %366 : vector<1x2x12xf32> to vector<2x12xf32>
    %368 = vector.shape_cast %364 : vector<2x12xf32> to vector<1x2x12xf32>
    tpu.vector_store %arg16[%365, %c0_113, %c0_114], %368 {strides = array<i32>} : memref<8x2x12xf32, #tpu.memory_space<vmem>>, vector<1x2x12xf32>,
    %c8_i32 = arith.constant 8 : i32
    %c0_115 = arith.constant 0 : index
    %c0_116 = arith.constant 0 : index
    %369 = vector.load %arg3[%c0_115, %c0_116] : memref<24x128xf32, #tpu.memory_space<vmem>>, vector<24x128xf32>
    %c0_117 = arith.constant 0 : index
    %c0_118 = arith.constant 0 : index
    %c0_119 = arith.constant 0 : index
    %370 = vector.load %arg15[%c0_117, %c0_118, %c0_119] : memref<8x2x12xf32, #tpu.memory_space<vmem>>, vector<8x2x12xf32>
    %371 = vector.shape_cast %370 : vector<8x2x12xf32> to vector<16x12xf32>
    %372 = vector.extract_strided_slice %369 {offsets = [0, 0], sizes = [12, 128], strides = [1, 1]} : vector<24x128xf32> to vector<12x128xf32>
    %cst_120 = arith.constant dense<0.000000e+00> : vector<16x128xf32>
    %373 = tpu.matmul %371, %372, %cst_120 {dimension_numbers = #tpu.dot_dimension_numbers<[1], [0], [0], [1], [0, 0, 1, 1], [], []>} : vector<16x12xf32>, vector<12x128xf32>, vector<16x128xf32> -> vector<16x128xf32>
    %c0_121 = arith.constant 0 : index
    %c0_122 = arith.constant 0 : index
    %c0_123 = arith.constant 0 : index
    %374 = vector.load %arg16[%c0_121, %c0_122, %c0_123] : memref<8x2x12xf32, #tpu.memory_space<vmem>>, vector<8x2x12xf32>
    %375 = vector.shape_cast %374 : vector<8x2x12xf32> to vector<16x12xf32>
    %376 = vector.extract_strided_slice %369 {offsets = [12, 0], sizes = [12, 128], strides = [1, 1]} : vector<24x128xf32> to vector<12x128xf32>
    %cst_124 = arith.constant dense<0.000000e+00> : vector<16x128xf32>
    %377 = tpu.matmul %375, %376, %cst_124 {dimension_numbers = #tpu.dot_dimension_numbers<[1], [0], [0], [1], [0, 0, 1, 1], [], []>} : vector<16x12xf32>, vector<12x128xf32>, vector<16x128xf32> -> vector<16x128xf32>
    %378 = arith.addf %373, %377 : vector<16x128xf32>
    %c0_125 = arith.constant 0 : index
    %c0_126 = arith.constant 0 : index
    %379 = vector.load %arg4[%c0_125, %c0_126] : memref<1x128xf32, #tpu.memory_space<vmem>>, vector<1x128xf32>
    %380 = vector.broadcast %379 : vector<1x128xf32> to vector<16x128xf32>
    %381 = arith.addf %378, %380 : vector<16x128xf32>
    %382 = vector.shape_cast %381 : vector<16x128xf32> to vector<8x2x128xf32>
    %c0_127 = arith.constant 0 : index
    %c0_128 = arith.constant 0 : index
    %c0_129 = arith.constant 0 : index
    %383 = vector.load %arg14[%c0_127, %c0_128, %c0_129] : memref<8x2x128xf32, #tpu.memory_space<vmem>>, vector<8x2x128xf32>
    tpu.vector_store %arg14[%c0_127, %c0_128, %c0_129], %382 {strides = array<i32>} : memref<8x2x128xf32, #tpu.memory_space<vmem>>, vector<8x2x128xf32>,
    %c0_130 = arith.constant 0 : index
    %c0_131 = arith.constant 0 : index
    %384 = vector.load %arg7[%c0_130, %c0_131] : memref<24x128xf32, #tpu.memory_space<vmem>>, vector<24x128xf32>
    %c0_132 = arith.constant 0 : index
    %c0_133 = arith.constant 0 : index
    %385 = vector.load %arg8[%c0_132, %c0_133] : memref<1x128xf32, #tpu.memory_space<vmem>>, vector<1x128xf32>
    %c0_134 = arith.constant 0 : index
    %c0_135 = arith.constant 0 : index
    %386 = vector.load %arg9[%c0_134, %c0_135] : memref<1x24xf32, #tpu.memory_space<vmem>>, vector<1x24xf32>
    %c0_136 = arith.constant 0 : index
    %c0_137 = arith.constant 0 : index
    %387 = vector.load %arg10[%c0_136, %c0_137] : memref<1x24xf32, #tpu.memory_space<vmem>>, vector<1x24xf32>
    %388 = vector.shape_cast %385 : vector<1x128xf32> to vector<1x128xf32>
    %389 = vector.broadcast %388 : vector<1x128xf32> to vector<2x128xf32>
    %390 = vector.shape_cast %386 : vector<1x24xf32> to vector<1x24xf32>
    %391 = vector.broadcast %390 : vector<1x24xf32> to vector<2x24xf32>
    %392 = vector.shape_cast %387 : vector<1x24xf32> to vector<1x24xf32>
    %393 = vector.broadcast %392 : vector<1x24xf32> to vector<2x24xf32>
    %cst_138 = arith.constant 0.000000e+00 : f32
    %394 = vector.broadcast %cst_138 : f32 to vector<2x24xf32>
    %cst_139 = arith.constant 0.000000e+00 : f32
    %395 = vector.broadcast %cst_139 : f32 to vector<2x24xf32>
    %c0_i32_140 = arith.constant 0 : i32
    %c7_i32_141 = arith.constant 7 : i32
    %396 = arith.subi %c7_i32_141, %c0_i32_140 : i32
    %397 = arith.index_cast %c0_i32_140 : i32 to index
    %c0_142 = arith.constant 0 : index
    %c0_143 = arith.constant 0 : index
    %398 = vector.load %arg14[%397, %c0_142, %c0_143] : memref<8x2x128xf32, #tpu.memory_space<vmem>>, vector<1x2x128xf32>
    %399 = vector.shape_cast %398 : vector<1x2x128xf32> to vector<2x128xf32>
    %400 = arith.index_cast %396 : i32 to index
    %c0_144 = arith.constant 0 : index
    %c0_145 = arith.constant 0 : index
    %401 = vector.load %arg14[%400, %c0_144, %c0_145] : memref<8x2x128xf32, #tpu.memory_space<vmem>>, vector<1x2x128xf32>
    %402 = vector.shape_cast %401 : vector<1x2x128xf32> to vector<2x128xf32>
    %403 = vector.shape_cast %18 : vector<1x128xi1> to vector<1x128xi1>
    %404 = vector.broadcast %403 : vector<1x128xi1> to vector<2x128xi1>
    %405 = arith.select %404, %399, %402 : vector<2x128xi1>, vector<2x128xf32>
    %cst_146 = arith.constant dense<0.000000e+00> : vector<2x128xf32>
    %406 = tpu.matmul %394, %384, %cst_146 {dimension_numbers = #tpu.dot_dimension_numbers<[1], [0], [0], [1], [0, 0, 1, 1], [], []>} : vector<2x24xf32>, vector<24x128xf32>, vector<2x128xf32> -> vector<2x128xf32>
    %407 = arith.addf %406, %389 : vector<2x128xf32>
    %408 = vector.extract_strided_slice %405 {offsets = [0, 0], sizes = [2, 48], strides = [1, 1]} : vector<2x128xf32> to vector<2x48xf32>
    %409 = vector.extract_strided_slice %407 {offsets = [0, 0], sizes = [2, 48], strides = [1, 1]} : vector<2x128xf32> to vector<2x48xf32>
    %410 = arith.addf %408, %409 : vector<2x48xf32>
    %411 = arith.negf %410 : vector<2x48xf32>
    %412 = math.exp %411 : vector<2x48xf32>
    %cst_147 = arith.constant 1.000000e+00 : f32
    %413 = vector.broadcast %cst_147 : f32 to vector<2x48xf32>
    %414 = arith.addf %413, %412 : vector<2x48xf32>
    %415 = arith.divf %413, %414 : vector<2x48xf32>
    %416 = vector.extract_strided_slice %415 {offsets = [0, 0], sizes = [2, 24], strides = [1, 1]} : vector<2x48xf32> to vector<2x24xf32>
    %417 = vector.extract_strided_slice %415 {offsets = [0, 24], sizes = [2, 24], strides = [1, 1]} : vector<2x48xf32> to vector<2x24xf32>
    %418 = vector.extract_strided_slice %405 {offsets = [0, 48], sizes = [2, 24], strides = [1, 1]} : vector<2x128xf32> to vector<2x24xf32>
    %419 = vector.extract_strided_slice %407 {offsets = [0, 48], sizes = [2, 24], strides = [1, 1]} : vector<2x128xf32> to vector<2x24xf32>
    %420 = arith.mulf %416, %419 : vector<2x24xf32>
    %421 = arith.addf %418, %420 : vector<2x24xf32>
    %422 = math.tanh %421 : vector<2x24xf32>
    %cst_148 = arith.constant 1.000000e+00 : f32
    %423 = vector.broadcast %cst_148 : f32 to vector<2x24xf32>
    %424 = arith.subf %423, %417 : vector<2x24xf32>
    %425 = arith.mulf %424, %422 : vector<2x24xf32>
    %426 = arith.mulf %417, %394 : vector<2x24xf32>
    %427 = arith.addf %425, %426 : vector<2x24xf32>
    %428 = arith.mulf %427, %391 : vector<2x24xf32>
    %429 = arith.addf %428, %393 : vector<2x24xf32>
    %cst_149 = arith.constant 0.000000e+00 : f32
    %430 = vector.broadcast %cst_149 : f32 to vector<2x24xf32>
    %431 = arith.maximumf %429, %430 : vector<2x24xf32>
    %432 = arith.addf %395, %431 : vector<2x24xf32>
    %c1_i32_150 = arith.constant 1 : i32
    %c7_i32_151 = arith.constant 7 : i32
    %433 = arith.subi %c7_i32_151, %c1_i32_150 : i32
    %434 = arith.index_cast %c1_i32_150 : i32 to index
    %c0_152 = arith.constant 0 : index
    %c0_153 = arith.constant 0 : index
    %435 = vector.load %arg14[%434, %c0_152, %c0_153] : memref<8x2x128xf32, #tpu.memory_space<vmem>>, vector<1x2x128xf32>
    %436 = vector.shape_cast %435 : vector<1x2x128xf32> to vector<2x128xf32>
    %437 = arith.index_cast %433 : i32 to index
    %c0_154 = arith.constant 0 : index
    %c0_155 = arith.constant 0 : index
    %438 = vector.load %arg14[%437, %c0_154, %c0_155] : memref<8x2x128xf32, #tpu.memory_space<vmem>>, vector<1x2x128xf32>
    %439 = vector.shape_cast %438 : vector<1x2x128xf32> to vector<2x128xf32>
    %440 = vector.shape_cast %18 : vector<1x128xi1> to vector<1x128xi1>
    %441 = vector.broadcast %440 : vector<1x128xi1> to vector<2x128xi1>
    %442 = arith.select %441, %436, %439 : vector<2x128xi1>, vector<2x128xf32>
    %cst_156 = arith.constant dense<0.000000e+00> : vector<2x128xf32>
    %443 = tpu.matmul %427, %384, %cst_156 {dimension_numbers = #tpu.dot_dimension_numbers<[1], [0], [0], [1], [0, 0, 1, 1], [], []>} : vector<2x24xf32>, vector<24x128xf32>, vector<2x128xf32> -> vector<2x128xf32>
    %444 = arith.addf %443, %389 : vector<2x128xf32>
    %445 = vector.extract_strided_slice %442 {offsets = [0, 0], sizes = [2, 48], strides = [1, 1]} : vector<2x128xf32> to vector<2x48xf32>
    %446 = vector.extract_strided_slice %444 {offsets = [0, 0], sizes = [2, 48], strides = [1, 1]} : vector<2x128xf32> to vector<2x48xf32>
    %447 = arith.addf %445, %446 : vector<2x48xf32>
    %448 = arith.negf %447 : vector<2x48xf32>
    %449 = math.exp %448 : vector<2x48xf32>
    %cst_157 = arith.constant 1.000000e+00 : f32
    %450 = vector.broadcast %cst_157 : f32 to vector<2x48xf32>
    %451 = arith.addf %450, %449 : vector<2x48xf32>
    %452 = arith.divf %450, %451 : vector<2x48xf32>
    %453 = vector.extract_strided_slice %452 {offsets = [0, 0], sizes = [2, 24], strides = [1, 1]} : vector<2x48xf32> to vector<2x24xf32>
    %454 = vector.extract_strided_slice %452 {offsets = [0, 24], sizes = [2, 24], strides = [1, 1]} : vector<2x48xf32> to vector<2x24xf32>
    %455 = vector.extract_strided_slice %442 {offsets = [0, 48], sizes = [2, 24], strides = [1, 1]} : vector<2x128xf32> to vector<2x24xf32>
    %456 = vector.extract_strided_slice %444 {offsets = [0, 48], sizes = [2, 24], strides = [1, 1]} : vector<2x128xf32> to vector<2x24xf32>
    %457 = arith.mulf %453, %456 : vector<2x24xf32>
    %458 = arith.addf %455, %457 : vector<2x24xf32>
    %459 = math.tanh %458 : vector<2x24xf32>
    %cst_158 = arith.constant 1.000000e+00 : f32
    %460 = vector.broadcast %cst_158 : f32 to vector<2x24xf32>
    %461 = arith.subf %460, %454 : vector<2x24xf32>
    %462 = arith.mulf %461, %459 : vector<2x24xf32>
    %463 = arith.mulf %454, %427 : vector<2x24xf32>
    %464 = arith.addf %462, %463 : vector<2x24xf32>
    %465 = arith.mulf %464, %391 : vector<2x24xf32>
    %466 = arith.addf %465, %393 : vector<2x24xf32>
    %cst_159 = arith.constant 0.000000e+00 : f32
    %467 = vector.broadcast %cst_159 : f32 to vector<2x24xf32>
    %468 = arith.maximumf %466, %467 : vector<2x24xf32>
    %469 = arith.addf %432, %468 : vector<2x24xf32>
    %c2_i32_160 = arith.constant 2 : i32
    %c7_i32_161 = arith.constant 7 : i32
    %470 = arith.subi %c7_i32_161, %c2_i32_160 : i32
    %471 = arith.index_cast %c2_i32_160 : i32 to index
    %c0_162 = arith.constant 0 : index
    %c0_163 = arith.constant 0 : index
    %472 = vector.load %arg14[%471, %c0_162, %c0_163] : memref<8x2x128xf32, #tpu.memory_space<vmem>>, vector<1x2x128xf32>
    %473 = vector.shape_cast %472 : vector<1x2x128xf32> to vector<2x128xf32>
    %474 = arith.index_cast %470 : i32 to index
    %c0_164 = arith.constant 0 : index
    %c0_165 = arith.constant 0 : index
    %475 = vector.load %arg14[%474, %c0_164, %c0_165] : memref<8x2x128xf32, #tpu.memory_space<vmem>>, vector<1x2x128xf32>
    %476 = vector.shape_cast %475 : vector<1x2x128xf32> to vector<2x128xf32>
    %477 = vector.shape_cast %18 : vector<1x128xi1> to vector<1x128xi1>
    %478 = vector.broadcast %477 : vector<1x128xi1> to vector<2x128xi1>
    %479 = arith.select %478, %473, %476 : vector<2x128xi1>, vector<2x128xf32>
    %cst_166 = arith.constant dense<0.000000e+00> : vector<2x128xf32>
    %480 = tpu.matmul %464, %384, %cst_166 {dimension_numbers = #tpu.dot_dimension_numbers<[1], [0], [0], [1], [0, 0, 1, 1], [], []>} : vector<2x24xf32>, vector<24x128xf32>, vector<2x128xf32> -> vector<2x128xf32>
    %481 = arith.addf %480, %389 : vector<2x128xf32>
    %482 = vector.extract_strided_slice %479 {offsets = [0, 0], sizes = [2, 48], strides = [1, 1]} : vector<2x128xf32> to vector<2x48xf32>
    %483 = vector.extract_strided_slice %481 {offsets = [0, 0], sizes = [2, 48], strides = [1, 1]} : vector<2x128xf32> to vector<2x48xf32>
    %484 = arith.addf %482, %483 : vector<2x48xf32>
    %485 = arith.negf %484 : vector<2x48xf32>
    %486 = math.exp %485 : vector<2x48xf32>
    %cst_167 = arith.constant 1.000000e+00 : f32
    %487 = vector.broadcast %cst_167 : f32 to vector<2x48xf32>
    %488 = arith.addf %487, %486 : vector<2x48xf32>
    %489 = arith.divf %487, %488 : vector<2x48xf32>
    %490 = vector.extract_strided_slice %489 {offsets = [0, 0], sizes = [2, 24], strides = [1, 1]} : vector<2x48xf32> to vector<2x24xf32>
    %491 = vector.extract_strided_slice %489 {offsets = [0, 24], sizes = [2, 24], strides = [1, 1]} : vector<2x48xf32> to vector<2x24xf32>
    %492 = vector.extract_strided_slice %479 {offsets = [0, 48], sizes = [2, 24], strides = [1, 1]} : vector<2x128xf32> to vector<2x24xf32>
    %493 = vector.extract_strided_slice %481 {offsets = [0, 48], sizes = [2, 24], strides = [1, 1]} : vector<2x128xf32> to vector<2x24xf32>
    %494 = arith.mulf %490, %493 : vector<2x24xf32>
    %495 = arith.addf %492, %494 : vector<2x24xf32>
    %496 = math.tanh %495 : vector<2x24xf32>
    %cst_168 = arith.constant 1.000000e+00 : f32
    %497 = vector.broadcast %cst_168 : f32 to vector<2x24xf32>
    %498 = arith.subf %497, %491 : vector<2x24xf32>
    %499 = arith.mulf %498, %496 : vector<2x24xf32>
    %500 = arith.mulf %491, %464 : vector<2x24xf32>
    %501 = arith.addf %499, %500 : vector<2x24xf32>
    %502 = arith.mulf %501, %391 : vector<2x24xf32>
    %503 = arith.addf %502, %393 : vector<2x24xf32>
    %cst_169 = arith.constant 0.000000e+00 : f32
    %504 = vector.broadcast %cst_169 : f32 to vector<2x24xf32>
    %505 = arith.maximumf %503, %504 : vector<2x24xf32>
    %506 = arith.addf %469, %505 : vector<2x24xf32>
    %c3_i32_170 = arith.constant 3 : i32
    %c7_i32_171 = arith.constant 7 : i32
    %507 = arith.subi %c7_i32_171, %c3_i32_170 : i32
    %508 = arith.index_cast %c3_i32_170 : i32 to index
    %c0_172 = arith.constant 0 : index
    %c0_173 = arith.constant 0 : index
    %509 = vector.load %arg14[%508, %c0_172, %c0_173] : memref<8x2x128xf32, #tpu.memory_space<vmem>>, vector<1x2x128xf32>
    %510 = vector.shape_cast %509 : vector<1x2x128xf32> to vector<2x128xf32>
    %511 = arith.index_cast %507 : i32 to index
    %c0_174 = arith.constant 0 : index
    %c0_175 = arith.constant 0 : index
    %512 = vector.load %arg14[%511, %c0_174, %c0_175] : memref<8x2x128xf32, #tpu.memory_space<vmem>>, vector<1x2x128xf32>
    %513 = vector.shape_cast %512 : vector<1x2x128xf32> to vector<2x128xf32>
    %514 = vector.shape_cast %18 : vector<1x128xi1> to vector<1x128xi1>
    %515 = vector.broadcast %514 : vector<1x128xi1> to vector<2x128xi1>
    %516 = arith.select %515, %510, %513 : vector<2x128xi1>, vector<2x128xf32>
    %cst_176 = arith.constant dense<0.000000e+00> : vector<2x128xf32>
    %517 = tpu.matmul %501, %384, %cst_176 {dimension_numbers = #tpu.dot_dimension_numbers<[1], [0], [0], [1], [0, 0, 1, 1], [], []>} : vector<2x24xf32>, vector<24x128xf32>, vector<2x128xf32> -> vector<2x128xf32>
    %518 = arith.addf %517, %389 : vector<2x128xf32>
    %519 = vector.extract_strided_slice %516 {offsets = [0, 0], sizes = [2, 48], strides = [1, 1]} : vector<2x128xf32> to vector<2x48xf32>
    %520 = vector.extract_strided_slice %518 {offsets = [0, 0], sizes = [2, 48], strides = [1, 1]} : vector<2x128xf32> to vector<2x48xf32>
    %521 = arith.addf %519, %520 : vector<2x48xf32>
    %522 = arith.negf %521 : vector<2x48xf32>
    %523 = math.exp %522 : vector<2x48xf32>
    %cst_177 = arith.constant 1.000000e+00 : f32
    %524 = vector.broadcast %cst_177 : f32 to vector<2x48xf32>
    %525 = arith.addf %524, %523 : vector<2x48xf32>
    %526 = arith.divf %524, %525 : vector<2x48xf32>
    %527 = vector.extract_strided_slice %526 {offsets = [0, 0], sizes = [2, 24], strides = [1, 1]} : vector<2x48xf32> to vector<2x24xf32>
    %528 = vector.extract_strided_slice %526 {offsets = [0, 24], sizes = [2, 24], strides = [1, 1]} : vector<2x48xf32> to vector<2x24xf32>
    %529 = vector.extract_strided_slice %516 {offsets = [0, 48], sizes = [2, 24], strides = [1, 1]} : vector<2x128xf32> to vector<2x24xf32>
    %530 = vector.extract_strided_slice %518 {offsets = [0, 48], sizes = [2, 24], strides = [1, 1]} : vector<2x128xf32> to vector<2x24xf32>
    %531 = arith.mulf %527, %530 : vector<2x24xf32>
    %532 = arith.addf %529, %531 : vector<2x24xf32>
    %533 = math.tanh %532 : vector<2x24xf32>
    %cst_178 = arith.constant 1.000000e+00 : f32
    %534 = vector.broadcast %cst_178 : f32 to vector<2x24xf32>
    %535 = arith.subf %534, %528 : vector<2x24xf32>
    %536 = arith.mulf %535, %533 : vector<2x24xf32>
    %537 = arith.mulf %528, %501 : vector<2x24xf32>
    %538 = arith.addf %536, %537 : vector<2x24xf32>
    %539 = arith.mulf %538, %391 : vector<2x24xf32>
    %540 = arith.addf %539, %393 : vector<2x24xf32>
    %cst_179 = arith.constant 0.000000e+00 : f32
    %541 = vector.broadcast %cst_179 : f32 to vector<2x24xf32>
    %542 = arith.maximumf %540, %541 : vector<2x24xf32>
    %543 = arith.addf %506, %542 : vector<2x24xf32>
    %c4_i32_180 = arith.constant 4 : i32
    %c7_i32_181 = arith.constant 7 : i32
    %544 = arith.subi %c7_i32_181, %c4_i32_180 : i32
    %545 = arith.index_cast %c4_i32_180 : i32 to index
    %c0_182 = arith.constant 0 : index
    %c0_183 = arith.constant 0 : index
    %546 = vector.load %arg14[%545, %c0_182, %c0_183] : memref<8x2x128xf32, #tpu.memory_space<vmem>>, vector<1x2x128xf32>
    %547 = vector.shape_cast %546 : vector<1x2x128xf32> to vector<2x128xf32>
    %548 = arith.index_cast %544 : i32 to index
    %c0_184 = arith.constant 0 : index
    %c0_185 = arith.constant 0 : index
    %549 = vector.load %arg14[%548, %c0_184, %c0_185] : memref<8x2x128xf32, #tpu.memory_space<vmem>>, vector<1x2x128xf32>
    %550 = vector.shape_cast %549 : vector<1x2x128xf32> to vector<2x128xf32>
    %551 = vector.shape_cast %18 : vector<1x128xi1> to vector<1x128xi1>
    %552 = vector.broadcast %551 : vector<1x128xi1> to vector<2x128xi1>
    %553 = arith.select %552, %547, %550 : vector<2x128xi1>, vector<2x128xf32>
    %cst_186 = arith.constant dense<0.000000e+00> : vector<2x128xf32>
    %554 = tpu.matmul %538, %384, %cst_186 {dimension_numbers = #tpu.dot_dimension_numbers<[1], [0], [0], [1], [0, 0, 1, 1], [], []>} : vector<2x24xf32>, vector<24x128xf32>, vector<2x128xf32> -> vector<2x128xf32>
    %555 = arith.addf %554, %389 : vector<2x128xf32>
    %556 = vector.extract_strided_slice %553 {offsets = [0, 0], sizes = [2, 48], strides = [1, 1]} : vector<2x128xf32> to vector<2x48xf32>
    %557 = vector.extract_strided_slice %555 {offsets = [0, 0], sizes = [2, 48], strides = [1, 1]} : vector<2x128xf32> to vector<2x48xf32>
    %558 = arith.addf %556, %557 : vector<2x48xf32>
    %559 = arith.negf %558 : vector<2x48xf32>
    %560 = math.exp %559 : vector<2x48xf32>
    %cst_187 = arith.constant 1.000000e+00 : f32
    %561 = vector.broadcast %cst_187 : f32 to vector<2x48xf32>
    %562 = arith.addf %561, %560 : vector<2x48xf32>
    %563 = arith.divf %561, %562 : vector<2x48xf32>
    %564 = vector.extract_strided_slice %563 {offsets = [0, 0], sizes = [2, 24], strides = [1, 1]} : vector<2x48xf32> to vector<2x24xf32>
    %565 = vector.extract_strided_slice %563 {offsets = [0, 24], sizes = [2, 24], strides = [1, 1]} : vector<2x48xf32> to vector<2x24xf32>
    %566 = vector.extract_strided_slice %553 {offsets = [0, 48], sizes = [2, 24], strides = [1, 1]} : vector<2x128xf32> to vector<2x24xf32>
    %567 = vector.extract_strided_slice %555 {offsets = [0, 48], sizes = [2, 24], strides = [1, 1]} : vector<2x128xf32> to vector<2x24xf32>
    %568 = arith.mulf %564, %567 : vector<2x24xf32>
    %569 = arith.addf %566, %568 : vector<2x24xf32>
    %570 = math.tanh %569 : vector<2x24xf32>
    %cst_188 = arith.constant 1.000000e+00 : f32
    %571 = vector.broadcast %cst_188 : f32 to vector<2x24xf32>
    %572 = arith.subf %571, %565 : vector<2x24xf32>
    %573 = arith.mulf %572, %570 : vector<2x24xf32>
    %574 = arith.mulf %565, %538 : vector<2x24xf32>
    %575 = arith.addf %573, %574 : vector<2x24xf32>
    %576 = arith.mulf %575, %391 : vector<2x24xf32>
    %577 = arith.addf %576, %393 : vector<2x24xf32>
    %cst_189 = arith.constant 0.000000e+00 : f32
    %578 = vector.broadcast %cst_189 : f32 to vector<2x24xf32>
    %579 = arith.maximumf %577, %578 : vector<2x24xf32>
    %580 = arith.addf %543, %579 : vector<2x24xf32>
    %c5_i32_190 = arith.constant 5 : i32
    %c7_i32_191 = arith.constant 7 : i32
    %581 = arith.subi %c7_i32_191, %c5_i32_190 : i32
    %582 = arith.index_cast %c5_i32_190 : i32 to index
    %c0_192 = arith.constant 0 : index
    %c0_193 = arith.constant 0 : index
    %583 = vector.load %arg14[%582, %c0_192, %c0_193] : memref<8x2x128xf32, #tpu.memory_space<vmem>>, vector<1x2x128xf32>
    %584 = vector.shape_cast %583 : vector<1x2x128xf32> to vector<2x128xf32>
    %585 = arith.index_cast %581 : i32 to index
    %c0_194 = arith.constant 0 : index
    %c0_195 = arith.constant 0 : index
    %586 = vector.load %arg14[%585, %c0_194, %c0_195] : memref<8x2x128xf32, #tpu.memory_space<vmem>>, vector<1x2x128xf32>
    %587 = vector.shape_cast %586 : vector<1x2x128xf32> to vector<2x128xf32>
    %588 = vector.shape_cast %18 : vector<1x128xi1> to vector<1x128xi1>
    %589 = vector.broadcast %588 : vector<1x128xi1> to vector<2x128xi1>
    %590 = arith.select %589, %584, %587 : vector<2x128xi1>, vector<2x128xf32>
    %cst_196 = arith.constant dense<0.000000e+00> : vector<2x128xf32>
    %591 = tpu.matmul %575, %384, %cst_196 {dimension_numbers = #tpu.dot_dimension_numbers<[1], [0], [0], [1], [0, 0, 1, 1], [], []>} : vector<2x24xf32>, vector<24x128xf32>, vector<2x128xf32> -> vector<2x128xf32>
    %592 = arith.addf %591, %389 : vector<2x128xf32>
    %593 = vector.extract_strided_slice %590 {offsets = [0, 0], sizes = [2, 48], strides = [1, 1]} : vector<2x128xf32> to vector<2x48xf32>
    %594 = vector.extract_strided_slice %592 {offsets = [0, 0], sizes = [2, 48], strides = [1, 1]} : vector<2x128xf32> to vector<2x48xf32>
    %595 = arith.addf %593, %594 : vector<2x48xf32>
    %596 = arith.negf %595 : vector<2x48xf32>
    %597 = math.exp %596 : vector<2x48xf32>
    %cst_197 = arith.constant 1.000000e+00 : f32
    %598 = vector.broadcast %cst_197 : f32 to vector<2x48xf32>
    %599 = arith.addf %598, %597 : vector<2x48xf32>
    %600 = arith.divf %598, %599 : vector<2x48xf32>
    %601 = vector.extract_strided_slice %600 {offsets = [0, 0], sizes = [2, 24], strides = [1, 1]} : vector<2x48xf32> to vector<2x24xf32>
    %602 = vector.extract_strided_slice %600 {offsets = [0, 24], sizes = [2, 24], strides = [1, 1]} : vector<2x48xf32> to vector<2x24xf32>
    %603 = vector.extract_strided_slice %590 {offsets = [0, 48], sizes = [2, 24], strides = [1, 1]} : vector<2x128xf32> to vector<2x24xf32>
    %604 = vector.extract_strided_slice %592 {offsets = [0, 48], sizes = [2, 24], strides = [1, 1]} : vector<2x128xf32> to vector<2x24xf32>
    %605 = arith.mulf %601, %604 : vector<2x24xf32>
    %606 = arith.addf %603, %605 : vector<2x24xf32>
    %607 = math.tanh %606 : vector<2x24xf32>
    %cst_198 = arith.constant 1.000000e+00 : f32
    %608 = vector.broadcast %cst_198 : f32 to vector<2x24xf32>
    %609 = arith.subf %608, %602 : vector<2x24xf32>
    %610 = arith.mulf %609, %607 : vector<2x24xf32>
    %611 = arith.mulf %602, %575 : vector<2x24xf32>
    %612 = arith.addf %610, %611 : vector<2x24xf32>
    %613 = arith.mulf %612, %391 : vector<2x24xf32>
    %614 = arith.addf %613, %393 : vector<2x24xf32>
    %cst_199 = arith.constant 0.000000e+00 : f32
    %615 = vector.broadcast %cst_199 : f32 to vector<2x24xf32>
    %616 = arith.maximumf %614, %615 : vector<2x24xf32>
    %617 = arith.addf %580, %616 : vector<2x24xf32>
    %c6_i32_200 = arith.constant 6 : i32
    %c7_i32_201 = arith.constant 7 : i32
    %618 = arith.subi %c7_i32_201, %c6_i32_200 : i32
    %619 = arith.index_cast %c6_i32_200 : i32 to index
    %c0_202 = arith.constant 0 : index
    %c0_203 = arith.constant 0 : index
    %620 = vector.load %arg14[%619, %c0_202, %c0_203] : memref<8x2x128xf32, #tpu.memory_space<vmem>>, vector<1x2x128xf32>
    %621 = vector.shape_cast %620 : vector<1x2x128xf32> to vector<2x128xf32>
    %622 = arith.index_cast %618 : i32 to index
    %c0_204 = arith.constant 0 : index
    %c0_205 = arith.constant 0 : index
    %623 = vector.load %arg14[%622, %c0_204, %c0_205] : memref<8x2x128xf32, #tpu.memory_space<vmem>>, vector<1x2x128xf32>
    %624 = vector.shape_cast %623 : vector<1x2x128xf32> to vector<2x128xf32>
    %625 = vector.shape_cast %18 : vector<1x128xi1> to vector<1x128xi1>
    %626 = vector.broadcast %625 : vector<1x128xi1> to vector<2x128xi1>
    %627 = arith.select %626, %621, %624 : vector<2x128xi1>, vector<2x128xf32>
    %cst_206 = arith.constant dense<0.000000e+00> : vector<2x128xf32>
    %628 = tpu.matmul %612, %384, %cst_206 {dimension_numbers = #tpu.dot_dimension_numbers<[1], [0], [0], [1], [0, 0, 1, 1], [], []>} : vector<2x24xf32>, vector<24x128xf32>, vector<2x128xf32> -> vector<2x128xf32>
    %629 = arith.addf %628, %389 : vector<2x128xf32>
    %630 = vector.extract_strided_slice %627 {offsets = [0, 0], sizes = [2, 48], strides = [1, 1]} : vector<2x128xf32> to vector<2x48xf32>
    %631 = vector.extract_strided_slice %629 {offsets = [0, 0], sizes = [2, 48], strides = [1, 1]} : vector<2x128xf32> to vector<2x48xf32>
    %632 = arith.addf %630, %631 : vector<2x48xf32>
    %633 = arith.negf %632 : vector<2x48xf32>
    %634 = math.exp %633 : vector<2x48xf32>
    %cst_207 = arith.constant 1.000000e+00 : f32
    %635 = vector.broadcast %cst_207 : f32 to vector<2x48xf32>
    %636 = arith.addf %635, %634 : vector<2x48xf32>
    %637 = arith.divf %635, %636 : vector<2x48xf32>
    %638 = vector.extract_strided_slice %637 {offsets = [0, 0], sizes = [2, 24], strides = [1, 1]} : vector<2x48xf32> to vector<2x24xf32>
    %639 = vector.extract_strided_slice %637 {offsets = [0, 24], sizes = [2, 24], strides = [1, 1]} : vector<2x48xf32> to vector<2x24xf32>
    %640 = vector.extract_strided_slice %627 {offsets = [0, 48], sizes = [2, 24], strides = [1, 1]} : vector<2x128xf32> to vector<2x24xf32>
    %641 = vector.extract_strided_slice %629 {offsets = [0, 48], sizes = [2, 24], strides = [1, 1]} : vector<2x128xf32> to vector<2x24xf32>
    %642 = arith.mulf %638, %641 : vector<2x24xf32>
    %643 = arith.addf %640, %642 : vector<2x24xf32>
    %644 = math.tanh %643 : vector<2x24xf32>
    %cst_208 = arith.constant 1.000000e+00 : f32
    %645 = vector.broadcast %cst_208 : f32 to vector<2x24xf32>
    %646 = arith.subf %645, %639 : vector<2x24xf32>
    %647 = arith.mulf %646, %644 : vector<2x24xf32>
    %648 = arith.mulf %639, %612 : vector<2x24xf32>
    %649 = arith.addf %647, %648 : vector<2x24xf32>
    %650 = arith.mulf %649, %391 : vector<2x24xf32>
    %651 = arith.addf %650, %393 : vector<2x24xf32>
    %cst_209 = arith.constant 0.000000e+00 : f32
    %652 = vector.broadcast %cst_209 : f32 to vector<2x24xf32>
    %653 = arith.maximumf %651, %652 : vector<2x24xf32>
    %654 = arith.addf %617, %653 : vector<2x24xf32>
    %c7_i32_210 = arith.constant 7 : i32
    %c7_i32_211 = arith.constant 7 : i32
    %655 = arith.subi %c7_i32_211, %c7_i32_210 : i32
    %656 = arith.index_cast %c7_i32_210 : i32 to index
    %c0_212 = arith.constant 0 : index
    %c0_213 = arith.constant 0 : index
    %657 = vector.load %arg14[%656, %c0_212, %c0_213] : memref<8x2x128xf32, #tpu.memory_space<vmem>>, vector<1x2x128xf32>
    %658 = vector.shape_cast %657 : vector<1x2x128xf32> to vector<2x128xf32>
    %659 = arith.index_cast %655 : i32 to index
    %c0_214 = arith.constant 0 : index
    %c0_215 = arith.constant 0 : index
    %660 = vector.load %arg14[%659, %c0_214, %c0_215] : memref<8x2x128xf32, #tpu.memory_space<vmem>>, vector<1x2x128xf32>
    %661 = vector.shape_cast %660 : vector<1x2x128xf32> to vector<2x128xf32>
    %662 = vector.shape_cast %18 : vector<1x128xi1> to vector<1x128xi1>
    %663 = vector.broadcast %662 : vector<1x128xi1> to vector<2x128xi1>
    %664 = arith.select %663, %658, %661 : vector<2x128xi1>, vector<2x128xf32>
    %cst_216 = arith.constant dense<0.000000e+00> : vector<2x128xf32>
    %665 = tpu.matmul %649, %384, %cst_216 {dimension_numbers = #tpu.dot_dimension_numbers<[1], [0], [0], [1], [0, 0, 1, 1], [], []>} : vector<2x24xf32>, vector<24x128xf32>, vector<2x128xf32> -> vector<2x128xf32>
    %666 = arith.addf %665, %389 : vector<2x128xf32>
    %667 = vector.extract_strided_slice %664 {offsets = [0, 0], sizes = [2, 48], strides = [1, 1]} : vector<2x128xf32> to vector<2x48xf32>
    %668 = vector.extract_strided_slice %666 {offsets = [0, 0], sizes = [2, 48], strides = [1, 1]} : vector<2x128xf32> to vector<2x48xf32>
    %669 = arith.addf %667, %668 : vector<2x48xf32>
    %670 = arith.negf %669 : vector<2x48xf32>
    %671 = math.exp %670 : vector<2x48xf32>
    %cst_217 = arith.constant 1.000000e+00 : f32
    %672 = vector.broadcast %cst_217 : f32 to vector<2x48xf32>
    %673 = arith.addf %672, %671 : vector<2x48xf32>
    %674 = arith.divf %672, %673 : vector<2x48xf32>
    %675 = vector.extract_strided_slice %674 {offsets = [0, 0], sizes = [2, 24], strides = [1, 1]} : vector<2x48xf32> to vector<2x24xf32>
    %676 = vector.extract_strided_slice %674 {offsets = [0, 24], sizes = [2, 24], strides = [1, 1]} : vector<2x48xf32> to vector<2x24xf32>
    %677 = vector.extract_strided_slice %664 {offsets = [0, 48], sizes = [2, 24], strides = [1, 1]} : vector<2x128xf32> to vector<2x24xf32>
    %678 = vector.extract_strided_slice %666 {offsets = [0, 48], sizes = [2, 24], strides = [1, 1]} : vector<2x128xf32> to vector<2x24xf32>
    %679 = arith.mulf %675, %678 : vector<2x24xf32>
    %680 = arith.addf %677, %679 : vector<2x24xf32>
    %681 = math.tanh %680 : vector<2x24xf32>
    %cst_218 = arith.constant 1.000000e+00 : f32
    %682 = vector.broadcast %cst_218 : f32 to vector<2x24xf32>
    %683 = arith.subf %682, %676 : vector<2x24xf32>
    %684 = arith.mulf %683, %681 : vector<2x24xf32>
    %685 = arith.mulf %676, %649 : vector<2x24xf32>
    %686 = arith.addf %684, %685 : vector<2x24xf32>
    %687 = arith.mulf %686, %391 : vector<2x24xf32>
    %688 = arith.addf %687, %393 : vector<2x24xf32>
    %cst_219 = arith.constant 0.000000e+00 : f32
    %689 = vector.broadcast %cst_219 : f32 to vector<2x24xf32>
    %690 = arith.maximumf %688, %689 : vector<2x24xf32>
    %691 = arith.addf %654, %690 : vector<2x24xf32>
    %c8_i32_220 = arith.constant 8 : i32
    %cst_221 = arith.constant 1.250000e-01 : f32
    %692 = vector.broadcast %cst_221 : f32 to vector<2x24xf32>
    %693 = arith.mulf %691, %692 : vector<2x24xf32>
    %c0_222 = arith.constant 0 : index
    %c0_223 = arith.constant 0 : index
    %694 = vector.load %arg11[%c0_222, %c0_223] : memref<24x9xf32, #tpu.memory_space<vmem>>, vector<24x9xf32>
    %cst_224 = arith.constant dense<0.000000e+00> : vector<2x9xf32>
    %695 = tpu.matmul %693, %694, %cst_224 {dimension_numbers = #tpu.dot_dimension_numbers<[1], [0], [0], [1], [0, 0, 1, 1], [], []>} : vector<2x24xf32>, vector<24x9xf32>, vector<2x9xf32> -> vector<2x9xf32>
    %c0_225 = arith.constant 0 : index
    %c0_226 = arith.constant 0 : index
    %696 = vector.load %arg12[%c0_225, %c0_226] : memref<1x9xf32, #tpu.memory_space<vmem>>, vector<1x9xf32>
    %697 = vector.broadcast %696 : vector<1x9xf32> to vector<2x9xf32>
    %698 = arith.addf %695, %697 : vector<2x9xf32>
    %c0_227 = arith.constant 0 : index
    %c0_228 = arith.constant 0 : index
    %699 = vector.load %arg13[%c0_227, %c0_228] : memref<2x9xf32, #tpu.memory_space<vmem>>, vector<2x9xf32>
    tpu.vector_store %arg13[%c0_227, %c0_228], %698 {strides = array<i32>} : memref<2x9xf32, #tpu.memory_space<vmem>>, vector<2x9xf32>,
    return
  }
}

</mosaic_0001>

<llo_original>
// kernel: avg_classifier_forward.1
$region0: #{avg_classifier_forward.1}
  #allocation0 [shape = 'u32[]', space=smem, size = 0x4, offset = 0x4, fixed_abs, tag = 'smem constant byte address 0x4 - core index']
  #allocation1 [shape = 'u32[144,128]{1,0:T(1,128)}', space=vmem, size = 0x12000, scoped, tag = 'internal scratch']
  #allocation2 [shape = 'f32[8,2,128]{2,1,0:T(2,128)}', space=vmem, size = 0x2000, scoped, tag = 'scratch operand']
  #allocation3 [shape = 'f32[8,2,12]{2,1,0:T(2,128)}', space=vmem, size = 0x2000, scoped, tag = 'scratch operand']
  #allocation4 [shape = 'f32[8,2,12]{2,1,0:T(2,128)}', space=vmem, size = 0x2000, scoped, tag = 'scratch operand']
  %s0 = inlined_call_operand.vmem [shape: f32[8,2,256], index: 0, kind: input, shape index: {}]
  %s1 = inlined_call_operand.vmem [shape: f32[256,128], index: 1, kind: input, shape index: {}]
  %s2 = inlined_call_operand.vmem [shape: f32[1,128], index: 2, kind: input, shape index: {}]
  %s3 = inlined_call_operand.vmem [shape: f32[24,128], index: 3, kind: input, shape index: {}]
  %s4 = inlined_call_operand.vmem [shape: f32[1,128], index: 4, kind: input, shape index: {}]
  %s5 = inlined_call_operand.vmem [shape: f32[24,128], index: 5, kind: input, shape index: {}]
  %s6 = inlined_call_operand.vmem [shape: f32[1,128], index: 6, kind: input, shape index: {}]
  %s7 = inlined_call_operand.vmem [shape: f32[24,128], index: 7, kind: input, shape index: {}]
  %s8 = inlined_call_operand.vmem [shape: f32[1,128], index: 8, kind: input, shape index: {}]
  %s9 = inlined_call_operand.vmem [shape: f32[1,24], index: 9, kind: input, shape index: {}]
  %s10 = inlined_call_operand.vmem [shape: f32[1,24], index: 10, kind: input, shape index: {}]
  %s11 = inlined_call_operand.vmem [shape: f32[24,9], index: 11, kind: input, shape index: {}]
  %s12 = inlined_call_operand.vmem [shape: f32[1,9], index: 12, kind: input, shape index: {}]
  %s13 = inlined_call_operand.hbm [shape: f32[2,9], index: 13, kind: output, shape index: {}]
  %s14 = sld [smem:[#allocation0]]
  $region62: #{avg_classifier_forward.1} parent=0
    _
  %s16 = ssub.s32 1, %s14
  %s17 = scalar_select 0, %s16, %s14
  $region1: #{avg_classifier_forward.1} parent=0
    #allocation5 [shape = 'u8[1024]{0}', space=vmem, size = 0x400, scoped, tag = 'output window, operand 0, single buffered']
    #allocation6 [shape = 's32[1]{0}', space=sflag, size = 0x4, scoped, tag = 'scoped memory for avg_classifier_forward.1']
    %18 = vsyncpa [#allocation6], 0
    // Predicated region
    $region2: #{avg_classifier_forward.1} parent=1 // pred_check
      _
    $region3: #{avg_classifier_forward.1} parent=1 // pred_check_branch
      %20 = sbr.rel (0) target = $region5
    $region4: #{avg_classifier_forward.1} parent=1 // pred_region
      _
    $region5: #{avg_classifier_forward.1} parent=1 // pred_fallthru
      _
    // Predicated region
    $region6: #{avg_classifier_forward.1} parent=1 // pred_check
      _
    $region7: #{avg_classifier_forward.1} parent=1 // pred_check_branch
      %22 = sbr.rel (0) target = $region9
    $region8: #{avg_classifier_forward.1} parent=1 // pred_region
      _
    $region9: #{avg_classifier_forward.1} parent=1 // pred_fallthru
      _
    // Predicated region
    $region10: #{avg_classifier_forward.1} parent=1 // pred_check
      _
    $region11: #{avg_classifier_forward.1} parent=1 // pred_check_branch
      %24 = sbr.rel (0) target = $region13
    $region12: #{avg_classifier_forward.1} parent=1 // pred_region
      _
    $region13: #{avg_classifier_forward.1} parent=1 // pred_fallthru
      _
    // Predicated region
    $region14: #{avg_classifier_forward.1} parent=1 // pred_check
      _
    $region15: #{avg_classifier_forward.1} parent=1 // pred_check_branch
      %26 = sbr.rel (0) target = $region17
    $region16: #{avg_classifier_forward.1} parent=1 // pred_region
      _
    $region17: #{avg_classifier_forward.1} parent=1 // pred_fallthru
      _
    // Predicated region
    $region18: #{avg_classifier_forward.1} parent=1 // pred_check
      _
    $region19: #{avg_classifier_forward.1} parent=1 // pred_check_branch
      %28 = sbr.rel (0) target = $region21
    $region20: #{avg_classifier_forward.1} parent=1 // pred_region
      _
    $region21: #{avg_classifier_forward.1} parent=1 // pred_fallthru
      _
    // Predicated region
    $region22: #{avg_classifier_forward.1} parent=1 // pred_check
      _
    $region23: #{avg_classifier_forward.1} parent=1 // pred_check_branch
      %30 = sbr.rel (0) target = $region25
    $region24: #{avg_classifier_forward.1} parent=1 // pred_region
      _
    $region25: #{avg_classifier_forward.1} parent=1 // pred_fallthru
      _
    // Predicated region
    $region26: #{avg_classifier_forward.1} parent=1 // pred_check
      _
    $region27: #{avg_classifier_forward.1} parent=1 // pred_check_branch
      %32 = sbr.rel (0) target = $region29
    $region28: #{avg_classifier_forward.1} parent=1 // pred_region
      _
    $region29: #{avg_classifier_forward.1} parent=1 // pred_fallthru
      _
    // Predicated region
    $region30: #{avg_classifier_forward.1} parent=1 // pred_check
      _
    $region31: #{avg_classifier_forward.1} parent=1 // pred_check_branch
      %34 = sbr.rel (0) target = $region33
    $region32: #{avg_classifier_forward.1} parent=1 // pred_region
      _
    $region33: #{avg_classifier_forward.1} parent=1 // pred_fallthru
      _
    // Predicated region
    $region34: #{avg_classifier_forward.1} parent=1 // pred_check
      _
    $region35: #{avg_classifier_forward.1} parent=1 // pred_check_branch
      %36 = sbr.rel (0) target = $region37
    $region36: #{avg_classifier_forward.1} parent=1 // pred_region
      _
    $region37: #{avg_classifier_forward.1} parent=1 // pred_fallthru
      _
    // Predicated region
    $region38: #{avg_classifier_forward.1} parent=1 // pred_check
      _
    $region39: #{avg_classifier_forward.1} parent=1 // pred_check_branch
      %38 = sbr.rel (0) target = $region41
    $region40: #{avg_classifier_forward.1} parent=1 // pred_region
      _
    $region41: #{avg_classifier_forward.1} parent=1 // pred_fallthru
      _
    // Predicated region
    $region42: #{avg_classifier_forward.1} parent=1 // pred_check
      _
    $region43: #{avg_classifier_forward.1} parent=1 // pred_check_branch
      %40 = sbr.rel (0) target = $region45
    $region44: #{avg_classifier_forward.1} parent=1 // pred_region
      _
    $region45: #{avg_classifier_forward.1} parent=1 // pred_fallthru
      _
    // Predicated region
    $region46: #{avg_classifier_forward.1} parent=1 // pred_check
      _
    $region47: #{avg_classifier_forward.1} parent=1 // pred_check_branch
      %42 = sbr.rel (0) target = $region49
    $region48: #{avg_classifier_forward.1} parent=1 // pred_region
      _
    $region49: #{avg_classifier_forward.1} parent=1 // pred_fallthru
      _
    // Predicated region
    $region50: #{avg_classifier_forward.1} parent=1 // pred_check
      _
    $region51: #{avg_classifier_forward.1} parent=1 // pred_check_branch
      %44 = sbr.rel (0) target = $region53
    $region52: #{avg_classifier_forward.1} parent=1 // pred_region
      _
    $region53: #{avg_classifier_forward.1} parent=1 // pred_fallthru
      _
    %v45 = vlaneseq
    %v46 = vand.u32 %v45, 127
    %vm47 = vcmp.lt.s32.totalorder %v46, 0
    %v48 = vsub.s32 0, %v46
    %v49 = vsel %vm47, %v48, %v46
    %v50 = vmul.u32.u64.compose %v49, 2863311531
    %v51 = vextract.low.u32 %v50
    %v52 = vextract.high.u32 %v50
    %v53 = vshrl.u32 %v52, 4
    %v54 = vmul.u32 %v53, 24
    %v55 = vsub.s32 %v49, %v54
    %v56 = vsub.s32 0, %v55
    %v57 = vsel %vm47, %v56, %v55
    %vm58 = vcmp.ne.s32.totalorder %v57, 0
    %vm59 = vcmp.lt.s32.totalorder %v57, 0
    %vm60 = vmand %vm59, %vm58
    %v61 = vadd.s32 %v57, 24
    %v62 = vsel %vm60, %v61, %v57
    %vm63 = vcmp.lt.s32.totalorder %v62, 12
    %v64 = vld [vmem:[%s0] sm:$0xf]
    %v65 = vld [vmem:[%s0 + $0x4] sm:$0xf]
    %v66 = vld [vmem:[%s0 + $0x8] sm:$0xf]
    %v67 = vld [vmem:[%s0 + $0xc] sm:$0xf]
    %v68 = vld [vmem:[%s0 + $0x10] sm:$0xf]
    %v69 = vld [vmem:[%s0 + $0x14] sm:$0xf]
    %v70 = vld [vmem:[%s0 + $0x18] sm:$0xf]
    %v71 = vld [vmem:[%s0 + $0x1c] sm:$0xf]
    %v72 = vld [vmem:[%s1] sm:$0xff]
    %v73 = vld [vmem:[%s1 + $0x8] sm:$0xff]
    %v74 = vld [vmem:[%s1 + $0x10] sm:$0xff]
    %v75 = vld [vmem:[%s1 + $0x18] sm:$0xff]
    %v76 = vld [vmem:[%s1 + $0x20] sm:$0xff]
    %v77 = vld [vmem:[%s1 + $0x28] sm:$0xff]
    %v78 = vld [vmem:[%s1 + $0x30] sm:$0xff]
    %v79 = vld [vmem:[%s1 + $0x38] sm:$0xff]
    %v80 = vld [vmem:[%s1 + $0x40] sm:$0xff]
    %v81 = vld [vmem:[%s1 + $0x48] sm:$0xff]
    %v82 = vld [vmem:[%s1 + $0x50] sm:$0xff]
    %v83 = vld [vmem:[%s1 + $0x58] sm:$0xff]
    %v84 = vld [vmem:[%s1 + $0x60] sm:$0xff]
    %v85 = vld [vmem:[%s1 + $0x68] sm:$0xff]
    %v86 = vld [vmem:[%s1 + $0x70] sm:$0xff]
    %v87 = vld [vmem:[%s1 + $0x78] sm:$0xff]
    %v88 = vld [vmem:[%s1 + $0x80] sm:$0xff]
    %v89 = vld [vmem:[%s1 + $0x88] sm:$0xff]
    %v90 = vld [vmem:[%s1 + $0x90] sm:$0xff]
    %v91 = vld [vmem:[%s1 + $0x98] sm:$0xff]
    %v92 = vld [vmem:[%s1 + $0xa0] sm:$0xff]
    %v93 = vld [vmem:[%s1 + $0xa8] sm:$0xff]
    %v94 = vld [vmem:[%s1 + $0xb0] sm:$0xff]
    %v95 = vld [vmem:[%s1 + $0xb8] sm:$0xff]
    %v96 = vld [vmem:[%s1 + $0xc0] sm:$0xff]
    %v97 = vld [vmem:[%s1 + $0xc8] sm:$0xff]
    %v98 = vld [vmem:[%s1 + $0xd0] sm:$0xff]
    %v99 = vld [vmem:[%s1 + $0xd8] sm:$0xff]
    %v100 = vld [vmem:[%s1 + $0xe0] sm:$0xff]
    %v101 = vld [vmem:[%s1 + $0xe8] sm:$0xff]
    %v102 = vld [vmem:[%s1 + $0xf0] sm:$0xff]
    %v103 = vld [vmem:[%s1 + $0xf8] sm:$0xff]
    %v104 = vld [vmem:[%s2] sm:$0x1]
    %v106 = vlaneseq
    %v107 = vshrl.u32 %v106, 7
    %v108 = vsub.s32 0, %v107
    %v109 = vrot.slane %v104, %v108
    %v119 = vcombine.low %v64, %v65
    %v120 = vcombine.low %v66, %v67
    %v122 = vunpack.c.l.s4 1983009808
    %v123 = vunpack.c.0.s8 %v122
    %v124 = vlaneseq
    %v125 = vshrl.u32 %v124, 7
    %v126 = vsub.s32 %v123, %v125
    %v127 = vrot.slane %v119, %v126
    %v129 = vunpack.c.l.s4 1983009808
    %v130 = vunpack.c.0.s8 %v129
    %v131 = vlaneseq
    %v132 = vshrl.u32 %v131, 7
    %v133 = vsub.s32 %v130, %v132
    %v134 = vrot.slane %v120, %v133
    %v135 = vcombine.low %v127, %v134
    %v136 = vcombine.high %v127, %v134
    %v137 = vcombine.low %v68, %v69
    %v138 = vcombine.low %v70, %v71
    %v140 = vunpack.c.l.s4 1983009808
    %v141 = vunpack.c.0.s8 %v140
    %v142 = vlaneseq
    %v143 = vshrl.u32 %v142, 7
    %v144 = vsub.s32 %v141, %v143
    %v145 = vrot.slane %v137, %v144
    %v147 = vunpack.c.l.s4 1983009808
    %v148 = vunpack.c.0.s8 %v147
    %v149 = vlaneseq
    %v150 = vshrl.u32 %v149, 7
    %v151 = vsub.s32 %v148, %v150
    %v152 = vrot.slane %v138, %v151
    %v153 = vcombine.low %v145, %v152
    %v154 = vcombine.high %v145, %v152
    %159 = vmatprep.subr.mxu0 0.0
    %160 = vmatpush1.msra.mxu0 %v87
    %161 = vmatprep.subr.mxu0 0.0
    %162 = vmatpush1.msra.mxu0 %v86
    %163 = vmatprep.subr.mxu0 0.0
    %164 = vmatpush1.msra.mxu0 %v85
    %165 = vmatprep.subr.mxu0 0.0
    %166 = vmatpush1.msra.mxu0 %v84
    %167 = vmatprep.subr.mxu0 0.0
    %168 = vmatpush1.msra.mxu0 %v83
    %169 = vmatprep.subr.mxu0 0.0
    %170 = vmatpush1.msra.mxu0 %v82
    %171 = vmatprep.subr.mxu0 0.0
    %172 = vmatpush1.msra.mxu0 %v81
    %173 = vmatprep.subr.mxu0 0.0
    %174 = vmatpush1.msra.mxu0 %v80
    %175 = vmatprep.subr.mxu0 0.0
    %176 = vmatpush1.msra.mxu0 %v79
    %177 = vmatprep.subr.mxu0 0.0
    %178 = vmatpush1.msra.mxu0 %v78
    %179 = vmatprep.subr.mxu0 0.0
    %180 = vmatpush1.msra.mxu0 %v77
    %181 = vmatprep.subr.mxu0 0.0
    %182 = vmatpush1.msra.mxu0 %v76
    %183 = vmatprep.subr.mxu0 0.0
    %184 = vmatpush1.msra.mxu0 %v75
    %185 = vmatprep.subr.mxu0 0.0
    %186 = vmatpush1.msra.mxu0 %v74
    %187 = vmatprep.subr.mxu0 0.0
    %188 = vmatpush1.msra.mxu0 %v73
    %189 = vmatprep.subr.mxu0 0.0
    %190 = vmatpush1.msra.mxu0 %v72
    %191 = vmatprep.subr.mxu0 0.0
    %192 = vmatpush2.msra.mxu0 %v103
    %193 = vmatprep.subr.mxu0 0.0
    %194 = vmatpush2.msra.mxu0 %v102
    %195 = vmatprep.subr.mxu0 0.0
    %196 = vmatpush2.msra.mxu0 %v101
    %197 = vmatprep.subr.mxu0 0.0
    %198 = vmatpush2.msra.mxu0 %v100
    %199 = vmatprep.subr.mxu0 0.0
    %200 = vmatpush2.msra.mxu0 %v99
    %201 = vmatprep.subr.mxu0 0.0
    %202 = vmatpush2.msra.mxu0 %v98
    %203 = vmatprep.subr.mxu0 0.0
    %204 = vmatpush2.msra.mxu0 %v97
    %205 = vmatprep.subr.mxu0 0.0
    %206 = vmatpush2.msra.mxu0 %v96
    %207 = vmatprep.subr.mxu0 0.0
    %208 = vmatpush2.msra.mxu0 %v95
    %209 = vmatprep.subr.mxu0 0.0
    %210 = vmatpush2.msra.mxu0 %v94
    %211 = vmatprep.subr.mxu0 0.0
    %212 = vmatpush2.msra.mxu0 %v93
    %213 = vmatprep.subr.mxu0 0.0
    %214 = vmatpush2.msra.mxu0 %v92
    %215 = vmatprep.subr.mxu0 0.0
    %216 = vmatpush2.msra.mxu0 %v91
    %217 = vmatprep.subr.mxu0 0.0
    %218 = vmatpush2.msra.mxu0 %v90
    %219 = vmatprep.subr.mxu0 0.0
    %220 = vmatpush2.msra.mxu0 %v89
    %221 = vmatprep.subr.mxu0 0.0
    %222 = vmatpush2.msra.mxu0 %v88
    %223 = vmatprep.mubr.f32.mxu0 %v136
    %224 = vmatmul.mubr.f32.gmra.mxu0 %v135
    %v225 = vpop.f32.mrf.mxu0
    %v226 = vadd.f32 %v109, %v225
    %v227 = vpop.f32.mrf.mxu0
    %228 = vmatprep.mubr.f32.mxu0 %v154
    %229 = vmatmul.mubr.f32.gmra.mxu0 %v153
    %v230 = vpop.f32.mrf.mxu0
    %v231 = vadd.f32 %v109, %v230
    %v232 = vpop.f32.mrf.mxu0
    %233 = vdwg.mxu0
    %v236 = vcombine.high %v226, %v226
    %v238 = vunpack.c.l.s4 1983009808
    %v239 = vunpack.c.0.s8 %v238
    %v240 = vlaneseq
    %v241 = vshrl.u32 %v240, 7
    %v242 = vsub.s32 %v239, %v241
    %v243 = vrot.slane %v226, %v242
    %v245 = vunpack.c.l.s4 1983009808
    %v246 = vunpack.c.0.s8 %v245
    %v247 = vlaneseq
    %v248 = vshrl.u32 %v247, 7
    %v249 = vsub.s32 %v246, %v248
    %v250 = vrot.slane %v236, %v249
    %v251 = vcombine.high %v243, %v243
    %v252 = vcombine.high %v250, %v250
    %v253 = vcombine.high %v231, %v231
    %v255 = vunpack.c.l.s4 1983009808
    %v256 = vunpack.c.0.s8 %v255
    %v257 = vlaneseq
    %v258 = vshrl.u32 %v257, 7
    %v259 = vsub.s32 %v256, %v258
    %v260 = vrot.slane %v231, %v259
    %v262 = vunpack.c.l.s4 1983009808
    %v263 = vunpack.c.0.s8 %v262
    %v264 = vlaneseq
    %v265 = vshrl.u32 %v264, 7
    %v266 = vsub.s32 %v263, %v265
    %v267 = vrot.slane %v253, %v266
    %v268 = vcombine.high %v260, %v260
    %v269 = vcombine.high %v267, %v267
    %278 = vst [vmem:[#allocation2] sm:$0x3] %v243
    %279 = vst [vmem:[#allocation2 + $0x2] sm:$0x3] %v251
    %280 = vst [vmem:[#allocation2 + $0x4] sm:$0x3] %v250
    %281 = vst [vmem:[#allocation2 + $0x6] sm:$0x3] %v252
    %282 = vst [vmem:[#allocation2 + $0x8] sm:$0x3] %v260
    %283 = vst [vmem:[#allocation2 + $0xa] sm:$0x3] %v268
    %284 = vst [vmem:[#allocation2 + $0xc] sm:$0x3] %v267
    %285 = vst [vmem:[#allocation2 + $0xe] sm:$0x3] %v269
    %v286 = vld [vmem:[%s5] sm:$0xff]
    %v287 = vld [vmem:[%s5 + $0x8] sm:$0xff]
    %v288 = vld [vmem:[%s5 + $0x10] sm:$0xff]
    %v289 = vld [vmem:[%s6] sm:$0x1]
    %v291 = vlaneseq
    %v292 = vshrl.u32 %v291, 7
    %v293 = vsub.s32 0, %v292
    %v294 = vrot.slane %v289, %v293
    %v296 = vld [vmem:[#allocation2] sm:$0x3]
    %s297 = scalar_lea.vmem [#allocation2], 14
    %v298 = vld [vmem:[%s297] sm:$0x3]
    %v299 = vsel %vm63, 1, 0
    %vm300 = vcmp.eq.s32.totalorder %v299, 1
    %v301 = vsel %vm300, %v296, %v298
    %vm302 = vcmask 195584
    %v304 = vsel %vm302, 0.0, 0
    %306 = vmatprep.subr.mxu0 0.0
    %307 = vmatpush1.msra.mxu0 0.0
    %308 = vmatprep.subr.mxu0 0.0
    %309 = vmatpush1.msra.mxu0 0.0
    %310 = vmatprep.subr.mxu0 0.0
    %311 = vmatpush1.msra.mxu0 0.0
    %312 = vmatprep.subr.mxu0 0.0
    %313 = vmatpush1.msra.mxu0 0.0
    %314 = vmatprep.subr.mxu0 0.0
    %315 = vmatpush1.msra.mxu0 0.0
    %316 = vmatprep.subr.mxu0 0.0
    %317 = vmatpush1.msra.mxu0 0.0
    %318 = vmatprep.subr.mxu0 0.0
    %319 = vmatpush1.msra.mxu0 0.0
    %320 = vmatprep.subr.mxu0 0.0
    %321 = vmatpush1.msra.mxu0 0.0
    %322 = vmatprep.subr.mxu0 0.0
    %323 = vmatpush1.msra.mxu0 0.0
    %324 = vmatprep.subr.mxu0 0.0
    %325 = vmatpush1.msra.mxu0 0.0
    %326 = vmatprep.subr.mxu0 0.0
    %327 = vmatpush1.msra.mxu0 0.0
    %328 = vmatprep.subr.mxu0 0.0
    %329 = vmatpush1.msra.mxu0 0.0
    %330 = vmatprep.subr.mxu0 0.0
    %331 = vmatpush1.msra.mxu0 0.0
    %332 = vmatprep.subr.mxu0 0.0
    %333 = vmatpush1.msra.mxu0 %v288
    %334 = vmatprep.subr.mxu0 0.0
    %335 = vmatpush1.msra.mxu0 %v287
    %336 = vmatprep.subr.mxu0 0.0
    %337 = vmatpush1.msra.mxu0 %v286
    %338 = vmatprep.subr.mxu0 0.0
    %339 = vmatpush2.msra.mxu0 0.0
    %340 = vmatprep.subr.mxu0 0.0
    %341 = vmatpush2.msra.mxu0 0.0
    %342 = vmatprep.subr.mxu0 0.0
    %343 = vmatpush2.msra.mxu0 0.0
    %344 = vmatprep.subr.mxu0 0.0
    %345 = vmatpush2.msra.mxu0 0.0
    %346 = vmatprep.subr.mxu0 0.0
    %347 = vmatpush2.msra.mxu0 0.0
    %348 = vmatprep.subr.mxu0 0.0
    %349 = vmatpush2.msra.mxu0 0.0
    %350 = vmatprep.subr.mxu0 0.0
    %351 = vmatpush2.msra.mxu0 0.0
    %352 = vmatprep.subr.mxu0 0.0
    %353 = vmatpush2.msra.mxu0 0.0
    %354 = vmatprep.subr.mxu0 0.0
    %355 = vmatpush2.msra.mxu0 0.0
    %356 = vmatprep.subr.mxu0 0.0
    %357 = vmatpush2.msra.mxu0 0.0
    %358 = vmatprep.subr.mxu0 0.0
    %359 = vmatpush2.msra.mxu0 0.0
    %360 = vmatprep.subr.mxu0 0.0
    %361 = vmatpush2.msra.mxu0 0.0
    %362 = vmatprep.subr.mxu0 0.0
    %363 = vmatpush2.msra.mxu0 0.0
    %364 = vmatprep.subr.mxu0 0.0
    %365 = vmatpush2.msra.mxu0 0.0
    %366 = vmatprep.subr.mxu0 0.0
    %367 = vmatpush2.msra.mxu0 0.0
    %368 = vmatprep.subr.mxu0 0.0
    %369 = vmatpush2.msra.mxu0 0.0
    %370 = vmatprep.mubr.f32.mxu0 0.0
    %371 = vmatmul.mubr.f32.gmra.mxu0 %v304
    %v372 = vpop.f32.mrf.mxu0
    %v373 = vadd.f32 %v294, %v372
    %v374 = vpop.f32.mrf.mxu0
    %375 = vdwg.mxu0
    %v376 = vadd.f32 %v301, %v373
    %v377 = vxor.u32 %v376, 2147483648
    %v378 = vmul.f32 %v377, 1.442695
    %v379 = vpow.pop %v378
    %v380 = vadd.f32 %v379, 1.0
    %v381 = vrcp.pop %v380
    %v382 = vmul.f32 1.0, %v381
    %384 = vrot.lane.b32.xlu0 %v373, 80
    %v385 = vpop.permute.xlu0 %384
    %v387 = vmul.f32 %v382, %v385
    %389 = vrot.lane.b32.xlu0 %v387, 48
    %v390 = vpop.permute.xlu0 %389
    %v392 = vadd.f32 %v301, %v390
    %v393 = vtanh.pop %v392
    %v394 = vsub.f32 1.0, %v382
    %396 = vrot.lane.b32.xlu0 %v393, 104
    %v397 = vpop.permute.xlu0 %396
    %v399 = vmul.f32 %v394, %v397
    %v400 = vmul.f32 %v382, 0.0
    %v401 = vadd.f32 %v399, %v400
    %403 = vrot.lane.b32.xlu0 %v401, 104
    %v404 = vpop.permute.xlu0 %403
    %vm406 = vcmask 91136
    %407 = vst.msk [vmem:[#allocation3] sm:$0x3] %vm406, %v404
    %408 = vrot.lane.b32.xlu0 %v401, 92
    %v409 = vpop.permute.xlu0 %408
    %s411 = scalar_lea.vmem [#allocation4], 14
    %412 = vst.msk [vmem:[%s411] sm:$0x3] %vm406, %v409
    %s413 = scalar_lea.vmem [#allocation2], 2
    %v414 = vld [vmem:[%s413] sm:$0x3]
    %s415 = scalar_lea.vmem [#allocation2], 12
    %v416 = vld [vmem:[%s415] sm:$0x3]
    %v417 = vsel %vm300, %v414, %v416
    %v418 = vsel %vm302, %v404, 0
    %420 = vmatprep.subr.mxu0 0.0
    %421 = vmatpush1.msra.mxu0 0.0
    %422 = vmatprep.subr.mxu0 0.0
    %423 = vmatpush1.msra.mxu0 0.0
    %424 = vmatprep.subr.mxu0 0.0
    %425 = vmatpush1.msra.mxu0 0.0
    %426 = vmatprep.subr.mxu0 0.0
    %427 = vmatpush1.msra.mxu0 0.0
    %428 = vmatprep.subr.mxu0 0.0
    %429 = vmatpush1.msra.mxu0 0.0
    %430 = vmatprep.subr.mxu0 0.0
    %431 = vmatpush1.msra.mxu0 0.0
    %432 = vmatprep.subr.mxu0 0.0
    %433 = vmatpush1.msra.mxu0 0.0
    %434 = vmatprep.subr.mxu0 0.0
    %435 = vmatpush1.msra.mxu0 0.0
    %436 = vmatprep.subr.mxu0 0.0
    %437 = vmatpush1.msra.mxu0 0.0
    %438 = vmatprep.subr.mxu0 0.0
    %439 = vmatpush1.msra.mxu0 0.0
    %440 = vmatprep.subr.mxu0 0.0
    %441 = vmatpush1.msra.mxu0 0.0
    %442 = vmatprep.subr.mxu0 0.0
    %443 = vmatpush1.msra.mxu0 0.0
    %444 = vmatprep.subr.mxu0 0.0
    %445 = vmatpush1.msra.mxu0 0.0
    %446 = vmatprep.subr.mxu0 0.0
    %447 = vmatpush1.msra.mxu0 %v288
    %448 = vmatprep.subr.mxu0 0.0
    %449 = vmatpush1.msra.mxu0 %v287
    %450 = vmatprep.subr.mxu0 0.0
    %451 = vmatpush1.msra.mxu0 %v286
    %452 = vmatprep.subr.mxu0 0.0
    %453 = vmatpush2.msra.mxu0 0.0
    %454 = vmatprep.subr.mxu0 0.0
    %455 = vmatpush2.msra.mxu0 0.0
    %456 = vmatprep.subr.mxu0 0.0
    %457 = vmatpush2.msra.mxu0 0.0
    %458 = vmatprep.subr.mxu0 0.0
    %459 = vmatpush2.msra.mxu0 0.0
    %460 = vmatprep.subr.mxu0 0.0
    %461 = vmatpush2.msra.mxu0 0.0
    %462 = vmatprep.subr.mxu0 0.0
    %463 = vmatpush2.msra.mxu0 0.0
    %464 = vmatprep.subr.mxu0 0.0
    %465 = vmatpush2.msra.mxu0 0.0
    %466 = vmatprep.subr.mxu0 0.0
    %467 = vmatpush2.msra.mxu0 0.0
    %468 = vmatprep.subr.mxu0 0.0
    %469 = vmatpush2.msra.mxu0 0.0
    %470 = vmatprep.subr.mxu0 0.0
    %471 = vmatpush2.msra.mxu0 0.0
    %472 = vmatprep.subr.mxu0 0.0
    %473 = vmatpush2.msra.mxu0 0.0
    %474 = vmatprep.subr.mxu0 0.0
    %475 = vmatpush2.msra.mxu0 0.0
    %476 = vmatprep.subr.mxu0 0.0
    %477 = vmatpush2.msra.mxu0 0.0
    %478 = vmatprep.subr.mxu0 0.0
    %479 = vmatpush2.msra.mxu0 0.0
    %480 = vmatprep.subr.mxu0 0.0
    %481 = vmatpush2.msra.mxu0 0.0
    %482 = vmatprep.subr.mxu0 0.0
    %483 = vmatpush2.msra.mxu0 0.0
    %484 = vmatprep.mubr.f32.mxu0 0.0
    %485 = vmatmul.mubr.f32.gmra.mxu0 %v418
    %v486 = vpop.f32.mrf.mxu0
    %v487 = vadd.f32 %v294, %v486
    %v488 = vpop.f32.mrf.mxu0
    %489 = vdwg.mxu0
    %v490 = vadd.f32 %v417, %v487
    %v491 = vxor.u32 %v490, 2147483648
    %v492 = vmul.f32 %v491, 1.442695
    %v493 = vpow.pop %v492
    %v494 = vadd.f32 %v493, 1.0
    %v495 = vrcp.pop %v494
    %v496 = vmul.f32 1.0, %v495
    %498 = vrot.lane.b32.xlu0 %v487, 80
    %v499 = vpop.permute.xlu0 %498
    %v501 = vmul.f32 %v496, %v499
    %503 = vrot.lane.b32.xlu0 %v501, 48
    %v504 = vpop.permute.xlu0 %503
    %v506 = vadd.f32 %v417, %v504
    %v507 = vtanh.pop %v506
    %v508 = vsub.f32 1.0, %v496
    %510 = vrot.lane.b32.xlu0 %v507, 104
    %v511 = vpop.permute.xlu0 %510
    %v513 = vmul.f32 %v508, %v511
    %v514 = vmul.f32 %v496, %v401
    %v515 = vadd.f32 %v513, %v514
    %517 = vrot.lane.b32.xlu0 %v515, 104
    %v518 = vpop.permute.xlu0 %517
    %s520 = scalar_lea.vmem [#allocation3], 2
    %521 = vst.msk [vmem:[%s520] sm:$0x3] %vm406, %v518
    %522 = vrot.lane.b32.xlu0 %v515, 92
    %v523 = vpop.permute.xlu0 %522
    %s525 = scalar_lea.vmem [#allocation4], 12
    %526 = vst.msk [vmem:[%s525] sm:$0x3] %vm406, %v523
    %s527 = scalar_lea.vmem [#allocation2], 4
    %v528 = vld [vmem:[%s527] sm:$0x3]
    %s529 = scalar_lea.vmem [#allocation2], 10
    %v530 = vld [vmem:[%s529] sm:$0x3]
    %v531 = vsel %vm300, %v528, %v530
    %v532 = vsel %vm302, %v518, 0
    %534 = vmatprep.subr.mxu0 0.0
    %535 = vmatpush1.msra.mxu0 0.0
    %536 = vmatprep.subr.mxu0 0.0
    %537 = vmatpush1.msra.mxu0 0.0
    %538 = vmatprep.subr.mxu0 0.0
    %539 = vmatpush1.msra.mxu0 0.0
    %540 = vmatprep.subr.mxu0 0.0
    %541 = vmatpush1.msra.mxu0 0.0
    %542 = vmatprep.subr.mxu0 0.0
    %543 = vmatpush1.msra.mxu0 0.0
    %544 = vmatprep.subr.mxu0 0.0
    %545 = vmatpush1.msra.mxu0 0.0
    %546 = vmatprep.subr.mxu0 0.0
    %547 = vmatpush1.msra.mxu0 0.0
    %548 = vmatprep.subr.mxu0 0.0
    %549 = vmatpush1.msra.mxu0 0.0
    %550 = vmatprep.subr.mxu0 0.0
    %551 = vmatpush1.msra.mxu0 0.0
    %552 = vmatprep.subr.mxu0 0.0
    %553 = vmatpush1.msra.mxu0 0.0
    %554 = vmatprep.subr.mxu0 0.0
    %555 = vmatpush1.msra.mxu0 0.0
    %556 = vmatprep.subr.mxu0 0.0
    %557 = vmatpush1.msra.mxu0 0.0
    %558 = vmatprep.subr.mxu0 0.0
    %559 = vmatpush1.msra.mxu0 0.0
    %560 = vmatprep.subr.mxu0 0.0
    %561 = vmatpush1.msra.mxu0 %v288
    %562 = vmatprep.subr.mxu0 0.0
    %563 = vmatpush1.msra.mxu0 %v287
    %564 = vmatprep.subr.mxu0 0.0
    %565 = vmatpush1.msra.mxu0 %v286
    %566 = vmatprep.subr.mxu0 0.0
    %567 = vmatpush2.msra.mxu0 0.0
    %568 = vmatprep.subr.mxu0 0.0
    %569 = vmatpush2.msra.mxu0 0.0
    %570 = vmatprep.subr.mxu0 0.0
    %571 = vmatpush2.msra.mxu0 0.0
    %572 = vmatprep.subr.mxu0 0.0
    %573 = vmatpush2.msra.mxu0 0.0
    %574 = vmatprep.subr.mxu0 0.0
    %575 = vmatpush2.msra.mxu0 0.0
    %576 = vmatprep.subr.mxu0 0.0
    %577 = vmatpush2.msra.mxu0 0.0
    %578 = vmatprep.subr.mxu0 0.0
    %579 = vmatpush2.msra.mxu0 0.0
    %580 = vmatprep.subr.mxu0 0.0
    %581 = vmatpush2.msra.mxu0 0.0
    %582 = vmatprep.subr.mxu0 0.0
    %583 = vmatpush2.msra.mxu0 0.0
    %584 = vmatprep.subr.mxu0 0.0
    %585 = vmatpush2.msra.mxu0 0.0
    %586 = vmatprep.subr.mxu0 0.0
    %587 = vmatpush2.msra.mxu0 0.0
    %588 = vmatprep.subr.mxu0 0.0
    %589 = vmatpush2.msra.mxu0 0.0
    %590 = vmatprep.subr.mxu0 0.0
    %591 = vmatpush2.msra.mxu0 0.0
    %592 = vmatprep.subr.mxu0 0.0
    %593 = vmatpush2.msra.mxu0 0.0
    %594 = vmatprep.subr.mxu0 0.0
    %595 = vmatpush2.msra.mxu0 0.0
    %596 = vmatprep.subr.mxu0 0.0
    %597 = vmatpush2.msra.mxu0 0.0
    %598 = vmatprep.mubr.f32.mxu0 0.0
    %599 = vmatmul.mubr.f32.gmra.mxu0 %v532
    %v600 = vpop.f32.mrf.mxu0
    %v601 = vadd.f32 %v294, %v600
    %v602 = vpop.f32.mrf.mxu0
    %603 = vdwg.mxu0
    %v604 = vadd.f32 %v531, %v601
    %v605 = vxor.u32 %v604, 2147483648
    %v606 = vmul.f32 %v605, 1.442695
    %v607 = vpow.pop %v606
    %v608 = vadd.f32 %v607, 1.0
    %v609 = vrcp.pop %v608
    %v610 = vmul.f32 1.0, %v609
    %612 = vrot.lane.b32.xlu0 %v601, 80
    %v613 = vpop.permute.xlu0 %612
    %v615 = vmul.f32 %v610, %v613
    %617 = vrot.lane.b32.xlu0 %v615, 48
    %v618 = vpop.permute.xlu0 %617
    %v620 = vadd.f32 %v531, %v618
    %v621 = vtanh.pop %v620
    %v622 = vsub.f32 1.0, %v610
    %624 = vrot.lane.b32.xlu0 %v621, 104
    %v625 = vpop.permute.xlu0 %624
    %v627 = vmul.f32 %v622, %v625
    %v628 = vmul.f32 %v610, %v515
    %v629 = vadd.f32 %v627, %v628
    %631 = vrot.lane.b32.xlu0 %v629, 104
    %v632 = vpop.permute.xlu0 %631
    %s634 = scalar_lea.vmem [#allocation3], 4
    %635 = vst.msk [vmem:[%s634] sm:$0x3] %vm406, %v632
    %636 = vrot.lane.b32.xlu0 %v629, 92
    %v637 = vpop.permute.xlu0 %636
    %s639 = scalar_lea.vmem [#allocation4], 10
    %640 = vst.msk [vmem:[%s639] sm:$0x3] %vm406, %v637
    %s641 = scalar_lea.vmem [#allocation2], 6
    %v642 = vld [vmem:[%s641] sm:$0x3]
    %s643 = scalar_lea.vmem [#allocation2], 8
    %v644 = vld [vmem:[%s643] sm:$0x3]
    %v645 = vsel %vm300, %v642, %v644
    %v646 = vsel %vm302, %v632, 0
    %648 = vmatprep.subr.mxu0 0.0
    %649 = vmatpush1.msra.mxu0 0.0
    %650 = vmatprep.subr.mxu0 0.0
    %651 = vmatpush1.msra.mxu0 0.0
    %652 = vmatprep.subr.mxu0 0.0
    %653 = vmatpush1.msra.mxu0 0.0
    %654 = vmatprep.subr.mxu0 0.0
    %655 = vmatpush1.msra.mxu0 0.0
    %656 = vmatprep.subr.mxu0 0.0
    %657 = vmatpush1.msra.mxu0 0.0
    %658 = vmatprep.subr.mxu0 0.0
    %659 = vmatpush1.msra.mxu0 0.0
    %660 = vmatprep.subr.mxu0 0.0
    %661 = vmatpush1.msra.mxu0 0.0
    %662 = vmatprep.subr.mxu0 0.0
    %663 = vmatpush1.msra.mxu0 0.0
    %664 = vmatprep.subr.mxu0 0.0
    %665 = vmatpush1.msra.mxu0 0.0
    %666 = vmatprep.subr.mxu0 0.0
    %667 = vmatpush1.msra.mxu0 0.0
    %668 = vmatprep.subr.mxu0 0.0
    %669 = vmatpush1.msra.mxu0 0.0
    %670 = vmatprep.subr.mxu0 0.0
    %671 = vmatpush1.msra.mxu0 0.0
    %672 = vmatprep.subr.mxu0 0.0
    %673 = vmatpush1.msra.mxu0 0.0
    %674 = vmatprep.subr.mxu0 0.0
    %675 = vmatpush1.msra.mxu0 %v288
    %676 = vmatprep.subr.mxu0 0.0
    %677 = vmatpush1.msra.mxu0 %v287
    %678 = vmatprep.subr.mxu0 0.0
    %679 = vmatpush1.msra.mxu0 %v286
    %680 = vmatprep.subr.mxu0 0.0
    %681 = vmatpush2.msra.mxu0 0.0
    %682 = vmatprep.subr.mxu0 0.0
    %683 = vmatpush2.msra.mxu0 0.0
    %684 = vmatprep.subr.mxu0 0.0
    %685 = vmatpush2.msra.mxu0 0.0
    %686 = vmatprep.subr.mxu0 0.0
    %687 = vmatpush2.msra.mxu0 0.0
    %688 = vmatprep.subr.mxu0 0.0
    %689 = vmatpush2.msra.mxu0 0.0
    %690 = vmatprep.subr.mxu0 0.0
    %691 = vmatpush2.msra.mxu0 0.0
    %692 = vmatprep.subr.mxu0 0.0
    %693 = vmatpush2.msra.mxu0 0.0
    %694 = vmatprep.subr.mxu0 0.0
    %695 = vmatpush2.msra.mxu0 0.0
    %696 = vmatprep.subr.mxu0 0.0
    %697 = vmatpush2.msra.mxu0 0.0
    %698 = vmatprep.subr.mxu0 0.0
    %699 = vmatpush2.msra.mxu0 0.0
    %700 = vmatprep.subr.mxu0 0.0
    %701 = vmatpush2.msra.mxu0 0.0
    %702 = vmatprep.subr.mxu0 0.0
    %703 = vmatpush2.msra.mxu0 0.0
    %704 = vmatprep.subr.mxu0 0.0
    %705 = vmatpush2.msra.mxu0 0.0
    %706 = vmatprep.subr.mxu0 0.0
    %707 = vmatpush2.msra.mxu0 0.0
    %708 = vmatprep.subr.mxu0 0.0
    %709 = vmatpush2.msra.mxu0 0.0
    %710 = vmatprep.subr.mxu0 0.0
    %711 = vmatpush2.msra.mxu0 0.0
    %712 = vmatprep.mubr.f32.mxu0 0.0
    %713 = vmatmul.mubr.f32.gmra.mxu0 %v646
    %v714 = vpop.f32.mrf.mxu0
    %v715 = vadd.f32 %v294, %v714
    %v716 = vpop.f32.mrf.mxu0
    %717 = vdwg.mxu0
    %v718 = vadd.f32 %v645, %v715
    %v719 = vxor.u32 %v718, 2147483648
    %v720 = vmul.f32 %v719, 1.442695
    %v721 = vpow.pop %v720
    %v722 = vadd.f32 %v721, 1.0
    %v723 = vrcp.pop %v722
    %v724 = vmul.f32 1.0, %v723
    %726 = vrot.lane.b32.xlu0 %v715, 80
    %v727 = vpop.permute.xlu0 %726
    %v729 = vmul.f32 %v724, %v727
    %731 = vrot.lane.b32.xlu0 %v729, 48
    %v732 = vpop.permute.xlu0 %731
    %v734 = vadd.f32 %v645, %v732
    %v735 = vtanh.pop %v734
    %v736 = vsub.f32 1.0, %v724
    %738 = vrot.lane.b32.xlu0 %v735, 104
    %v739 = vpop.permute.xlu0 %738
    %v741 = vmul.f32 %v736, %v739
    %v742 = vmul.f32 %v724, %v629
    %v743 = vadd.f32 %v741, %v742
    %745 = vrot.lane.b32.xlu0 %v743, 104
    %v746 = vpop.permute.xlu0 %745
    %s748 = scalar_lea.vmem [#allocation3], 6
    %749 = vst.msk [vmem:[%s748] sm:$0x3] %vm406, %v746
    %750 = vrot.lane.b32.xlu0 %v743, 92
    %v751 = vpop.permute.xlu0 %750
    %s753 = scalar_lea.vmem [#allocation4], 8
    %754 = vst.msk [vmem:[%s753] sm:$0x3] %vm406, %v751
    %v755 = vld [vmem:[%s643] sm:$0x3]
    %v756 = vld [vmem:[%s641] sm:$0x3]
    %v757 = vsel %vm300, %v755, %v756
    %v758 = vsel %vm302, %v746, 0
    %760 = vmatprep.subr.mxu0 0.0
    %761 = vmatpush1.msra.mxu0 0.0
    %762 = vmatprep.subr.mxu0 0.0
    %763 = vmatpush1.msra.mxu0 0.0
    %764 = vmatprep.subr.mxu0 0.0
    %765 = vmatpush1.msra.mxu0 0.0
    %766 = vmatprep.subr.mxu0 0.0
    %767 = vmatpush1.msra.mxu0 0.0
    %768 = vmatprep.subr.mxu0 0.0
    %769 = vmatpush1.msra.mxu0 0.0
    %770 = vmatprep.subr.mxu0 0.0
    %771 = vmatpush1.msra.mxu0 0.0
    %772 = vmatprep.subr.mxu0 0.0
    %773 = vmatpush1.msra.mxu0 0.0
    %774 = vmatprep.subr.mxu0 0.0
    %775 = vmatpush1.msra.mxu0 0.0
    %776 = vmatprep.subr.mxu0 0.0
    %777 = vmatpush1.msra.mxu0 0.0
    %778 = vmatprep.subr.mxu0 0.0
    %779 = vmatpush1.msra.mxu0 0.0
    %780 = vmatprep.subr.mxu0 0.0
    %781 = vmatpush1.msra.mxu0 0.0
    %782 = vmatprep.subr.mxu0 0.0
    %783 = vmatpush1.msra.mxu0 0.0
    %784 = vmatprep.subr.mxu0 0.0
    %785 = vmatpush1.msra.mxu0 0.0
    %786 = vmatprep.subr.mxu0 0.0
    %787 = vmatpush1.msra.mxu0 %v288
    %788 = vmatprep.subr.mxu0 0.0
    %789 = vmatpush1.msra.mxu0 %v287
    %790 = vmatprep.subr.mxu0 0.0
    %791 = vmatpush1.msra.mxu0 %v286
    %792 = vmatprep.subr.mxu0 0.0
    %793 = vmatpush2.msra.mxu0 0.0
    %794 = vmatprep.subr.mxu0 0.0
    %795 = vmatpush2.msra.mxu0 0.0
    %796 = vmatprep.subr.mxu0 0.0
    %797 = vmatpush2.msra.mxu0 0.0
    %798 = vmatprep.subr.mxu0 0.0
    %799 = vmatpush2.msra.mxu0 0.0
    %800 = vmatprep.subr.mxu0 0.0
    %801 = vmatpush2.msra.mxu0 0.0
    %802 = vmatprep.subr.mxu0 0.0
    %803 = vmatpush2.msra.mxu0 0.0
    %804 = vmatprep.subr.mxu0 0.0
    %805 = vmatpush2.msra.mxu0 0.0
    %806 = vmatprep.subr.mxu0 0.0
    %807 = vmatpush2.msra.mxu0 0.0
    %808 = vmatprep.subr.mxu0 0.0
    %809 = vmatpush2.msra.mxu0 0.0
    %810 = vmatprep.subr.mxu0 0.0
    %811 = vmatpush2.msra.mxu0 0.0
    %812 = vmatprep.subr.mxu0 0.0
    %813 = vmatpush2.msra.mxu0 0.0
    %814 = vmatprep.subr.mxu0 0.0
    %815 = vmatpush2.msra.mxu0 0.0
    %816 = vmatprep.subr.mxu0 0.0
    %817 = vmatpush2.msra.mxu0 0.0
    %818 = vmatprep.subr.mxu0 0.0
    %819 = vmatpush2.msra.mxu0 0.0
    %820 = vmatprep.subr.mxu0 0.0
    %821 = vmatpush2.msra.mxu0 0.0
    %822 = vmatprep.subr.mxu0 0.0
    %823 = vmatpush2.msra.mxu0 0.0
    %824 = vmatprep.mubr.f32.mxu0 0.0
    %825 = vmatmul.mubr.f32.gmra.mxu0 %v758
    %v826 = vpop.f32.mrf.mxu0
    %v827 = vadd.f32 %v294, %v826
    %v828 = vpop.f32.mrf.mxu0
    %829 = vdwg.mxu0
    %v830 = vadd.f32 %v757, %v827
    %v831 = vxor.u32 %v830, 2147483648
    %v832 = vmul.f32 %v831, 1.442695
    %v833 = vpow.pop %v832
    %v834 = vadd.f32 %v833, 1.0
    %v835 = vrcp.pop %v834
    %v836 = vmul.f32 1.0, %v835
    %838 = vrot.lane.b32.xlu0 %v827, 80
    %v839 = vpop.permute.xlu0 %838
    %v841 = vmul.f32 %v836, %v839
    %843 = vrot.lane.b32.xlu0 %v841, 48
    %v844 = vpop.permute.xlu0 %843
    %v846 = vadd.f32 %v757, %v844
    %v847 = vtanh.pop %v846
    %v848 = vsub.f32 1.0, %v836
    %850 = vrot.lane.b32.xlu0 %v847, 104
    %v851 = vpop.permute.xlu0 %850
    %v853 = vmul.f32 %v848, %v851
    %v854 = vmul.f32 %v836, %v743
    %v855 = vadd.f32 %v853, %v854
    %857 = vrot.lane.b32.xlu0 %v855, 104
    %v858 = vpop.permute.xlu0 %857
    %s860 = scalar_lea.vmem [#allocation3], 8
    %861 = vst.msk [vmem:[%s860] sm:$0x3] %vm406, %v858
    %862 = vrot.lane.b32.xlu0 %v855, 92
    %v863 = vpop.permute.xlu0 %862
    %s865 = scalar_lea.vmem [#allocation4], 6
    %866 = vst.msk [vmem:[%s865] sm:$0x3] %vm406, %v863
    %v867 = vld [vmem:[%s529] sm:$0x3]
    %v868 = vld [vmem:[%s527] sm:$0x3]
    %v869 = vsel %vm300, %v867, %v868
    %v870 = vsel %vm302, %v858, 0
    %872 = vmatprep.subr.mxu0 0.0
    %873 = vmatpush1.msra.mxu0 0.0
    %874 = vmatprep.subr.mxu0 0.0
    %875 = vmatpush1.msra.mxu0 0.0
    %876 = vmatprep.subr.mxu0 0.0
    %877 = vmatpush1.msra.mxu0 0.0
    %878 = vmatprep.subr.mxu0 0.0
    %879 = vmatpush1.msra.mxu0 0.0
    %880 = vmatprep.subr.mxu0 0.0
    %881 = vmatpush1.msra.mxu0 0.0
    %882 = vmatprep.subr.mxu0 0.0
    %883 = vmatpush1.msra.mxu0 0.0
    %884 = vmatprep.subr.mxu0 0.0
    %885 = vmatpush1.msra.mxu0 0.0
    %886 = vmatprep.subr.mxu0 0.0
    %887 = vmatpush1.msra.mxu0 0.0
    %888 = vmatprep.subr.mxu0 0.0
    %889 = vmatpush1.msra.mxu0 0.0
    %890 = vmatprep.subr.mxu0 0.0
    %891 = vmatpush1.msra.mxu0 0.0
    %892 = vmatprep.subr.mxu0 0.0
    %893 = vmatpush1.msra.mxu0 0.0
    %894 = vmatprep.subr.mxu0 0.0
    %895 = vmatpush1.msra.mxu0 0.0
    %896 = vmatprep.subr.mxu0 0.0
    %897 = vmatpush1.msra.mxu0 0.0
    %898 = vmatprep.subr.mxu0 0.0
    %899 = vmatpush1.msra.mxu0 %v288
    %900 = vmatprep.subr.mxu0 0.0
    %901 = vmatpush1.msra.mxu0 %v287
    %902 = vmatprep.subr.mxu0 0.0
    %903 = vmatpush1.msra.mxu0 %v286
    %904 = vmatprep.subr.mxu0 0.0
    %905 = vmatpush2.msra.mxu0 0.0
    %906 = vmatprep.subr.mxu0 0.0
    %907 = vmatpush2.msra.mxu0 0.0
    %908 = vmatprep.subr.mxu0 0.0
    %909 = vmatpush2.msra.mxu0 0.0
    %910 = vmatprep.subr.mxu0 0.0
    %911 = vmatpush2.msra.mxu0 0.0
    %912 = vmatprep.subr.mxu0 0.0
    %913 = vmatpush2.msra.mxu0 0.0
    %914 = vmatprep.subr.mxu0 0.0
    %915 = vmatpush2.msra.mxu0 0.0
    %916 = vmatprep.subr.mxu0 0.0
    %917 = vmatpush2.msra.mxu0 0.0
    %918 = vmatprep.subr.mxu0 0.0
    %919 = vmatpush2.msra.mxu0 0.0
    %920 = vmatprep.subr.mxu0 0.0
    %921 = vmatpush2.msra.mxu0 0.0
    %922 = vmatprep.subr.mxu0 0.0
    %923 = vmatpush2.msra.mxu0 0.0
    %924 = vmatprep.subr.mxu0 0.0
    %925 = vmatpush2.msra.mxu0 0.0
    %926 = vmatprep.subr.mxu0 0.0
    %927 = vmatpush2.msra.mxu0 0.0
    %928 = vmatprep.subr.mxu0 0.0
    %929 = vmatpush2.msra.mxu0 0.0
    %930 = vmatprep.subr.mxu0 0.0
    %931 = vmatpush2.msra.mxu0 0.0
    %932 = vmatprep.subr.mxu0 0.0
    %933 = vmatpush2.msra.mxu0 0.0
    %934 = vmatprep.subr.mxu0 0.0
    %935 = vmatpush2.msra.mxu0 0.0
    %936 = vmatprep.mubr.f32.mxu0 0.0
    %937 = vmatmul.mubr.f32.gmra.mxu0 %v870
    %v938 = vpop.f32.mrf.mxu0
    %v939 = vadd.f32 %v294, %v938
    %v940 = vpop.f32.mrf.mxu0
    %941 = vdwg.mxu0
    %v942 = vadd.f32 %v869, %v939
    %v943 = vxor.u32 %v942, 2147483648
    %v944 = vmul.f32 %v943, 1.442695
    %v945 = vpow.pop %v944
    %v946 = vadd.f32 %v945, 1.0
    %v947 = vrcp.pop %v946
    %v948 = vmul.f32 1.0, %v947
    %950 = vrot.lane.b32.xlu0 %v939, 80
    %v951 = vpop.permute.xlu0 %950
    %v953 = vmul.f32 %v948, %v951
    %955 = vrot.lane.b32.xlu0 %v953, 48
    %v956 = vpop.permute.xlu0 %955
    %v958 = vadd.f32 %v869, %v956
    %v959 = vtanh.pop %v958
    %v960 = vsub.f32 1.0, %v948
    %962 = vrot.lane.b32.xlu0 %v959, 104
    %v963 = vpop.permute.xlu0 %962
    %v965 = vmul.f32 %v960, %v963
    %v966 = vmul.f32 %v948, %v855
    %v967 = vadd.f32 %v965, %v966
    %969 = vrot.lane.b32.xlu0 %v967, 104
    %v970 = vpop.permute.xlu0 %969
    %s972 = scalar_lea.vmem [#allocation3], 10
    %973 = vst.msk [vmem:[%s972] sm:$0x3] %vm406, %v970
    %974 = vrot.lane.b32.xlu0 %v967, 92
    %v975 = vpop.permute.xlu0 %974
    %s977 = scalar_lea.vmem [#allocation4], 4
    %978 = vst.msk [vmem:[%s977] sm:$0x3] %vm406, %v975
    %v979 = vld [vmem:[%s415] sm:$0x3]
    %v980 = vld [vmem:[%s413] sm:$0x3]
    %v981 = vsel %vm300, %v979, %v980
    %v982 = vsel %vm302, %v970, 0
    %984 = vmatprep.subr.mxu0 0.0
    %985 = vmatpush1.msra.mxu0 0.0
    %986 = vmatprep.subr.mxu0 0.0
    %987 = vmatpush1.msra.mxu0 0.0
    %988 = vmatprep.subr.mxu0 0.0
    %989 = vmatpush1.msra.mxu0 0.0
    %990 = vmatprep.subr.mxu0 0.0
    %991 = vmatpush1.msra.mxu0 0.0
    %992 = vmatprep.subr.mxu0 0.0
    %993 = vmatpush1.msra.mxu0 0.0
    %994 = vmatprep.subr.mxu0 0.0
    %995 = vmatpush1.msra.mxu0 0.0
    %996 = vmatprep.subr.mxu0 0.0
    %997 = vmatpush1.msra.mxu0 0.0
    %998 = vmatprep.subr.mxu0 0.0
    %999 = vmatpush1.msra.mxu0 0.0
    %1000 = vmatprep.subr.mxu0 0.0
    %1001 = vmatpush1.msra.mxu0 0.0
    %1002 = vmatprep.subr.mxu0 0.0
    %1003 = vmatpush1.msra.mxu0 0.0
    %1004 = vmatprep.subr.mxu0 0.0
    %1005 = vmatpush1.msra.mxu0 0.0
    %1006 = vmatprep.subr.mxu0 0.0
    %1007 = vmatpush1.msra.mxu0 0.0
    %1008 = vmatprep.subr.mxu0 0.0
    %1009 = vmatpush1.msra.mxu0 0.0
    %1010 = vmatprep.subr.mxu0 0.0
    %1011 = vmatpush1.msra.mxu0 %v288
    %1012 = vmatprep.subr.mxu0 0.0
    %1013 = vmatpush1.msra.mxu0 %v287
    %1014 = vmatprep.subr.mxu0 0.0
    %1015 = vmatpush1.msra.mxu0 %v286
    %1016 = vmatprep.subr.mxu0 0.0
    %1017 = vmatpush2.msra.mxu0 0.0
    %1018 = vmatprep.subr.mxu0 0.0
    %1019 = vmatpush2.msra.mxu0 0.0
    %1020 = vmatprep.subr.mxu0 0.0
    %1021 = vmatpush2.msra.mxu0 0.0
    %1022 = vmatprep.subr.mxu0 0.0
    %1023 = vmatpush2.msra.mxu0 0.0
    %1024 = vmatprep.subr.mxu0 0.0
    %1025 = vmatpush2.msra.mxu0 0.0
    %1026 = vmatprep.subr.mxu0 0.0
    %1027 = vmatpush2.msra.mxu0 0.0
    %1028 = vmatprep.subr.mxu0 0.0
    %1029 = vmatpush2.msra.mxu0 0.0
    %1030 = vmatprep.subr.mxu0 0.0
    %1031 = vmatpush2.msra.mxu0 0.0
    %1032 = vmatprep.subr.mxu0 0.0
    %1033 = vmatpush2.msra.mxu0 0.0
    %1034 = vmatprep.subr.mxu0 0.0
    %1035 = vmatpush2.msra.mxu0 0.0
    %1036 = vmatprep.subr.mxu0 0.0
    %1037 = vmatpush2.msra.mxu0 0.0
    %1038 = vmatprep.subr.mxu0 0.0
    %1039 = vmatpush2.msra.mxu0 0.0
    %1040 = vmatprep.subr.mxu0 0.0
    %1041 = vmatpush2.msra.mxu0 0.0
    %1042 = vmatprep.subr.mxu0 0.0
    %1043 = vmatpush2.msra.mxu0 0.0
    %1044 = vmatprep.subr.mxu0 0.0
    %1045 = vmatpush2.msra.mxu0 0.0
    %1046 = vmatprep.subr.mxu0 0.0
    %1047 = vmatpush2.msra.mxu0 0.0
    %1048 = vmatprep.mubr.f32.mxu0 0.0
    %1049 = vmatmul.mubr.f32.gmra.mxu0 %v982
    %v1050 = vpop.f32.mrf.mxu0
    %v1051 = vadd.f32 %v294, %v1050
    %v1052 = vpop.f32.mrf.mxu0
    %1053 = vdwg.mxu0
    %v1054 = vadd.f32 %v981, %v1051
    %v1055 = vxor.u32 %v1054, 2147483648
    %v1056 = vmul.f32 %v1055, 1.442695
    %v1057 = vpow.pop %v1056
    %v1058 = vadd.f32 %v1057, 1.0
    %v1059 = vrcp.pop %v1058
    %v1060 = vmul.f32 1.0, %v1059
    %1062 = vrot.lane.b32.xlu0 %v1051, 80
    %v1063 = vpop.permute.xlu0 %1062
    %v1065 = vmul.f32 %v1060, %v1063
    %1067 = vrot.lane.b32.xlu0 %v1065, 48
    %v1068 = vpop.permute.xlu0 %1067
    %v1070 = vadd.f32 %v981, %v1068
    %v1071 = vtanh.pop %v1070
    %v1072 = vsub.f32 1.0, %v1060
    %1074 = vrot.lane.b32.xlu0 %v1071, 104
    %v1075 = vpop.permute.xlu0 %1074
    %v1077 = vmul.f32 %v1072, %v1075
    %v1078 = vmul.f32 %v1060, %v967
    %v1079 = vadd.f32 %v1077, %v1078
    %1081 = vrot.lane.b32.xlu0 %v1079, 104
    %v1082 = vpop.permute.xlu0 %1081
    %s1084 = scalar_lea.vmem [#allocation3], 12
    %1085 = vst.msk [vmem:[%s1084] sm:$0x3] %vm406, %v1082
    %1086 = vrot.lane.b32.xlu0 %v1079, 92
    %v1087 = vpop.permute.xlu0 %1086
    %s1089 = scalar_lea.vmem [#allocation4], 2
    %1090 = vst.msk [vmem:[%s1089] sm:$0x3] %vm406, %v1087
    %v1091 = vld [vmem:[%s297] sm:$0x3]
    %v1092 = vld [vmem:[#allocation2] sm:$0x3]
    %v1093 = vsel %vm300, %v1091, %v1092
    %v1094 = vsel %vm302, %v1082, 0
    %1096 = vmatprep.subr.mxu0 0.0
    %1097 = vmatpush1.msra.mxu0 0.0
    %1098 = vmatprep.subr.mxu0 0.0
    %1099 = vmatpush1.msra.mxu0 0.0
    %1100 = vmatprep.subr.mxu0 0.0
    %1101 = vmatpush1.msra.mxu0 0.0
    %1102 = vmatprep.subr.mxu0 0.0
    %1103 = vmatpush1.msra.mxu0 0.0
    %1104 = vmatprep.subr.mxu0 0.0
    %1105 = vmatpush1.msra.mxu0 0.0
    %1106 = vmatprep.subr.mxu0 0.0
    %1107 = vmatpush1.msra.mxu0 0.0
    %1108 = vmatprep.subr.mxu0 0.0
    %1109 = vmatpush1.msra.mxu0 0.0
    %1110 = vmatprep.subr.mxu0 0.0
    %1111 = vmatpush1.msra.mxu0 0.0
    %1112 = vmatprep.subr.mxu0 0.0
    %1113 = vmatpush1.msra.mxu0 0.0
    %1114 = vmatprep.subr.mxu0 0.0
    %1115 = vmatpush1.msra.mxu0 0.0
    %1116 = vmatprep.subr.mxu0 0.0
    %1117 = vmatpush1.msra.mxu0 0.0
    %1118 = vmatprep.subr.mxu0 0.0
    %1119 = vmatpush1.msra.mxu0 0.0
    %1120 = vmatprep.subr.mxu0 0.0
    %1121 = vmatpush1.msra.mxu0 0.0
    %1122 = vmatprep.subr.mxu0 0.0
    %1123 = vmatpush1.msra.mxu0 %v288
    %1124 = vmatprep.subr.mxu0 0.0
    %1125 = vmatpush1.msra.mxu0 %v287
    %1126 = vmatprep.subr.mxu0 0.0
    %1127 = vmatpush1.msra.mxu0 %v286
    %1128 = vmatprep.subr.mxu0 0.0
    %1129 = vmatpush2.msra.mxu0 0.0
    %1130 = vmatprep.subr.mxu0 0.0
    %1131 = vmatpush2.msra.mxu0 0.0
    %1132 = vmatprep.subr.mxu0 0.0
    %1133 = vmatpush2.msra.mxu0 0.0
    %1134 = vmatprep.subr.mxu0 0.0
    %1135 = vmatpush2.msra.mxu0 0.0
    %1136 = vmatprep.subr.mxu0 0.0
    %1137 = vmatpush2.msra.mxu0 0.0
    %1138 = vmatprep.subr.mxu0 0.0
    %1139 = vmatpush2.msra.mxu0 0.0
    %1140 = vmatprep.subr.mxu0 0.0
    %1141 = vmatpush2.msra.mxu0 0.0
    %1142 = vmatprep.subr.mxu0 0.0
    %1143 = vmatpush2.msra.mxu0 0.0
    %1144 = vmatprep.subr.mxu0 0.0
    %1145 = vmatpush2.msra.mxu0 0.0
    %1146 = vmatprep.subr.mxu0 0.0
    %1147 = vmatpush2.msra.mxu0 0.0
    %1148 = vmatprep.subr.mxu0 0.0
    %1149 = vmatpush2.msra.mxu0 0.0
    %1150 = vmatprep.subr.mxu0 0.0
    %1151 = vmatpush2.msra.mxu0 0.0
    %1152 = vmatprep.subr.mxu0 0.0
    %1153 = vmatpush2.msra.mxu0 0.0
    %1154 = vmatprep.subr.mxu0 0.0
    %1155 = vmatpush2.msra.mxu0 0.0
    %1156 = vmatprep.subr.mxu0 0.0
    %1157 = vmatpush2.msra.mxu0 0.0
    %1158 = vmatprep.subr.mxu0 0.0
    %1159 = vmatpush2.msra.mxu0 0.0
    %1160 = vmatprep.mubr.f32.mxu0 0.0
    %1161 = vmatmul.mubr.f32.gmra.mxu0 %v1094
    %v1162 = vpop.f32.mrf.mxu0
    %v1163 = vadd.f32 %v294, %v1162
    %v1164 = vpop.f32.mrf.mxu0
    %1165 = vdwg.mxu0
    %v1166 = vadd.f32 %v1093, %v1163
    %v1167 = vxor.u32 %v1166, 2147483648
    %v1168 = vmul.f32 %v1167, 1.442695
    %v1169 = vpow.pop %v1168
    %v1170 = vadd.f32 %v1169, 1.0
    %v1171 = vrcp.pop %v1170
    %v1172 = vmul.f32 1.0, %v1171
    %1174 = vrot.lane.b32.xlu0 %v1163, 80
    %v1175 = vpop.permute.xlu0 %1174
    %v1177 = vmul.f32 %v1172, %v1175
    %1179 = vrot.lane.b32.xlu0 %v1177, 48
    %v1180 = vpop.permute.xlu0 %1179
    %v1182 = vadd.f32 %v1093, %v1180
    %v1183 = vtanh.pop %v1182
    %v1184 = vsub.f32 1.0, %v1172
    %1186 = vrot.lane.b32.xlu0 %v1183, 104
    %v1187 = vpop.permute.xlu0 %1186
    %v1189 = vmul.f32 %v1184, %v1187
    %v1190 = vmul.f32 %v1172, %v1079
    %v1191 = vadd.f32 %v1189, %v1190
    %1193 = vrot.lane.b32.xlu0 %v1191, 104
    %v1194 = vpop.permute.xlu0 %1193
    %s1196 = scalar_lea.vmem [#allocation3], 14
    %1197 = vst.msk [vmem:[%s1196] sm:$0x3] %vm406, %v1194
    %1198 = vrot.lane.b32.xlu0 %v1191, 92
    %v1199 = vpop.permute.xlu0 %1198
    %1201 = vst.msk [vmem:[#allocation4] sm:$0x3] %vm406, %v1199
    %v1202 = vld [vmem:[%s3] sm:$0xff]
    %v1203 = vld [vmem:[%s3 + $0x8] sm:$0xff]
    %v1204 = vld [vmem:[%s3 + $0x10] sm:$0xff]
    %v1205 = vld [vmem:[#allocation3] sm:$0x3]
    %v1206 = vld [vmem:[#allocation3 + $0x2] sm:$0x3]
    %v1207 = vld [vmem:[#allocation3 + $0x4] sm:$0x3]
    %v1208 = vld [vmem:[#allocation3 + $0x6] sm:$0x3]
    %v1209 = vld [vmem:[#allocation3 + $0x8] sm:$0x3]
    %v1210 = vld [vmem:[#allocation3 + $0xa] sm:$0x3]
    %v1211 = vld [vmem:[#allocation3 + $0xc] sm:$0x3]
    %v1212 = vld [vmem:[#allocation3 + $0xe] sm:$0x3]
    %v1213 = vld [vmem:[#allocation4] sm:$0x3]
    %v1214 = vld [vmem:[#allocation4 + $0x2] sm:$0x3]
    %v1215 = vld [vmem:[#allocation4 + $0x4] sm:$0x3]
    %v1216 = vld [vmem:[#allocation4 + $0x6] sm:$0x3]
    %v1217 = vld [vmem:[#allocation4 + $0x8] sm:$0x3]
    %v1218 = vld [vmem:[#allocation4 + $0xa] sm:$0x3]
    %v1219 = vld [vmem:[#allocation4 + $0xc] sm:$0x3]
    %v1220 = vld [vmem:[#allocation4 + $0xe] sm:$0x3]
    %v1229 = vcombine.low %v1213, %v1214
    %v1230 = vcombine.low %v1215, %v1216
    %v1232 = vunpack.c.l.s4 1983009808
    %v1233 = vunpack.c.0.s8 %v1232
    %v1234 = vlaneseq
    %v1235 = vshrl.u32 %v1234, 7
    %v1236 = vsub.s32 %v1233, %v1235
    %v1237 = vrot.slane %v1229, %v1236
    %v1239 = vunpack.c.l.s4 1983009808
    %v1240 = vunpack.c.0.s8 %v1239
    %v1241 = vlaneseq
    %v1242 = vshrl.u32 %v1241, 7
    %v1243 = vsub.s32 %v1240, %v1242
    %v1244 = vrot.slane %v1230, %v1243
    %v1245 = vcombine.low %v1237, %v1244
    %v1246 = vcombine.low %v1217, %v1218
    %v1247 = vcombine.low %v1219, %v1220
    %v1249 = vunpack.c.l.s4 1983009808
    %v1250 = vunpack.c.0.s8 %v1249
    %v1251 = vlaneseq
    %v1252 = vshrl.u32 %v1251, 7
    %v1253 = vsub.s32 %v1250, %v1252
    %v1254 = vrot.slane %v1246, %v1253
    %v1256 = vunpack.c.l.s4 1983009808
    %v1257 = vunpack.c.0.s8 %v1256
    %v1258 = vlaneseq
    %v1259 = vshrl.u32 %v1258, 7
    %v1260 = vsub.s32 %v1257, %v1259
    %v1261 = vrot.slane %v1247, %v1260
    %v1262 = vcombine.low %v1254, %v1261
    %vm1265 = vcmask 1043456
    %v1266 = vrot.slane %v1203, 4
    %v1267 = vrot.slane %v1204, 4
    %v1268 = vsel %vm1265, %v1266, %v1267
    %vm1270 = vcmask 97280
    %v1271 = vsel %vm1270, %v1245, 0
    %v1273 = vsel %vm1270, %v1262, 0
    %v1275 = vsel %vm1265, %v1267, 0
    %1277 = vmatprep.subr.mxu0 0.0
    %1278 = vmatpush1.msra.mxu0 0.0
    %1279 = vmatprep.subr.mxu0 0.0
    %1280 = vmatpush1.msra.mxu0 0.0
    %1281 = vmatprep.subr.mxu0 0.0
    %1282 = vmatpush1.msra.mxu0 0.0
    %1283 = vmatprep.subr.mxu0 0.0
    %1284 = vmatpush1.msra.mxu0 0.0
    %1285 = vmatprep.subr.mxu0 0.0
    %1286 = vmatpush1.msra.mxu0 0.0
    %1287 = vmatprep.subr.mxu0 0.0
    %1288 = vmatpush1.msra.mxu0 0.0
    %1289 = vmatprep.subr.mxu0 0.0
    %1290 = vmatpush1.msra.mxu0 0.0
    %1291 = vmatprep.subr.mxu0 0.0
    %1292 = vmatpush1.msra.mxu0 0.0
    %1293 = vmatprep.subr.mxu0 0.0
    %1294 = vmatpush1.msra.mxu0 0.0
    %1295 = vmatprep.subr.mxu0 0.0
    %1296 = vmatpush1.msra.mxu0 0.0
    %1297 = vmatprep.subr.mxu0 0.0
    %1298 = vmatpush1.msra.mxu0 0.0
    %1299 = vmatprep.subr.mxu0 0.0
    %1300 = vmatpush1.msra.mxu0 0.0
    %1301 = vmatprep.subr.mxu0 0.0
    %1302 = vmatpush1.msra.mxu0 0.0
    %1303 = vmatprep.subr.mxu0 0.0
    %1304 = vmatpush1.msra.mxu0 0.0
    %1305 = vmatprep.subr.mxu0 0.0
    %1306 = vmatpush1.msra.mxu0 %v1275
    %1307 = vmatprep.subr.mxu0 0.0
    %1308 = vmatpush1.msra.mxu0 %v1268
    %1309 = vmatprep.subr.mxu0 0.0
    %1310 = vmatpush2.msra.mxu0 0.0
    %1311 = vmatprep.subr.mxu0 0.0
    %1312 = vmatpush2.msra.mxu0 0.0
    %1313 = vmatprep.subr.mxu0 0.0
    %1314 = vmatpush2.msra.mxu0 0.0
    %1315 = vmatprep.subr.mxu0 0.0
    %1316 = vmatpush2.msra.mxu0 0.0
    %1317 = vmatprep.subr.mxu0 0.0
    %1318 = vmatpush2.msra.mxu0 0.0
    %1319 = vmatprep.subr.mxu0 0.0
    %1320 = vmatpush2.msra.mxu0 0.0
    %1321 = vmatprep.subr.mxu0 0.0
    %1322 = vmatpush2.msra.mxu0 0.0
    %1323 = vmatprep.subr.mxu0 0.0
    %1324 = vmatpush2.msra.mxu0 0.0
    %1325 = vmatprep.subr.mxu0 0.0
    %1326 = vmatpush2.msra.mxu0 0.0
    %1327 = vmatprep.subr.mxu0 0.0
    %1328 = vmatpush2.msra.mxu0 0.0
    %1329 = vmatprep.subr.mxu0 0.0
    %1330 = vmatpush2.msra.mxu0 0.0
    %1331 = vmatprep.subr.mxu0 0.0
    %1332 = vmatpush2.msra.mxu0 0.0
    %1333 = vmatprep.subr.mxu0 0.0
    %1334 = vmatpush2.msra.mxu0 0.0
    %1335 = vmatprep.subr.mxu0 0.0
    %1336 = vmatpush2.msra.mxu0 0.0
    %1337 = vmatprep.subr.mxu0 0.0
    %1338 = vmatpush2.msra.mxu0 0.0
    %1339 = vmatprep.subr.mxu0 0.0
    %1340 = vmatpush2.msra.mxu0 0.0
    %1341 = vmatprep.mubr.f32.mxu0 0.0
    %1342 = vmatmul.mubr.f32.gmra.mxu0 %v1271
    %v1343 = vpop.f32.mrf.mxu0
    %v1344 = vadd.f32 0.0, %v1343
    %v1345 = vpop.f32.mrf.mxu0
    %1346 = vmatprep.mubr.f32.mxu0 0.0
    %1347 = vmatmul.mubr.f32.gmra.mxu0 %v1273
    %v1348 = vpop.f32.mrf.mxu0
    %v1349 = vadd.f32 0.0, %v1348
    %v1350 = vpop.f32.mrf.mxu0
    %1351 = vdwg.mxu0
    %v1360 = vcombine.low %v1205, %v1206
    %v1361 = vcombine.low %v1207, %v1208
    %v1363 = vunpack.c.l.s4 1983009808
    %v1364 = vunpack.c.0.s8 %v1363
    %v1365 = vlaneseq
    %v1366 = vshrl.u32 %v1365, 7
    %v1367 = vsub.s32 %v1364, %v1366
    %v1368 = vrot.slane %v1360, %v1367
    %v1370 = vunpack.c.l.s4 1983009808
    %v1371 = vunpack.c.0.s8 %v1370
    %v1372 = vlaneseq
    %v1373 = vshrl.u32 %v1372, 7
    %v1374 = vsub.s32 %v1371, %v1373
    %v1375 = vrot.slane %v1361, %v1374
    %v1376 = vcombine.low %v1368, %v1375
    %v1377 = vcombine.low %v1209, %v1210
    %v1378 = vcombine.low %v1211, %v1212
    %v1380 = vunpack.c.l.s4 1983009808
    %v1381 = vunpack.c.0.s8 %v1380
    %v1382 = vlaneseq
    %v1383 = vshrl.u32 %v1382, 7
    %v1384 = vsub.s32 %v1381, %v1383
    %v1385 = vrot.slane %v1377, %v1384
    %v1387 = vunpack.c.l.s4 1983009808
    %v1388 = vunpack.c.0.s8 %v1387
    %v1389 = vlaneseq
    %v1390 = vshrl.u32 %v1389, 7
    %v1391 = vsub.s32 %v1388, %v1390
    %v1392 = vrot.slane %v1378, %v1391
    %v1393 = vcombine.low %v1385, %v1392
    %v1394 = vsel %vm1270, %v1376, 0
    %v1396 = vsel %vm1270, %v1393, 0
    %v1398 = vsel %vm1265, %v1203, 0
    %1400 = vmatprep.subr.mxu0 0.0
    %1401 = vmatpush1.msra.mxu0 0.0
    %1402 = vmatprep.subr.mxu0 0.0
    %1403 = vmatpush1.msra.mxu0 0.0
    %1404 = vmatprep.subr.mxu0 0.0
    %1405 = vmatpush1.msra.mxu0 0.0
    %1406 = vmatprep.subr.mxu0 0.0
    %1407 = vmatpush1.msra.mxu0 0.0
    %1408 = vmatprep.subr.mxu0 0.0
    %1409 = vmatpush1.msra.mxu0 0.0
    %1410 = vmatprep.subr.mxu0 0.0
    %1411 = vmatpush1.msra.mxu0 0.0
    %1412 = vmatprep.subr.mxu0 0.0
    %1413 = vmatpush1.msra.mxu0 0.0
    %1414 = vmatprep.subr.mxu0 0.0
    %1415 = vmatpush1.msra.mxu0 0.0
    %1416 = vmatprep.subr.mxu0 0.0
    %1417 = vmatpush1.msra.mxu0 0.0
    %1418 = vmatprep.subr.mxu0 0.0
    %1419 = vmatpush1.msra.mxu0 0.0
    %1420 = vmatprep.subr.mxu0 0.0
    %1421 = vmatpush1.msra.mxu0 0.0
    %1422 = vmatprep.subr.mxu0 0.0
    %1423 = vmatpush1.msra.mxu0 0.0
    %1424 = vmatprep.subr.mxu0 0.0
    %1425 = vmatpush1.msra.mxu0 0.0
    %1426 = vmatprep.subr.mxu0 0.0
    %1427 = vmatpush1.msra.mxu0 0.0
    %1428 = vmatprep.subr.mxu0 0.0
    %1429 = vmatpush1.msra.mxu0 %v1398
    %1430 = vmatprep.subr.mxu0 0.0
    %1431 = vmatpush1.msra.mxu0 %v1202
    %1432 = vmatprep.subr.mxu0 0.0
    %1433 = vmatpush2.msra.mxu0 0.0
    %1434 = vmatprep.subr.mxu0 0.0
    %1435 = vmatpush2.msra.mxu0 0.0
    %1436 = vmatprep.subr.mxu0 0.0
    %1437 = vmatpush2.msra.mxu0 0.0
    %1438 = vmatprep.subr.mxu0 0.0
    %1439 = vmatpush2.msra.mxu0 0.0
    %1440 = vmatprep.subr.mxu0 0.0
    %1441 = vmatpush2.msra.mxu0 0.0
    %1442 = vmatprep.subr.mxu0 0.0
    %1443 = vmatpush2.msra.mxu0 0.0
    %1444 = vmatprep.subr.mxu0 0.0
    %1445 = vmatpush2.msra.mxu0 0.0
    %1446 = vmatprep.subr.mxu0 0.0
    %1447 = vmatpush2.msra.mxu0 0.0
    %1448 = vmatprep.subr.mxu0 0.0
    %1449 = vmatpush2.msra.mxu0 0.0
    %1450 = vmatprep.subr.mxu0 0.0
    %1451 = vmatpush2.msra.mxu0 0.0
    %1452 = vmatprep.subr.mxu0 0.0
    %1453 = vmatpush2.msra.mxu0 0.0
    %1454 = vmatprep.subr.mxu0 0.0
    %1455 = vmatpush2.msra.mxu0 0.0
    %1456 = vmatprep.subr.mxu0 0.0
    %1457 = vmatpush2.msra.mxu0 0.0
    %1458 = vmatprep.subr.mxu0 0.0
    %1459 = vmatpush2.msra.mxu0 0.0
    %1460 = vmatprep.subr.mxu0 0.0
    %1461 = vmatpush2.msra.mxu0 0.0
    %1462 = vmatprep.subr.mxu0 0.0
    %1463 = vmatpush2.msra.mxu0 0.0
    %1464 = vmatprep.mubr.f32.mxu0 0.0
    %1465 = vmatmul.mubr.f32.gmra.mxu0 %v1394
    %v1466 = vpop.f32.mrf.mxu0
    %v1467 = vadd.f32 %v1344, %v1466
    %v1468 = vpop.f32.mrf.mxu0
    %1469 = vmatprep.mubr.f32.mxu0 0.0
    %1470 = vmatmul.mubr.f32.gmra.mxu0 %v1396
    %v1471 = vpop.f32.mrf.mxu0
    %v1472 = vadd.f32 %v1349, %v1471
    %v1473 = vpop.f32.mrf.mxu0
    %1474 = vdwg.mxu0
    %v1475 = vld [vmem:[%s4] sm:$0x1]
    %v1477 = vlaneseq
    %v1478 = vshrl.u32 %v1477, 7
    %v1479 = vsub.s32 0, %v1478
    %v1480 = vrot.slane %v1475, %v1479
    %v1482 = vadd.f32 %v1467, %v1480
    %v1483 = vadd.f32 %v1472, %v1480
    %v1486 = vcombine.high %v1482, %v1482
    %v1488 = vunpack.c.l.s4 1983009808
    %v1489 = vunpack.c.0.s8 %v1488
    %v1490 = vlaneseq
    %v1491 = vshrl.u32 %v1490, 7
    %v1492 = vsub.s32 %v1489, %v1491
    %v1493 = vrot.slane %v1482, %v1492
    %v1495 = vunpack.c.l.s4 1983009808
    %v1496 = vunpack.c.0.s8 %v1495
    %v1497 = vlaneseq
    %v1498 = vshrl.u32 %v1497, 7
    %v1499 = vsub.s32 %v1496, %v1498
    %v1500 = vrot.slane %v1486, %v1499
    %v1501 = vcombine.high %v1493, %v1493
    %v1502 = vcombine.high %v1500, %v1500
    %v1503 = vcombine.high %v1483, %v1483
    %v1505 = vunpack.c.l.s4 1983009808
    %v1506 = vunpack.c.0.s8 %v1505
    %v1507 = vlaneseq
    %v1508 = vshrl.u32 %v1507, 7
    %v1509 = vsub.s32 %v1506, %v1508
    %v1510 = vrot.slane %v1483, %v1509
    %v1512 = vunpack.c.l.s4 1983009808
    %v1513 = vunpack.c.0.s8 %v1512
    %v1514 = vlaneseq
    %v1515 = vshrl.u32 %v1514, 7
    %v1516 = vsub.s32 %v1513, %v1515
    %v1517 = vrot.slane %v1503, %v1516
    %v1518 = vcombine.high %v1510, %v1510
    %v1519 = vcombine.high %v1517, %v1517
    %1528 = vst [vmem:[#allocation2] sm:$0x3] %v1493
    %1529 = vst [vmem:[#allocation2 + $0x2] sm:$0x3] %v1501
    %1530 = vst [vmem:[#allocation2 + $0x4] sm:$0x3] %v1500
    %1531 = vst [vmem:[#allocation2 + $0x6] sm:$0x3] %v1502
    %1532 = vst [vmem:[#allocation2 + $0x8] sm:$0x3] %v1510
    %1533 = vst [vmem:[#allocation2 + $0xa] sm:$0x3] %v1518
    %1534 = vst [vmem:[#allocation2 + $0xc] sm:$0x3] %v1517
    %1535 = vst [vmem:[#allocation2 + $0xe] sm:$0x3] %v1519
    %v1536 = vld [vmem:[%s7] sm:$0xff]
    %v1537 = vld [vmem:[%s7 + $0x8] sm:$0xff]
    %v1538 = vld [vmem:[%s7 + $0x10] sm:$0xff]
    %v1539 = vld [vmem:[%s8] sm:$0x1]
    %v1540 = vld [vmem:[%s9] sm:$0x1]
    %v1541 = vld [vmem:[%s10] sm:$0x1]
    %v1543 = vlaneseq
    %v1544 = vshrl.u32 %v1543, 7
    %v1545 = vsub.s32 0, %v1544
    %v1546 = vrot.slane %v1539, %v1545
    %v1549 = vlaneseq
    %v1550 = vshrl.u32 %v1549, 7
    %v1551 = vsub.s32 0, %v1550
    %v1552 = vrot.slane %v1540, %v1551
    %v1554 = vlaneseq
    %v1555 = vshrl.u32 %v1554, 7
    %v1556 = vsub.s32 0, %v1555
    %v1557 = vrot.slane %v1541, %v1556
    %v1558 = vld [vmem:[#allocation2] sm:$0x3]
    %v1559 = vld [vmem:[%s297] sm:$0x3]
    %v1560 = vsel %vm300, %v1558, %v1559
    %1561 = vmatprep.subr.mxu0 0.0
    %1562 = vmatpush1.msra.mxu0 0.0
    %1563 = vmatprep.subr.mxu0 0.0
    %1564 = vmatpush1.msra.mxu0 0.0
    %1565 = vmatprep.subr.mxu0 0.0
    %1566 = vmatpush1.msra.mxu0 0.0
    %1567 = vmatprep.subr.mxu0 0.0
    %1568 = vmatpush1.msra.mxu0 0.0
    %1569 = vmatprep.subr.mxu0 0.0
    %1570 = vmatpush1.msra.mxu0 0.0
    %1571 = vmatprep.subr.mxu0 0.0
    %1572 = vmatpush1.msra.mxu0 0.0
    %1573 = vmatprep.subr.mxu0 0.0
    %1574 = vmatpush1.msra.mxu0 0.0
    %1575 = vmatprep.subr.mxu0 0.0
    %1576 = vmatpush1.msra.mxu0 0.0
    %1577 = vmatprep.subr.mxu0 0.0
    %1578 = vmatpush1.msra.mxu0 0.0
    %1579 = vmatprep.subr.mxu0 0.0
    %1580 = vmatpush1.msra.mxu0 0.0
    %1581 = vmatprep.subr.mxu0 0.0
    %1582 = vmatpush1.msra.mxu0 0.0
    %1583 = vmatprep.subr.mxu0 0.0
    %1584 = vmatpush1.msra.mxu0 0.0
    %1585 = vmatprep.subr.mxu0 0.0
    %1586 = vmatpush1.msra.mxu0 0.0
    %1587 = vmatprep.subr.mxu0 0.0
    %1588 = vmatpush1.msra.mxu0 %v1538
    %1589 = vmatprep.subr.mxu0 0.0
    %1590 = vmatpush1.msra.mxu0 %v1537
    %1591 = vmatprep.subr.mxu0 0.0
    %1592 = vmatpush1.msra.mxu0 %v1536
    %1593 = vmatprep.subr.mxu0 0.0
    %1594 = vmatpush2.msra.mxu0 0.0
    %1595 = vmatprep.subr.mxu0 0.0
    %1596 = vmatpush2.msra.mxu0 0.0
    %1597 = vmatprep.subr.mxu0 0.0
    %1598 = vmatpush2.msra.mxu0 0.0
    %1599 = vmatprep.subr.mxu0 0.0
    %1600 = vmatpush2.msra.mxu0 0.0
    %1601 = vmatprep.subr.mxu0 0.0
    %1602 = vmatpush2.msra.mxu0 0.0
    %1603 = vmatprep.subr.mxu0 0.0
    %1604 = vmatpush2.msra.mxu0 0.0
    %1605 = vmatprep.subr.mxu0 0.0
    %1606 = vmatpush2.msra.mxu0 0.0
    %1607 = vmatprep.subr.mxu0 0.0
    %1608 = vmatpush2.msra.mxu0 0.0
    %1609 = vmatprep.subr.mxu0 0.0
    %1610 = vmatpush2.msra.mxu0 0.0
    %1611 = vmatprep.subr.mxu0 0.0
    %1612 = vmatpush2.msra.mxu0 0.0
    %1613 = vmatprep.subr.mxu0 0.0
    %1614 = vmatpush2.msra.mxu0 0.0
    %1615 = vmatprep.subr.mxu0 0.0
    %1616 = vmatpush2.msra.mxu0 0.0
    %1617 = vmatprep.subr.mxu0 0.0
    %1618 = vmatpush2.msra.mxu0 0.0
    %1619 = vmatprep.subr.mxu0 0.0
    %1620 = vmatpush2.msra.mxu0 0.0
    %1621 = vmatprep.subr.mxu0 0.0
    %1622 = vmatpush2.msra.mxu0 0.0
    %1623 = vmatprep.subr.mxu0 0.0
    %1624 = vmatpush2.msra.mxu0 0.0
    %1625 = vmatprep.mubr.f32.mxu0 0.0
    %1626 = vmatmul.mubr.f32.gmra.mxu0 %v304
    %v1627 = vpop.f32.mrf.mxu0
    %v1628 = vadd.f32 %v1546, %v1627
    %v1629 = vpop.f32.mrf.mxu0
    %1630 = vdwg.mxu0
    %v1631 = vadd.f32 %v1560, %v1628
    %v1632 = vxor.u32 %v1631, 2147483648
    %v1633 = vmul.f32 %v1632, 1.442695
    %v1634 = vpow.pop %v1633
    %v1635 = vadd.f32 %v1634, 1.0
    %v1636 = vrcp.pop %v1635
    %v1637 = vmul.f32 1.0, %v1636
    %1639 = vrot.lane.b32.xlu0 %v1628, 80
    %v1640 = vpop.permute.xlu0 %1639
    %v1642 = vmul.f32 %v1637, %v1640
    %1644 = vrot.lane.b32.xlu0 %v1642, 48
    %v1645 = vpop.permute.xlu0 %1644
    %v1647 = vadd.f32 %v1560, %v1645
    %v1648 = vtanh.pop %v1647
    %v1649 = vsub.f32 1.0, %v1637
    %1651 = vrot.lane.b32.xlu0 %v1648, 104
    %v1652 = vpop.permute.xlu0 %1651
    %v1654 = vmul.f32 %v1649, %v1652
    %v1655 = vmul.f32 %v1637, 0.0
    %v1656 = vadd.f32 %v1654, %v1655
    %1657 = vrot.lane.b32.xlu0 %v1552, 24
    %v1658 = vpop.permute.xlu0 %1657
    %v1660 = vmul.f32 %v1656, %v1658
    %1661 = vrot.lane.b32.xlu0 %v1557, 24
    %v1662 = vpop.permute.xlu0 %1661
    %v1664 = vadd.f32 %v1660, %v1662
    %v1665 = vmax.f32 %v1664, 0.0
    %v1666 = vadd.f32 %v1665, 0.0
    %v1667 = vld [vmem:[%s413] sm:$0x3]
    %v1668 = vld [vmem:[%s415] sm:$0x3]
    %v1669 = vsel %vm300, %v1667, %v1668
    %1671 = vrot.lane.b32.xlu0 %v1656, 104
    %v1672 = vpop.permute.xlu0 %1671
    %v1673 = vsel %vm302, %v1672, 0
    %1675 = vmatprep.subr.mxu0 0.0
    %1676 = vmatpush1.msra.mxu0 0.0
    %1677 = vmatprep.subr.mxu0 0.0
    %1678 = vmatpush1.msra.mxu0 0.0
    %1679 = vmatprep.subr.mxu0 0.0
    %1680 = vmatpush1.msra.mxu0 0.0
    %1681 = vmatprep.subr.mxu0 0.0
    %1682 = vmatpush1.msra.mxu0 0.0
    %1683 = vmatprep.subr.mxu0 0.0
    %1684 = vmatpush1.msra.mxu0 0.0
    %1685 = vmatprep.subr.mxu0 0.0
    %1686 = vmatpush1.msra.mxu0 0.0
    %1687 = vmatprep.subr.mxu0 0.0
    %1688 = vmatpush1.msra.mxu0 0.0
    %1689 = vmatprep.subr.mxu0 0.0
    %1690 = vmatpush1.msra.mxu0 0.0
    %1691 = vmatprep.subr.mxu0 0.0
    %1692 = vmatpush1.msra.mxu0 0.0
    %1693 = vmatprep.subr.mxu0 0.0
    %1694 = vmatpush1.msra.mxu0 0.0
    %1695 = vmatprep.subr.mxu0 0.0
    %1696 = vmatpush1.msra.mxu0 0.0
    %1697 = vmatprep.subr.mxu0 0.0
    %1698 = vmatpush1.msra.mxu0 0.0
    %1699 = vmatprep.subr.mxu0 0.0
    %1700 = vmatpush1.msra.mxu0 0.0
    %1701 = vmatprep.subr.mxu0 0.0
    %1702 = vmatpush1.msra.mxu0 %v1538
    %1703 = vmatprep.subr.mxu0 0.0
    %1704 = vmatpush1.msra.mxu0 %v1537
    %1705 = vmatprep.subr.mxu0 0.0
    %1706 = vmatpush1.msra.mxu0 %v1536
    %1707 = vmatprep.subr.mxu0 0.0
    %1708 = vmatpush2.msra.mxu0 0.0
    %1709 = vmatprep.subr.mxu0 0.0
    %1710 = vmatpush2.msra.mxu0 0.0
    %1711 = vmatprep.subr.mxu0 0.0
    %1712 = vmatpush2.msra.mxu0 0.0
    %1713 = vmatprep.subr.mxu0 0.0
    %1714 = vmatpush2.msra.mxu0 0.0
    %1715 = vmatprep.subr.mxu0 0.0
    %1716 = vmatpush2.msra.mxu0 0.0
    %1717 = vmatprep.subr.mxu0 0.0
    %1718 = vmatpush2.msra.mxu0 0.0
    %1719 = vmatprep.subr.mxu0 0.0
    %1720 = vmatpush2.msra.mxu0 0.0
    %1721 = vmatprep.subr.mxu0 0.0
    %1722 = vmatpush2.msra.mxu0 0.0
    %1723 = vmatprep.subr.mxu0 0.0
    %1724 = vmatpush2.msra.mxu0 0.0
    %1725 = vmatprep.subr.mxu0 0.0
    %1726 = vmatpush2.msra.mxu0 0.0
    %1727 = vmatprep.subr.mxu0 0.0
    %1728 = vmatpush2.msra.mxu0 0.0
    %1729 = vmatprep.subr.mxu0 0.0
    %1730 = vmatpush2.msra.mxu0 0.0
    %1731 = vmatprep.subr.mxu0 0.0
    %1732 = vmatpush2.msra.mxu0 0.0
    %1733 = vmatprep.subr.mxu0 0.0
    %1734 = vmatpush2.msra.mxu0 0.0
    %1735 = vmatprep.subr.mxu0 0.0
    %1736 = vmatpush2.msra.mxu0 0.0
    %1737 = vmatprep.subr.mxu0 0.0
    %1738 = vmatpush2.msra.mxu0 0.0
    %1739 = vmatprep.mubr.f32.mxu0 0.0
    %1740 = vmatmul.mubr.f32.gmra.mxu0 %v1673
    %v1741 = vpop.f32.mrf.mxu0
    %v1742 = vadd.f32 %v1546, %v1741
    %v1743 = vpop.f32.mrf.mxu0
    %1744 = vdwg.mxu0
    %v1745 = vadd.f32 %v1669, %v1742
    %v1746 = vxor.u32 %v1745, 2147483648
    %v1747 = vmul.f32 %v1746, 1.442695
    %v1748 = vpow.pop %v1747
    %v1749 = vadd.f32 %v1748, 1.0
    %v1750 = vrcp.pop %v1749
    %v1751 = vmul.f32 1.0, %v1750
    %1753 = vrot.lane.b32.xlu0 %v1742, 80
    %v1754 = vpop.permute.xlu0 %1753
    %v1756 = vmul.f32 %v1751, %v1754
    %1758 = vrot.lane.b32.xlu0 %v1756, 48
    %v1759 = vpop.permute.xlu0 %1758
    %v1761 = vadd.f32 %v1669, %v1759
    %v1762 = vtanh.pop %v1761
    %v1763 = vsub.f32 1.0, %v1751
    %1765 = vrot.lane.b32.xlu0 %v1762, 104
    %v1766 = vpop.permute.xlu0 %1765
    %v1768 = vmul.f32 %v1763, %v1766
    %v1769 = vmul.f32 %v1751, %v1656
    %v1770 = vadd.f32 %v1768, %v1769
    %v1771 = vmul.f32 %v1770, %v1658
    %v1772 = vadd.f32 %v1771, %v1662
    %v1773 = vmax.f32 %v1772, 0.0
    %v1774 = vadd.f32 %v1666, %v1773
    %v1775 = vld [vmem:[%s527] sm:$0x3]
    %v1776 = vld [vmem:[%s529] sm:$0x3]
    %v1777 = vsel %vm300, %v1775, %v1776
    %1779 = vrot.lane.b32.xlu0 %v1770, 104
    %v1780 = vpop.permute.xlu0 %1779
    %v1781 = vsel %vm302, %v1780, 0
    %1783 = vmatprep.subr.mxu0 0.0
    %1784 = vmatpush1.msra.mxu0 0.0
    %1785 = vmatprep.subr.mxu0 0.0
    %1786 = vmatpush1.msra.mxu0 0.0
    %1787 = vmatprep.subr.mxu0 0.0
    %1788 = vmatpush1.msra.mxu0 0.0
    %1789 = vmatprep.subr.mxu0 0.0
    %1790 = vmatpush1.msra.mxu0 0.0
    %1791 = vmatprep.subr.mxu0 0.0
    %1792 = vmatpush1.msra.mxu0 0.0
    %1793 = vmatprep.subr.mxu0 0.0
    %1794 = vmatpush1.msra.mxu0 0.0
    %1795 = vmatprep.subr.mxu0 0.0
    %1796 = vmatpush1.msra.mxu0 0.0
    %1797 = vmatprep.subr.mxu0 0.0
    %1798 = vmatpush1.msra.mxu0 0.0
    %1799 = vmatprep.subr.mxu0 0.0
    %1800 = vmatpush1.msra.mxu0 0.0
    %1801 = vmatprep.subr.mxu0 0.0
    %1802 = vmatpush1.msra.mxu0 0.0
    %1803 = vmatprep.subr.mxu0 0.0
    %1804 = vmatpush1.msra.mxu0 0.0
    %1805 = vmatprep.subr.mxu0 0.0
    %1806 = vmatpush1.msra.mxu0 0.0
    %1807 = vmatprep.subr.mxu0 0.0
    %1808 = vmatpush1.msra.mxu0 0.0
    %1809 = vmatprep.subr.mxu0 0.0
    %1810 = vmatpush1.msra.mxu0 %v1538
    %1811 = vmatprep.subr.mxu0 0.0
    %1812 = vmatpush1.msra.mxu0 %v1537
    %1813 = vmatprep.subr.mxu0 0.0
    %1814 = vmatpush1.msra.mxu0 %v1536
    %1815 = vmatprep.subr.mxu0 0.0
    %1816 = vmatpush2.msra.mxu0 0.0
    %1817 = vmatprep.subr.mxu0 0.0
    %1818 = vmatpush2.msra.mxu0 0.0
    %1819 = vmatprep.subr.mxu0 0.0
    %1820 = vmatpush2.msra.mxu0 0.0
    %1821 = vmatprep.subr.mxu0 0.0
    %1822 = vmatpush2.msra.mxu0 0.0
    %1823 = vmatprep.subr.mxu0 0.0
    %1824 = vmatpush2.msra.mxu0 0.0
    %1825 = vmatprep.subr.mxu0 0.0
    %1826 = vmatpush2.msra.mxu0 0.0
    %1827 = vmatprep.subr.mxu0 0.0
    %1828 = vmatpush2.msra.mxu0 0.0
    %1829 = vmatprep.subr.mxu0 0.0
    %1830 = vmatpush2.msra.mxu0 0.0
    %1831 = vmatprep.subr.mxu0 0.0
    %1832 = vmatpush2.msra.mxu0 0.0
    %1833 = vmatprep.subr.mxu0 0.0
    %1834 = vmatpush2.msra.mxu0 0.0
    %1835 = vmatprep.subr.mxu0 0.0
    %1836 = vmatpush2.msra.mxu0 0.0
    %1837 = vmatprep.subr.mxu0 0.0
    %1838 = vmatpush2.msra.mxu0 0.0
    %1839 = vmatprep.subr.mxu0 0.0
    %1840 = vmatpush2.msra.mxu0 0.0
    %1841 = vmatprep.subr.mxu0 0.0
    %1842 = vmatpush2.msra.mxu0 0.0
    %1843 = vmatprep.subr.mxu0 0.0
    %1844 = vmatpush2.msra.mxu0 0.0
    %1845 = vmatprep.subr.mxu0 0.0
    %1846 = vmatpush2.msra.mxu0 0.0
    %1847 = vmatprep.mubr.f32.mxu0 0.0
    %1848 = vmatmul.mubr.f32.gmra.mxu0 %v1781
    %v1849 = vpop.f32.mrf.mxu0
    %v1850 = vadd.f32 %v1546, %v1849
    %v1851 = vpop.f32.mrf.mxu0
    %1852 = vdwg.mxu0
    %v1853 = vadd.f32 %v1777, %v1850
    %v1854 = vxor.u32 %v1853, 2147483648
    %v1855 = vmul.f32 %v1854, 1.442695
    %v1856 = vpow.pop %v1855
    %v1857 = vadd.f32 %v1856, 1.0
    %v1858 = vrcp.pop %v1857
    %v1859 = vmul.f32 1.0, %v1858
    %1861 = vrot.lane.b32.xlu0 %v1850, 80
    %v1862 = vpop.permute.xlu0 %1861
    %v1864 = vmul.f32 %v1859, %v1862
    %1866 = vrot.lane.b32.xlu0 %v1864, 48
    %v1867 = vpop.permute.xlu0 %1866
    %v1869 = vadd.f32 %v1777, %v1867
    %v1870 = vtanh.pop %v1869
    %v1871 = vsub.f32 1.0, %v1859
    %1873 = vrot.lane.b32.xlu0 %v1870, 104
    %v1874 = vpop.permute.xlu0 %1873
    %v1876 = vmul.f32 %v1871, %v1874
    %v1877 = vmul.f32 %v1859, %v1770
    %v1878 = vadd.f32 %v1876, %v1877
    %v1879 = vmul.f32 %v1878, %v1658
    %v1880 = vadd.f32 %v1879, %v1662
    %v1881 = vmax.f32 %v1880, 0.0
    %v1882 = vadd.f32 %v1774, %v1881
    %v1883 = vld [vmem:[%s641] sm:$0x3]
    %v1884 = vld [vmem:[%s643] sm:$0x3]
    %v1885 = vsel %vm300, %v1883, %v1884
    %1887 = vrot.lane.b32.xlu0 %v1878, 104
    %v1888 = vpop.permute.xlu0 %1887
    %v1889 = vsel %vm302, %v1888, 0
    %1891 = vmatprep.subr.mxu0 0.0
    %1892 = vmatpush1.msra.mxu0 0.0
    %1893 = vmatprep.subr.mxu0 0.0
    %1894 = vmatpush1.msra.mxu0 0.0
    %1895 = vmatprep.subr.mxu0 0.0
    %1896 = vmatpush1.msra.mxu0 0.0
    %1897 = vmatprep.subr.mxu0 0.0
    %1898 = vmatpush1.msra.mxu0 0.0
    %1899 = vmatprep.subr.mxu0 0.0
    %1900 = vmatpush1.msra.mxu0 0.0
    %1901 = vmatprep.subr.mxu0 0.0
    %1902 = vmatpush1.msra.mxu0 0.0
    %1903 = vmatprep.subr.mxu0 0.0
    %1904 = vmatpush1.msra.mxu0 0.0
    %1905 = vmatprep.subr.mxu0 0.0
    %1906 = vmatpush1.msra.mxu0 0.0
    %1907 = vmatprep.subr.mxu0 0.0
    %1908 = vmatpush1.msra.mxu0 0.0
    %1909 = vmatprep.subr.mxu0 0.0
    %1910 = vmatpush1.msra.mxu0 0.0
    %1911 = vmatprep.subr.mxu0 0.0
    %1912 = vmatpush1.msra.mxu0 0.0
    %1913 = vmatprep.subr.mxu0 0.0
    %1914 = vmatpush1.msra.mxu0 0.0
    %1915 = vmatprep.subr.mxu0 0.0
    %1916 = vmatpush1.msra.mxu0 0.0
    %1917 = vmatprep.subr.mxu0 0.0
    %1918 = vmatpush1.msra.mxu0 %v1538
    %1919 = vmatprep.subr.mxu0 0.0
    %1920 = vmatpush1.msra.mxu0 %v1537
    %1921 = vmatprep.subr.mxu0 0.0
    %1922 = vmatpush1.msra.mxu0 %v1536
    %1923 = vmatprep.subr.mxu0 0.0
    %1924 = vmatpush2.msra.mxu0 0.0
    %1925 = vmatprep.subr.mxu0 0.0
    %1926 = vmatpush2.msra.mxu0 0.0
    %1927 = vmatprep.subr.mxu0 0.0
    %1928 = vmatpush2.msra.mxu0 0.0
    %1929 = vmatprep.subr.mxu0 0.0
    %1930 = vmatpush2.msra.mxu0 0.0
    %1931 = vmatprep.subr.mxu0 0.0
    %1932 = vmatpush2.msra.mxu0 0.0
    %1933 = vmatprep.subr.mxu0 0.0
    %1934 = vmatpush2.msra.mxu0 0.0
    %1935 = vmatprep.subr.mxu0 0.0
    %1936 = vmatpush2.msra.mxu0 0.0
    %1937 = vmatprep.subr.mxu0 0.0
    %1938 = vmatpush2.msra.mxu0 0.0
    %1939 = vmatprep.subr.mxu0 0.0
    %1940 = vmatpush2.msra.mxu0 0.0
    %1941 = vmatprep.subr.mxu0 0.0
    %1942 = vmatpush2.msra.mxu0 0.0
    %1943 = vmatprep.subr.mxu0 0.0
    %1944 = vmatpush2.msra.mxu0 0.0
    %1945 = vmatprep.subr.mxu0 0.0
    %1946 = vmatpush2.msra.mxu0 0.0
    %1947 = vmatprep.subr.mxu0 0.0
    %1948 = vmatpush2.msra.mxu0 0.0
    %1949 = vmatprep.subr.mxu0 0.0
    %1950 = vmatpush2.msra.mxu0 0.0
    %1951 = vmatprep.subr.mxu0 0.0
    %1952 = vmatpush2.msra.mxu0 0.0
    %1953 = vmatprep.subr.mxu0 0.0
    %1954 = vmatpush2.msra.mxu0 0.0
    %1955 = vmatprep.mubr.f32.mxu0 0.0
    %1956 = vmatmul.mubr.f32.gmra.mxu0 %v1889
    %v1957 = vpop.f32.mrf.mxu0
    %v1958 = vadd.f32 %v1546, %v1957
    %v1959 = vpop.f32.mrf.mxu0
    %1960 = vdwg.mxu0
    %v1961 = vadd.f32 %v1885, %v1958
    %v1962 = vxor.u32 %v1961, 2147483648
    %v1963 = vmul.f32 %v1962, 1.442695
    %v1964 = vpow.pop %v1963
    %v1965 = vadd.f32 %v1964, 1.0
    %v1966 = vrcp.pop %v1965
    %v1967 = vmul.f32 1.0, %v1966
    %1969 = vrot.lane.b32.xlu0 %v1958, 80
    %v1970 = vpop.permute.xlu0 %1969
    %v1972 = vmul.f32 %v1967, %v1970
    %1974 = vrot.lane.b32.xlu0 %v1972, 48
    %v1975 = vpop.permute.xlu0 %1974
    %v1977 = vadd.f32 %v1885, %v1975
    %v1978 = vtanh.pop %v1977
    %v1979 = vsub.f32 1.0, %v1967
    %1981 = vrot.lane.b32.xlu0 %v1978, 104
    %v1982 = vpop.permute.xlu0 %1981
    %v1984 = vmul.f32 %v1979, %v1982
    %v1985 = vmul.f32 %v1967, %v1878
    %v1986 = vadd.f32 %v1984, %v1985
    %v1987 = vmul.f32 %v1986, %v1658
    %v1988 = vadd.f32 %v1987, %v1662
    %v1989 = vmax.f32 %v1988, 0.0
    %v1990 = vadd.f32 %v1882, %v1989
    %v1991 = vsel %vm300, %v1884, %v1883
    %1993 = vrot.lane.b32.xlu0 %v1986, 104
    %v1994 = vpop.permute.xlu0 %1993
    %v1995 = vsel %vm302, %v1994, 0
    %1997 = vmatprep.subr.mxu0 0.0
    %1998 = vmatpush1.msra.mxu0 0.0
    %1999 = vmatprep.subr.mxu0 0.0
    %2000 = vmatpush1.msra.mxu0 0.0
    %2001 = vmatprep.subr.mxu0 0.0
    %2002 = vmatpush1.msra.mxu0 0.0
    %2003 = vmatprep.subr.mxu0 0.0
    %2004 = vmatpush1.msra.mxu0 0.0
    %2005 = vmatprep.subr.mxu0 0.0
    %2006 = vmatpush1.msra.mxu0 0.0
    %2007 = vmatprep.subr.mxu0 0.0
    %2008 = vmatpush1.msra.mxu0 0.0
    %2009 = vmatprep.subr.mxu0 0.0
    %2010 = vmatpush1.msra.mxu0 0.0
    %2011 = vmatprep.subr.mxu0 0.0
    %2012 = vmatpush1.msra.mxu0 0.0
    %2013 = vmatprep.subr.mxu0 0.0
    %2014 = vmatpush1.msra.mxu0 0.0
    %2015 = vmatprep.subr.mxu0 0.0
    %2016 = vmatpush1.msra.mxu0 0.0
    %2017 = vmatprep.subr.mxu0 0.0
    %2018 = vmatpush1.msra.mxu0 0.0
    %2019 = vmatprep.subr.mxu0 0.0
    %2020 = vmatpush1.msra.mxu0 0.0
    %2021 = vmatprep.subr.mxu0 0.0
    %2022 = vmatpush1.msra.mxu0 0.0
    %2023 = vmatprep.subr.mxu0 0.0
    %2024 = vmatpush1.msra.mxu0 %v1538
    %2025 = vmatprep.subr.mxu0 0.0
    %2026 = vmatpush1.msra.mxu0 %v1537
    %2027 = vmatprep.subr.mxu0 0.0
    %2028 = vmatpush1.msra.mxu0 %v1536
    %2029 = vmatprep.subr.mxu0 0.0
    %2030 = vmatpush2.msra.mxu0 0.0
    %2031 = vmatprep.subr.mxu0 0.0
    %2032 = vmatpush2.msra.mxu0 0.0
    %2033 = vmatprep.subr.mxu0 0.0
    %2034 = vmatpush2.msra.mxu0 0.0
    %2035 = vmatprep.subr.mxu0 0.0
    %2036 = vmatpush2.msra.mxu0 0.0
    %2037 = vmatprep.subr.mxu0 0.0
    %2038 = vmatpush2.msra.mxu0 0.0
    %2039 = vmatprep.subr.mxu0 0.0
    %2040 = vmatpush2.msra.mxu0 0.0
    %2041 = vmatprep.subr.mxu0 0.0
    %2042 = vmatpush2.msra.mxu0 0.0
    %2043 = vmatprep.subr.mxu0 0.0
    %2044 = vmatpush2.msra.mxu0 0.0
    %2045 = vmatprep.subr.mxu0 0.0
    %2046 = vmatpush2.msra.mxu0 0.0
    %2047 = vmatprep.subr.mxu0 0.0
    %2048 = vmatpush2.msra.mxu0 0.0
    %2049 = vmatprep.subr.mxu0 0.0
    %2050 = vmatpush2.msra.mxu0 0.0
    %2051 = vmatprep.subr.mxu0 0.0
    %2052 = vmatpush2.msra.mxu0 0.0
    %2053 = vmatprep.subr.mxu0 0.0
    %2054 = vmatpush2.msra.mxu0 0.0
    %2055 = vmatprep.subr.mxu0 0.0
    %2056 = vmatpush2.msra.mxu0 0.0
    %2057 = vmatprep.subr.mxu0 0.0
    %2058 = vmatpush2.msra.mxu0 0.0
    %2059 = vmatprep.subr.mxu0 0.0
    %2060 = vmatpush2.msra.mxu0 0.0
    %2061 = vmatprep.mubr.f32.mxu0 0.0
    %2062 = vmatmul.mubr.f32.gmra.mxu0 %v1995
    %v2063 = vpop.f32.mrf.mxu0
    %v2064 = vadd.f32 %v1546, %v2063
    %v2065 = vpop.f32.mrf.mxu0
    %2066 = vdwg.mxu0
    %v2067 = vadd.f32 %v1991, %v2064
    %v2068 = vxor.u32 %v2067, 2147483648
    %v2069 = vmul.f32 %v2068, 1.442695
    %v2070 = vpow.pop %v2069
    %v2071 = vadd.f32 %v2070, 1.0
    %v2072 = vrcp.pop %v2071
    %v2073 = vmul.f32 1.0, %v2072
    %2075 = vrot.lane.b32.xlu0 %v2064, 80
    %v2076 = vpop.permute.xlu0 %2075
    %v2078 = vmul.f32 %v2073, %v2076
    %2080 = vrot.lane.b32.xlu0 %v2078, 48
    %v2081 = vpop.permute.xlu0 %2080
    %v2083 = vadd.f32 %v1991, %v2081
    %v2084 = vtanh.pop %v2083
    %v2085 = vsub.f32 1.0, %v2073
    %2087 = vrot.lane.b32.xlu0 %v2084, 104
    %v2088 = vpop.permute.xlu0 %2087
    %v2090 = vmul.f32 %v2085, %v2088
    %v2091 = vmul.f32 %v2073, %v1986
    %v2092 = vadd.f32 %v2090, %v2091
    %v2093 = vmul.f32 %v2092, %v1658
    %v2094 = vadd.f32 %v2093, %v1662
    %v2095 = vmax.f32 %v2094, 0.0
    %v2096 = vadd.f32 %v1990, %v2095
    %v2097 = vsel %vm300, %v1776, %v1775
    %2099 = vrot.lane.b32.xlu0 %v2092, 104
    %v2100 = vpop.permute.xlu0 %2099
    %v2101 = vsel %vm302, %v2100, 0
    %2103 = vmatprep.subr.mxu0 0.0
    %2104 = vmatpush1.msra.mxu0 0.0
    %2105 = vmatprep.subr.mxu0 0.0
    %2106 = vmatpush1.msra.mxu0 0.0
    %2107 = vmatprep.subr.mxu0 0.0
    %2108 = vmatpush1.msra.mxu0 0.0
    %2109 = vmatprep.subr.mxu0 0.0
    %2110 = vmatpush1.msra.mxu0 0.0
    %2111 = vmatprep.subr.mxu0 0.0
    %2112 = vmatpush1.msra.mxu0 0.0
    %2113 = vmatprep.subr.mxu0 0.0
    %2114 = vmatpush1.msra.mxu0 0.0
    %2115 = vmatprep.subr.mxu0 0.0
    %2116 = vmatpush1.msra.mxu0 0.0
    %2117 = vmatprep.subr.mxu0 0.0
    %2118 = vmatpush1.msra.mxu0 0.0
    %2119 = vmatprep.subr.mxu0 0.0
    %2120 = vmatpush1.msra.mxu0 0.0
    %2121 = vmatprep.subr.mxu0 0.0
    %2122 = vmatpush1.msra.mxu0 0.0
    %2123 = vmatprep.subr.mxu0 0.0
    %2124 = vmatpush1.msra.mxu0 0.0
    %2125 = vmatprep.subr.mxu0 0.0
    %2126 = vmatpush1.msra.mxu0 0.0
    %2127 = vmatprep.subr.mxu0 0.0
    %2128 = vmatpush1.msra.mxu0 0.0
    %2129 = vmatprep.subr.mxu0 0.0
    %2130 = vmatpush1.msra.mxu0 %v1538
    %2131 = vmatprep.subr.mxu0 0.0
    %2132 = vmatpush1.msra.mxu0 %v1537
    %2133 = vmatprep.subr.mxu0 0.0
    %2134 = vmatpush1.msra.mxu0 %v1536
    %2135 = vmatprep.subr.mxu0 0.0
    %2136 = vmatpush2.msra.mxu0 0.0
    %2137 = vmatprep.subr.mxu0 0.0
    %2138 = vmatpush2.msra.mxu0 0.0
    %2139 = vmatprep.subr.mxu0 0.0
    %2140 = vmatpush2.msra.mxu0 0.0
    %2141 = vmatprep.subr.mxu0 0.0
    %2142 = vmatpush2.msra.mxu0 0.0
    %2143 = vmatprep.subr.mxu0 0.0
    %2144 = vmatpush2.msra.mxu0 0.0
    %2145 = vmatprep.subr.mxu0 0.0
    %2146 = vmatpush2.msra.mxu0 0.0
    %2147 = vmatprep.subr.mxu0 0.0
    %2148 = vmatpush2.msra.mxu0 0.0
    %2149 = vmatprep.subr.mxu0 0.0
    %2150 = vmatpush2.msra.mxu0 0.0
    %2151 = vmatprep.subr.mxu0 0.0
    %2152 = vmatpush2.msra.mxu0 0.0
    %2153 = vmatprep.subr.mxu0 0.0
    %2154 = vmatpush2.msra.mxu0 0.0
    %2155 = vmatprep.subr.mxu0 0.0
    %2156 = vmatpush2.msra.mxu0 0.0
    %2157 = vmatprep.subr.mxu0 0.0
    %2158 = vmatpush2.msra.mxu0 0.0
    %2159 = vmatprep.subr.mxu0 0.0
    %2160 = vmatpush2.msra.mxu0 0.0
    %2161 = vmatprep.subr.mxu0 0.0
    %2162 = vmatpush2.msra.mxu0 0.0
    %2163 = vmatprep.subr.mxu0 0.0
    %2164 = vmatpush2.msra.mxu0 0.0
    %2165 = vmatprep.subr.mxu0 0.0
    %2166 = vmatpush2.msra.mxu0 0.0
    %2167 = vmatprep.mubr.f32.mxu0 0.0
    %2168 = vmatmul.mubr.f32.gmra.mxu0 %v2101
    %v2169 = vpop.f32.mrf.mxu0
    %v2170 = vadd.f32 %v1546, %v2169
    %v2171 = vpop.f32.mrf.mxu0
    %2172 = vdwg.mxu0
    %v2173 = vadd.f32 %v2097, %v2170
    %v2174 = vxor.u32 %v2173, 2147483648
    %v2175 = vmul.f32 %v2174, 1.442695
    %v2176 = vpow.pop %v2175
    %v2177 = vadd.f32 %v2176, 1.0
    %v2178 = vrcp.pop %v2177
    %v2179 = vmul.f32 1.0, %v2178
    %2181 = vrot.lane.b32.xlu0 %v2170, 80
    %v2182 = vpop.permute.xlu0 %2181
    %v2184 = vmul.f32 %v2179, %v2182
    %2186 = vrot.lane.b32.xlu0 %v2184, 48
    %v2187 = vpop.permute.xlu0 %2186
    %v2189 = vadd.f32 %v2097, %v2187
    %v2190 = vtanh.pop %v2189
    %v2191 = vsub.f32 1.0, %v2179
    %2193 = vrot.lane.b32.xlu0 %v2190, 104
    %v2194 = vpop.permute.xlu0 %2193
    %v2196 = vmul.f32 %v2191, %v2194
    %v2197 = vmul.f32 %v2179, %v2092
    %v2198 = vadd.f32 %v2196, %v2197
    %v2199 = vmul.f32 %v2198, %v1658
    %v2200 = vadd.f32 %v2199, %v1662
    %v2201 = vmax.f32 %v2200, 0.0
    %v2202 = vadd.f32 %v2096, %v2201
    %v2203 = vsel %vm300, %v1668, %v1667
    %2205 = vrot.lane.b32.xlu0 %v2198, 104
    %v2206 = vpop.permute.xlu0 %2205
    %v2207 = vsel %vm302, %v2206, 0
    %2209 = vmatprep.subr.mxu0 0.0
    %2210 = vmatpush1.msra.mxu0 0.0
    %2211 = vmatprep.subr.mxu0 0.0
    %2212 = vmatpush1.msra.mxu0 0.0
    %2213 = vmatprep.subr.mxu0 0.0
    %2214 = vmatpush1.msra.mxu0 0.0
    %2215 = vmatprep.subr.mxu0 0.0
    %2216 = vmatpush1.msra.mxu0 0.0
    %2217 = vmatprep.subr.mxu0 0.0
    %2218 = vmatpush1.msra.mxu0 0.0
    %2219 = vmatprep.subr.mxu0 0.0
    %2220 = vmatpush1.msra.mxu0 0.0
    %2221 = vmatprep.subr.mxu0 0.0
    %2222 = vmatpush1.msra.mxu0 0.0
    %2223 = vmatprep.subr.mxu0 0.0
    %2224 = vmatpush1.msra.mxu0 0.0
    %2225 = vmatprep.subr.mxu0 0.0
    %2226 = vmatpush1.msra.mxu0 0.0
    %2227 = vmatprep.subr.mxu0 0.0
    %2228 = vmatpush1.msra.mxu0 0.0
    %2229 = vmatprep.subr.mxu0 0.0
    %2230 = vmatpush1.msra.mxu0 0.0
    %2231 = vmatprep.subr.mxu0 0.0
    %2232 = vmatpush1.msra.mxu0 0.0
    %2233 = vmatprep.subr.mxu0 0.0
    %2234 = vmatpush1.msra.mxu0 0.0
    %2235 = vmatprep.subr.mxu0 0.0
    %2236 = vmatpush1.msra.mxu0 %v1538
    %2237 = vmatprep.subr.mxu0 0.0
    %2238 = vmatpush1.msra.mxu0 %v1537
    %2239 = vmatprep.subr.mxu0 0.0
    %2240 = vmatpush1.msra.mxu0 %v1536
    %2241 = vmatprep.subr.mxu0 0.0
    %2242 = vmatpush2.msra.mxu0 0.0
    %2243 = vmatprep.subr.mxu0 0.0
    %2244 = vmatpush2.msra.mxu0 0.0
    %2245 = vmatprep.subr.mxu0 0.0
    %2246 = vmatpush2.msra.mxu0 0.0
    %2247 = vmatprep.subr.mxu0 0.0
    %2248 = vmatpush2.msra.mxu0 0.0
    %2249 = vmatprep.subr.mxu0 0.0
    %2250 = vmatpush2.msra.mxu0 0.0
    %2251 = vmatprep.subr.mxu0 0.0
    %2252 = vmatpush2.msra.mxu0 0.0
    %2253 = vmatprep.subr.mxu0 0.0
    %2254 = vmatpush2.msra.mxu0 0.0
    %2255 = vmatprep.subr.mxu0 0.0
    %2256 = vmatpush2.msra.mxu0 0.0
    %2257 = vmatprep.subr.mxu0 0.0
    %2258 = vmatpush2.msra.mxu0 0.0
    %2259 = vmatprep.subr.mxu0 0.0
    %2260 = vmatpush2.msra.mxu0 0.0
    %2261 = vmatprep.subr.mxu0 0.0
    %2262 = vmatpush2.msra.mxu0 0.0
    %2263 = vmatprep.subr.mxu0 0.0
    %2264 = vmatpush2.msra.mxu0 0.0
    %2265 = vmatprep.subr.mxu0 0.0
    %2266 = vmatpush2.msra.mxu0 0.0
    %2267 = vmatprep.subr.mxu0 0.0
    %2268 = vmatpush2.msra.mxu0 0.0
    %2269 = vmatprep.subr.mxu0 0.0
    %2270 = vmatpush2.msra.mxu0 0.0
    %2271 = vmatprep.subr.mxu0 0.0
    %2272 = vmatpush2.msra.mxu0 0.0
    %2273 = vmatprep.mubr.f32.mxu0 0.0
    %2274 = vmatmul.mubr.f32.gmra.mxu0 %v2207
    %v2275 = vpop.f32.mrf.mxu0
    %v2276 = vadd.f32 %v1546, %v2275
    %v2277 = vpop.f32.mrf.mxu0
    %2278 = vdwg.mxu0
    %v2279 = vadd.f32 %v2203, %v2276
    %v2280 = vxor.u32 %v2279, 2147483648
    %v2281 = vmul.f32 %v2280, 1.442695
    %v2282 = vpow.pop %v2281
    %v2283 = vadd.f32 %v2282, 1.0
    %v2284 = vrcp.pop %v2283
    %v2285 = vmul.f32 1.0, %v2284
    %2287 = vrot.lane.b32.xlu0 %v2276, 80
    %v2288 = vpop.permute.xlu0 %2287
    %v2290 = vmul.f32 %v2285, %v2288
    %2292 = vrot.lane.b32.xlu0 %v2290, 48
    %v2293 = vpop.permute.xlu0 %2292
    %v2295 = vadd.f32 %v2203, %v2293
    %v2296 = vtanh.pop %v2295
    %v2297 = vsub.f32 1.0, %v2285
    %2299 = vrot.lane.b32.xlu0 %v2296, 104
    %v2300 = vpop.permute.xlu0 %2299
    %v2302 = vmul.f32 %v2297, %v2300
    %v2303 = vmul.f32 %v2285, %v2198
    %v2304 = vadd.f32 %v2302, %v2303
    %v2305 = vmul.f32 %v2304, %v1658
    %v2306 = vadd.f32 %v2305, %v1662
    %v2307 = vmax.f32 %v2306, 0.0
    %v2308 = vadd.f32 %v2202, %v2307
    %v2309 = vsel %vm300, %v1559, %v1558
    %2311 = vrot.lane.b32.xlu0 %v2304, 104
    %v2312 = vpop.permute.xlu0 %2311
    %v2313 = vsel %vm302, %v2312, 0
    %2315 = vmatprep.subr.mxu0 0.0
    %2316 = vmatpush1.msra.mxu0 0.0
    %2317 = vmatprep.subr.mxu0 0.0
    %2318 = vmatpush1.msra.mxu0 0.0
    %2319 = vmatprep.subr.mxu0 0.0
    %2320 = vmatpush1.msra.mxu0 0.0
    %2321 = vmatprep.subr.mxu0 0.0
    %2322 = vmatpush1.msra.mxu0 0.0
    %2323 = vmatprep.subr.mxu0 0.0
    %2324 = vmatpush1.msra.mxu0 0.0
    %2325 = vmatprep.subr.mxu0 0.0
    %2326 = vmatpush1.msra.mxu0 0.0
    %2327 = vmatprep.subr.mxu0 0.0
    %2328 = vmatpush1.msra.mxu0 0.0
    %2329 = vmatprep.subr.mxu0 0.0
    %2330 = vmatpush1.msra.mxu0 0.0
    %2331 = vmatprep.subr.mxu0 0.0
    %2332 = vmatpush1.msra.mxu0 0.0
    %2333 = vmatprep.subr.mxu0 0.0
    %2334 = vmatpush1.msra.mxu0 0.0
    %2335 = vmatprep.subr.mxu0 0.0
    %2336 = vmatpush1.msra.mxu0 0.0
    %2337 = vmatprep.subr.mxu0 0.0
    %2338 = vmatpush1.msra.mxu0 0.0
    %2339 = vmatprep.subr.mxu0 0.0
    %2340 = vmatpush1.msra.mxu0 0.0
    %2341 = vmatprep.subr.mxu0 0.0
    %2342 = vmatpush1.msra.mxu0 %v1538
    %2343 = vmatprep.subr.mxu0 0.0
    %2344 = vmatpush1.msra.mxu0 %v1537
    %2345 = vmatprep.subr.mxu0 0.0
    %2346 = vmatpush1.msra.mxu0 %v1536
    %2347 = vmatprep.subr.mxu0 0.0
    %2348 = vmatpush2.msra.mxu0 0.0
    %2349 = vmatprep.subr.mxu0 0.0
    %2350 = vmatpush2.msra.mxu0 0.0
    %2351 = vmatprep.subr.mxu0 0.0
    %2352 = vmatpush2.msra.mxu0 0.0
    %2353 = vmatprep.subr.mxu0 0.0
    %2354 = vmatpush2.msra.mxu0 0.0
    %2355 = vmatprep.subr.mxu0 0.0
    %2356 = vmatpush2.msra.mxu0 0.0
    %2357 = vmatprep.subr.mxu0 0.0
    %2358 = vmatpush2.msra.mxu0 0.0
    %2359 = vmatprep.subr.mxu0 0.0
    %2360 = vmatpush2.msra.mxu0 0.0
    %2361 = vmatprep.subr.mxu0 0.0
    %2362 = vmatpush2.msra.mxu0 0.0
    %2363 = vmatprep.subr.mxu0 0.0
    %2364 = vmatpush2.msra.mxu0 0.0
    %2365 = vmatprep.subr.mxu0 0.0
    %2366 = vmatpush2.msra.mxu0 0.0
    %2367 = vmatprep.subr.mxu0 0.0
    %2368 = vmatpush2.msra.mxu0 0.0
    %2369 = vmatprep.subr.mxu0 0.0
    %2370 = vmatpush2.msra.mxu0 0.0
    %2371 = vmatprep.subr.mxu0 0.0
    %2372 = vmatpush2.msra.mxu0 0.0
    %2373 = vmatprep.subr.mxu0 0.0
    %2374 = vmatpush2.msra.mxu0 0.0
    %2375 = vmatprep.subr.mxu0 0.0
    %2376 = vmatpush2.msra.mxu0 0.0
    %2377 = vmatprep.subr.mxu0 0.0
    %2378 = vmatpush2.msra.mxu0 0.0
    %2379 = vmatprep.mubr.f32.mxu0 0.0
    %2380 = vmatmul.mubr.f32.gmra.mxu0 %v2313
    %v2381 = vpop.f32.mrf.mxu0
    %v2382 = vadd.f32 %v1546, %v2381
    %v2383 = vpop.f32.mrf.mxu0
    %2384 = vdwg.mxu0
    %v2385 = vadd.f32 %v2309, %v2382
    %v2386 = vxor.u32 %v2385, 2147483648
    %v2387 = vmul.f32 %v2386, 1.442695
    %v2388 = vpow.pop %v2387
    %v2389 = vadd.f32 %v2388, 1.0
    %v2390 = vrcp.pop %v2389
    %v2391 = vmul.f32 1.0, %v2390
    %2393 = vrot.lane.b32.xlu0 %v2382, 80
    %v2394 = vpop.permute.xlu0 %2393
    %v2396 = vmul.f32 %v2391, %v2394
    %2398 = vrot.lane.b32.xlu0 %v2396, 48
    %v2399 = vpop.permute.xlu0 %2398
    %v2401 = vadd.f32 %v2309, %v2399
    %v2402 = vtanh.pop %v2401
    %v2403 = vsub.f32 1.0, %v2391
    %2405 = vrot.lane.b32.xlu0 %v2402, 104
    %v2406 = vpop.permute.xlu0 %2405
    %v2408 = vmul.f32 %v2403, %v2406
    %v2409 = vmul.f32 %v2391, %v2304
    %v2410 = vadd.f32 %v2408, %v2409
    %v2411 = vmul.f32 %v2410, %v1658
    %v2412 = vadd.f32 %v2411, %v1662
    %v2413 = vmax.f32 %v2412, 0.0
    %v2414 = vadd.f32 %v2308, %v2413
    %v2415 = vmul.f32 %v2414, 0.125
    %v2416 = vld [vmem:[%s11] sm:$0xff]
    %v2417 = vld [vmem:[%s11 + $0x8] sm:$0xff]
    %v2418 = vld [vmem:[%s11 + $0x10] sm:$0xff]
    %v2419 = vld [vmem:[%s12] sm:$0x1]
    %v2421 = vlaneseq
    %v2422 = vshrl.u32 %v2421, 7
    %v2423 = vsub.s32 0, %v2422
    %v2424 = vrot.slane %v2419, %v2423
    %2427 = vrot.lane.b32.xlu0 %v2415, 104
    %v2428 = vpop.permute.xlu0 %2427
    %v2429 = vsel %vm302, %v2428, 0
    %2431 = vmatprep.subr.mxu0 0.0
    %2432 = vmatpush1.msra.mxu0 0.0
    %2433 = vmatprep.subr.mxu0 0.0
    %2434 = vmatpush1.msra.mxu0 0.0
    %2435 = vmatprep.subr.mxu0 0.0
    %2436 = vmatpush1.msra.mxu0 0.0
    %2437 = vmatprep.subr.mxu0 0.0
    %2438 = vmatpush1.msra.mxu0 0.0
    %2439 = vmatprep.subr.mxu0 0.0
    %2440 = vmatpush1.msra.mxu0 0.0
    %2441 = vmatprep.subr.mxu0 0.0
    %2442 = vmatpush1.msra.mxu0 0.0
    %2443 = vmatprep.subr.mxu0 0.0
    %2444 = vmatpush1.msra.mxu0 0.0
    %2445 = vmatprep.subr.mxu0 0.0
    %2446 = vmatpush1.msra.mxu0 0.0
    %2447 = vmatprep.subr.mxu0 0.0
    %2448 = vmatpush1.msra.mxu0 0.0
    %2449 = vmatprep.subr.mxu0 0.0
    %2450 = vmatpush1.msra.mxu0 0.0
    %2451 = vmatprep.subr.mxu0 0.0
    %2452 = vmatpush1.msra.mxu0 0.0
    %2453 = vmatprep.subr.mxu0 0.0
    %2454 = vmatpush1.msra.mxu0 0.0
    %2455 = vmatprep.subr.mxu0 0.0
    %2456 = vmatpush1.msra.mxu0 0.0
    %2457 = vmatprep.subr.mxu0 0.0
    %2458 = vmatpush1.msra.mxu0 %v2418
    %2459 = vmatprep.subr.mxu0 0.0
    %2460 = vmatpush1.msra.mxu0 %v2417
    %2461 = vmatprep.subr.mxu0 0.0
    %2462 = vmatpush1.msra.mxu0 %v2416
    %2463 = vmatprep.subr.mxu0 0.0
    %2464 = vmatpush2.msra.mxu0 0.0
    %2465 = vmatprep.subr.mxu0 0.0
    %2466 = vmatpush2.msra.mxu0 0.0
    %2467 = vmatprep.subr.mxu0 0.0
    %2468 = vmatpush2.msra.mxu0 0.0
    %2469 = vmatprep.subr.mxu0 0.0
    %2470 = vmatpush2.msra.mxu0 0.0
    %2471 = vmatprep.subr.mxu0 0.0
    %2472 = vmatpush2.msra.mxu0 0.0
    %2473 = vmatprep.subr.mxu0 0.0
    %2474 = vmatpush2.msra.mxu0 0.0
    %2475 = vmatprep.subr.mxu0 0.0
    %2476 = vmatpush2.msra.mxu0 0.0
    %2477 = vmatprep.subr.mxu0 0.0
    %2478 = vmatpush2.msra.mxu0 0.0
    %2479 = vmatprep.subr.mxu0 0.0
    %2480 = vmatpush2.msra.mxu0 0.0
    %2481 = vmatprep.subr.mxu0 0.0
    %2482 = vmatpush2.msra.mxu0 0.0
    %2483 = vmatprep.subr.mxu0 0.0
    %2484 = vmatpush2.msra.mxu0 0.0
    %2485 = vmatprep.subr.mxu0 0.0
    %2486 = vmatpush2.msra.mxu0 0.0
    %2487 = vmatprep.subr.mxu0 0.0
    %2488 = vmatpush2.msra.mxu0 0.0
    %2489 = vmatprep.subr.mxu0 0.0
    %2490 = vmatpush2.msra.mxu0 0.0
    %2491 = vmatprep.subr.mxu0 0.0
    %2492 = vmatpush2.msra.mxu0 0.0
    %2493 = vmatprep.subr.mxu0 0.0
    %2494 = vmatpush2.msra.mxu0 0.0
    %2495 = vmatprep.mubr.f32.mxu0 0.0
    %2496 = vmatmul.mubr.f32.gmra.mxu0 %v2429
    %v2497 = vpop.f32.mrf.mxu0
    %v2498 = vadd.f32 %v2424, %v2497
    %v2499 = vpop.f32.mrf.mxu0
    %2500 = vdwg.mxu0
    %vm2501 = vcmask 66560
    %2502 = vst.msk [vmem:[#allocation5] sm:$0x3] %vm2501, %v2498
    // Predicated region
    $region54: #{avg_classifier_forward.1} parent=1 // pred_check
      _
    $region55: #{avg_classifier_forward.1} parent=1 // pred_check_branch
      %2504 = sbr.rel (0) target = $region57
    $region56: #{avg_classifier_forward.1} parent=1 // pred_region
      %s2506 = ssub.s32 32, 32
      %2507 = vsyncadd [#allocation6], %s2506
      %s2509 = sshll.u32 [#allocation5], 4
      %s2510 = int_to_ptr.vmem [resolvable:$true] %s2509
      %2512 = dma.vmem_to_hbm [thread:$0]  %s2510, 32, %s13, [#allocation6]
    $region57: #{avg_classifier_forward.1} parent=1 // pred_fallthru
      _
    // Predicated region
    $region58: #{avg_classifier_forward.1} parent=1 // pred_check
      _
    $region59: #{avg_classifier_forward.1} parent=1 // pred_check_branch
      %2514 = sbr.rel (0) target = $region61
    $region60: #{avg_classifier_forward.1} parent=1 // pred_region
      %2515 = dma.done [#allocation6], 32
    $region61: #{avg_classifier_forward.1} parent=1 // pred_fallthru
      _
    %2516 = vsyncpa [#allocation6], 1

</llo_original>
